<compile_context>
chip_gen: v6e
topology: v6e:2x2x1
jax: 0.10.0
libtpu: 0.0.40
codegen_flags: <defaults>
</compile_context>

<pallas_src>
import functools

import jax
import jax.numpy as jnp
import numpy as np
from jax import lax
from jax.experimental import pallas as pl
from jax.experimental.pallas import tpu as pltpu

VMEM_LIMIT = 48 * 1024 * 1024      # headroom under v7x's 64 MiB physical VMEM

# Per-layer config: torch Conv1d params + Pallas tiling/grouping choices.
#   g    : taps concatenated per group (contraction depth = g*Ci)
#   K_g  : number of groups (g*K_g >= K, extra taps are zero-padded)
#   cg_pad: grouped-channel width after zero padding (lane-friendly)
#   TP   : pooled output positions per tile (TL = 2*TP conv positions)
LAYER_CFG = [
    dict(Ci=1,   Co=64,  K=50, pad=25, g=50, K_g=1, cg_pad=64,  TP=360),
    dict(Ci=64,  Co=128, K=25, pad=12, g=4,  K_g=7, cg_pad=256, TP=152),
    dict(Ci=128, Co=256, K=10, pad=5,  g=2,  K_g=5, cg_pad=256, TP=152),
]


# =====================================================================
# Feature block kernel:
#   Conv1d(K) + bias + BatchNorm(eval, folded) + ReLU
#   + AttentionBlock (1x1 conv -> sigmoid -> multiplicative gate)
#   + MaxPool1d(kernel=2, stride=2)
# Grid = (batch, tiles of pooled output positions).
# Taps are pre-grouped in the wrapper so every dot is an MXU matmul with a
# g*Ci-deep contraction.
# =====================================================================
def conv_block_kernel(x_ref, w_ref, scale_ref, shift_ref, aw_ref, ab_ref,
                      o_ref, ybuf, *, K_g, g, TP):
    TL = 2 * TP                                   # conv positions per tile
    l = pl.program_id(1)
    start = pl.multiple_of(l * TL, 8)             # TL is a multiple of 8
    Co = o_ref.shape[2]

    acc = jnp.zeros((TL, Co), jnp.float32)
    for gi in range(K_g):                         # unrolled group loop (MXU)
        xs = x_ref[0, pl.ds(start + g * gi, TL), :]        # (TL, Cg)
        acc = acc + jnp.dot(xs, w_ref[gi], preferred_element_type=jnp.float32)

    # conv bias + BatchNorm(eval) folded into per-channel scale/shift, then ReLU
    y = jnp.maximum(acc * scale_ref[...] + shift_ref[...], 0.0)
    # AttentionBlock: pointwise conv over channels + sigmoid gate
    attn = jax.nn.sigmoid(
        jnp.dot(y, aw_ref[...], preferred_element_type=jnp.float32) + ab_ref[...])
    ybuf[...] = y * attn
    # MaxPool1d(2): strided VMEM reads of even/odd rows (proven lowering path).
    even = ybuf[pl.ds(0, TP, stride=2), :]
    odd = ybuf[pl.ds(1, TP, stride=2), :]
    o_ref[0] = jnp.maximum(even, odd)


def conv_block(x_nlc, w_g, scale, shift, aw, ab, *, K, pad, g, K_g, cg_pad, TP):
    N, L_in, Ci = x_nlc.shape
    Kg_w, Cg, Co = w_g.shape
    assert Kg_w == K_g and Cg == cg_pad
    L_conv = L_in + 2 * pad - K + 1               # torch Conv1d output length
    L_pool = L_conv // 2                          # torch MaxPool1d(2) output length
    TL = 2 * TP
    n_l = -(-L_pool // TP)
    Kp = g * K_g

    # Pad so every grouped window read is in bounds (zeros beyond torch's
    # padded range only feed zero-weighted taps or junk rows sliced off below).
    Lpad_x = n_l * TL + Kp - 1
    extra = max(0, Lpad_x - (L_in + 2 * pad))
    x_pad = jnp.pad(x_nlc, ((0, 0), (pad, pad + extra), (0, 0)))

    # im2col-style expansion: row m holds x_pad[m .. m+g-1] concatenated on
    # channels, so each group's conv tap becomes one 256-ish-deep MXU dot.
    Lx = n_l * TL + g * (K_g - 1)
    xg = jnp.concatenate([x_pad[:, j:j + Lx, :] for j in range(g)], axis=-1)
    if cg_pad > g * Ci:
        xg = jnp.pad(xg, ((0, 0), (0, 0), (0, cg_pad - g * Ci)))

    out = pl.pallas_call(
        functools.partial(conv_block_kernel, K_g=K_g, g=g, TP=TP),
        out_shape=jax.ShapeDtypeStruct((N, n_l * TP, Co), jnp.float32),
        grid_spec=pltpu.PrefetchScalarGridSpec(
            num_scalar_prefetch=0,
            grid=(N, n_l),
            in_specs=[
                pl.BlockSpec((1, Lx, cg_pad), lambda n, l: (n, 0, 0)),
                pl.BlockSpec((K_g, cg_pad, Co), lambda n, l: (0, 0, 0)),
                pl.BlockSpec((1, Co), lambda n, l: (0, 0)),
                pl.BlockSpec((1, Co), lambda n, l: (0, 0)),
                pl.BlockSpec((Co, Co), lambda n, l: (0, 0)),
                pl.BlockSpec((1, Co), lambda n, l: (0, 0)),
            ],
            out_specs=pl.BlockSpec((1, TP, Co), lambda n, l: (n, l, 0)),
            scratch_shapes=[pltpu.VMEM((TL, Co), jnp.float32)],
        ),
        compiler_params=pltpu.CompilerParams(
            dimension_semantics=("parallel", "parallel"),
            vmem_limit_bytes=VMEM_LIMIT,
        ),
    )(xg, w_g, scale, shift, aw, ab)
    if n_l * TP != L_pool:
        out = out[:, :L_pool, :]
    return out


# =====================================================================
# fc1: Linear(115200 -> 512) + ReLU.
# bf16 weights/activations, f32 accumulation.  Grid = (Nout halves, K tiles):
# the Nout axis is "parallel" so v7x's two TensorCores each stream half the
# 118 MB weight matrix; the K axis is the reduction with a resident acc.
# =====================================================================
def fc1_kernel(x_ref, w_ref, b_ref, o_ref, acc_ref):
    k = pl.program_id(1)

    @pl.when(k == 0)
    def _():
        acc_ref[...] = jnp.zeros_like(acc_ref)

    acc_ref[...] += jnp.dot(x_ref[...], w_ref[...],
                            preferred_element_type=jnp.float32)

    @pl.when(k == pl.num_programs(1) - 1)
    def _():
        o_ref[...] = jnp.maximum(acc_ref[...] + b_ref[...], 0.0)


def fc1_pallas(x_bf16, w_bf16, b, *, tk, tn):
    M, K = x_bf16.shape
    _, Nout = w_bf16.shape
    assert K % tk == 0 and Nout % tn == 0
    return pl.pallas_call(
        fc1_kernel,
        out_shape=jax.ShapeDtypeStruct((M, Nout), jnp.float32),
        grid_spec=pltpu.PrefetchScalarGridSpec(
            num_scalar_prefetch=0,
            grid=(Nout // tn, K // tk),
            in_specs=[
                pl.BlockSpec((M, tk), lambda j, k: (0, k)),
                pl.BlockSpec((tk, tn), lambda j, k: (k, j)),
                pl.BlockSpec((1, tn), lambda j, k: (0, j)),
            ],
            out_specs=pl.BlockSpec((M, tn), lambda j, k: (0, j)),
            scratch_shapes=[pltpu.VMEM((M, tn), jnp.float32)],
        ),
        compiler_params=pltpu.CompilerParams(
            dimension_semantics=("parallel", "arbitrary"),
            vmem_limit_bytes=VMEM_LIMIT,
        ),
    )(x_bf16, w_bf16, b)


# =====================================================================
# Fused fc2 (+ReLU) and fc3 (+sigmoid): tiny, single launch, weights resident.
# =====================================================================
def fc23_kernel(h_ref, w2_ref, b2_ref, w3_ref, b3_ref, o_ref):
    h2 = jnp.maximum(
        jnp.dot(h_ref[...], w2_ref[...], preferred_element_type=jnp.float32)
        + b2_ref[...], 0.0)
    o_ref[...] = jax.nn.sigmoid(
        jnp.dot(h2, w3_ref[...], preferred_element_type=jnp.float32) + b3_ref[...])


def fc23_pallas(h, w2, b2, w3, b3):
    M = h.shape[0]
    C = w3.shape[1]
    return pl.pallas_call(
        fc23_kernel,
        out_shape=jax.ShapeDtypeStruct((M, C), jnp.float32),
        grid_spec=pltpu.PrefetchScalarGridSpec(
            num_scalar_prefetch=0,
            grid=(1,),
            in_specs=[
                pl.BlockSpec(h.shape, lambda i: (0, 0)),
                pl.BlockSpec(w2.shape, lambda i: (0, 0)),
                pl.BlockSpec(b2.shape, lambda i: (0, 0)),
                pl.BlockSpec(w3.shape, lambda i: (0, 0)),
                pl.BlockSpec(b3.shape, lambda i: (0, 0)),
            ],
            out_specs=pl.BlockSpec((M, C), lambda i: (0, 0)),
        ),
        compiler_params=pltpu.CompilerParams(
            dimension_semantics=("arbitrary",),
            vmem_limit_bytes=VMEM_LIMIT,
        ),
    )(h, w2, b2, w3, b3)


# =====================================================================
# Full forward pass (Pallas path)
# =====================================================================
def ecg_classifier_forward(x_ncl, p):
    h = jnp.transpose(x_ncl, (0, 2, 1))           # NCL -> (N, L, C)
    for lp in p["features"]:
        h = conv_block(h, lp["w_g"], lp["scale"], lp["shift"],
                       lp["aw_kernel"], lp["ab"],
                       K=lp["K"], pad=lp["pad"], g=lp["g"], K_g=lp["K_g"],
                       cg_pad=lp["cg_pad"], TP=lp["TP"])
    N = h.shape[0]
    flat = h.reshape(N, -1).astype(jnp.bfloat16)  # (N, 450*256) in (L, C) order
    h1 = fc1_pallas(flat, p["fc1_w_lc_bf16"], p["fc1_b"], tk=23040, tn=256)
    return fc23_pallas(h1, p["fc2_w"], p["fc2_b"], p["fc3_w"], p["fc3_b"])


# =====================================================================
# Pure-JAX (XLA) reference that mirrors the PyTorch module (NCL layout)
# =====================================================================
def reference_forward(x_ncl, p):
    eps = 1e-5
    hp = lax.Precision.HIGHEST
    h = x_ncl
    for lp in p["features"]:
        h = lax.conv_general_dilated(
            h, lp["w_torch"], window_strides=(1,),
            padding=[(lp["pad"], lp["pad"])],
            dimension_numbers=("NCH", "OIH", "NCH"), precision=hp)
        h = h + lp["b"][None, :, None]
        h = ((h - lp["rm"][None, :, None]) *
             (lp["gamma"] / jnp.sqrt(lp["rv"] + eps))[None, :, None] +
             lp["beta"][None, :, None])
        h = jnp.maximum(h, 0.0)
        attn = jax.nn.sigmoid(
            jnp.einsum("oc,ncl->nol", lp["aw_torch"], h, precision=hp) +
            lp["ab"][0][None, :, None])
        h = h * attn
        Lp = h.shape[2] // 2
        h = h[:, :, :2 * Lp].reshape(h.shape[0], h.shape[1], Lp, 2).max(axis=-1)
    flat = h.reshape(h.shape[0], -1)              # torch x.view(N, C*L)
    h = jnp.maximum(jnp.dot(flat, p["fc1_w_ncl"], precision=hp) + p["fc1_b"][0], 0.0)
    h = jnp.maximum(jnp.dot(h, p["fc2_w"], precision=hp) + p["fc2_b"][0], 0.0)
    return jax.nn.sigmoid(jnp.dot(h, p["fc3_w"], precision=hp) + p["fc3_b"][0])


# =====================================================================
# Parameter construction
# =====================================================================
def make_grouped_weight(w_torch, g, K_g, cg_pad):
    """(Co, Ci, K) torch conv weight -> (K_g, cg_pad, Co) grouped-tap weight."""
    Co, Ci, K = w_torch.shape
    Kp = g * K_g
    w_p = jnp.pad(w_torch, ((0, 0), (0, 0), (0, Kp - K)))    # zero extra taps
    w_t = jnp.transpose(w_p, (2, 1, 0)).reshape(K_g, g * Ci, Co)
    if cg_pad > g * Ci:
        w_t = jnp.pad(w_t, ((0, 0), (0, cg_pad - g * Ci), (0, 0)))
    return w_t


def init_params(key, num_classes):
    eps = 1e-5
    params = {"features": []}
    for cfg in LAYER_CFG:
        key, *ks = jax.random.split(key, 9)
        Ci, Co, K = cfg["Ci"], cfg["Co"], cfg["K"]
        w_torch = jax.random.normal(ks[0], (Co, Ci, K), jnp.float32) / np.sqrt(Ci * K)
        b = 0.05 * jax.random.normal(ks[1], (Co,), jnp.float32)
        gamma = 1.0 + 0.1 * jax.random.normal(ks[2], (Co,), jnp.float32)
        beta = 0.1 * jax.random.normal(ks[3], (Co,), jnp.float32)
        rm = 0.1 * jax.random.normal(ks[4], (Co,), jnp.float32)
        rv = 1.0 + 0.1 * jax.random.uniform(ks[5], (Co,), jnp.float32)
        aw_torch = jax.random.normal(ks[6], (Co, Co), jnp.float32) / np.sqrt(Co)
        ab = 0.05 * jax.random.normal(ks[7], (Co,), jnp.float32)
        scale = gamma / jnp.sqrt(rv + eps)        # BN eval-mode fold (+ conv bias)
        shift = (b - rm) * scale + beta
        params["features"].append(dict(
            w_g=make_grouped_weight(w_torch, cfg["g"], cfg["K_g"], cfg["cg_pad"]),
            scale=scale.reshape(1, Co), shift=shift.reshape(1, Co),
            aw_kernel=aw_torch.T,                 # (Cin, Cout) for y @ Wa^T
            ab=ab.reshape(1, Co),
            K=K, pad=cfg["pad"], g=cfg["g"], K_g=cfg["K_g"],
            cg_pad=cfg["cg_pad"], TP=cfg["TP"],
            # reference-side (torch-layout) copies
            w_torch=w_torch, b=b, gamma=gamma, beta=beta, rm=rm, rv=rv,
            aw_torch=aw_torch,
        ))
    # classifier: Linear(256*450, 512) -> Linear(512, 256) -> Linear(256, num_classes)
    key, k1, k2, k3, k4, k5, k6 = jax.random.split(key, 7)
    Lf, Cf = 450, 256
    W1_lco = jax.random.normal(k1, (Lf, Cf, 512), jnp.float32) / np.sqrt(Lf * Cf)
    params["fc1_w_lc_bf16"] = W1_lco.reshape(Lf * Cf, 512).astype(jnp.bfloat16)
    params["fc1_w_ncl"] = jnp.transpose(W1_lco, (1, 0, 2)).reshape(Lf * Cf, 512)
    params["fc1_b"] = 0.05 * jax.random.normal(k2, (1, 512), jnp.float32)
    params["fc2_w"] = jax.random.normal(k3, (512, 256), jnp.float32) / np.sqrt(512)
    params["fc2_b"] = 0.05 * jax.random.normal(k4, (1, 256), jnp.float32)
    params["fc3_w"] = jax.random.normal(k5, (256, num_classes), jnp.float32) / np.sqrt(256)
    params["fc3_b"] = 0.05 * jax.random.normal(k6, (1, num_classes), jnp.float32)
    return params


if __name__ == "__main__":
    num_classes = 5
    batch = 2
    # seq_len is fixed at 3600 by the module: Linear(256*450, 512) requires the
    # feature extractor to emit (256, 450), which implies a 3600-sample input.
    seq_len = 3600

    key = jax.random.PRNGKey(0)
    key, kx = jax.random.split(key)
    params = init_params(key, num_classes)
    x = jax.random.normal(kx, (batch, 1, seq_len), jnp.float32)   # torch NCL input

    out = jax.block_until_ready(ecg_classifier_forward(x, params))
    assert out.shape == (batch, num_classes)

    ref = jax.block_until_ready(reference_forward(x, params))
    np.testing.assert_allclose(np.asarray(out), np.asarray(ref), atol=2e-2, rtol=2e-2)

    print("KERNEL_OK")
</pallas_src>

<mosaic_0001>
module attributes {stable_mosaic.version = 11 : i64} {
  func.func @conv_block_kernel(%arg0: i32, %arg1: i32, %arg2: memref<1x3600x64xf32, #tpu.memory_space<vmem>>, %arg3: memref<1x64x64xf32, #tpu.memory_space<vmem>>, %arg4: memref<1x64xf32, #tpu.memory_space<vmem>>, %arg5: memref<1x64xf32, #tpu.memory_space<vmem>>, %arg6: memref<64x64xf32, #tpu.memory_space<vmem>>, %arg7: memref<1x64xf32, #tpu.memory_space<vmem>>, %arg8: memref<1x360x64xf32, #tpu.memory_space<vmem>>, %arg9: memref<720x64xf32, #tpu.memory_space<vmem>>) attributes {dimension_semantics = [#tpu.dimension_semantics<parallel>, #tpu.dimension_semantics<parallel>], iteration_bounds = array<i64: 2, 5>, scalar_prefetch = 0 : i64, scratch_operands = 1 : i64, tpu.core_type = #tpu.core_type<tc>, window_params = [{transform_indices = @transform_0, window_bounds = array<i64: 1, 3600, 64>}, {pipeline_mode = #tpu.pipeline_mode<synchronous>, transform_indices = @transform_1, window_bounds = array<i64: 1, 64, 64>}, {pipeline_mode = #tpu.pipeline_mode<synchronous>, transform_indices = @transform_2, window_bounds = array<i64: 1, 64>}, {pipeline_mode = #tpu.pipeline_mode<synchronous>, transform_indices = @transform_3, window_bounds = array<i64: 1, 64>}, {pipeline_mode = #tpu.pipeline_mode<synchronous>, transform_indices = @transform_4, window_bounds = array<i64: 64, 64>}, {pipeline_mode = #tpu.pipeline_mode<synchronous>, transform_indices = @transform_5, window_bounds = array<i64: 1, 64>}, {transform_indices = @transform_6, window_bounds = array<i64: 1, 360, 64>}]} {
    %c720_i32 = arith.constant 720 : i32
    %0 = arith.muli %arg1, %c720_i32 : i32
    %1 = tpu.assume_multiple %0, 8 : i32
    %cst = arith.constant 0.000000e+00 : f32
    %2 = vector.broadcast %cst : f32 to vector<720x64xf32>
    %c0_i32 = arith.constant 0 : i32
    %3 = arith.addi %1, %c0_i32 : i32
    %c0 = arith.constant 0 : index
    %4 = arith.index_cast %3 : i32 to index
    %c0_0 = arith.constant 0 : index
    %5 = vector.load %arg2[%c0, %4, %c0_0] : memref<1x3600x64xf32, #tpu.memory_space<vmem>>, vector<1x720x64xf32>
    %6 = vector.shape_cast %5 : vector<1x720x64xf32> to vector<720x64xf32>
    %c0_1 = arith.constant 0 : index
    %c0_2 = arith.constant 0 : index
    %c0_3 = arith.constant 0 : index
    %7 = vector.load %arg3[%c0_1, %c0_2, %c0_3] : memref<1x64x64xf32, #tpu.memory_space<vmem>>, vector<1x64x64xf32>
    %8 = vector.shape_cast %7 : vector<1x64x64xf32> to vector<64x64xf32>
    %cst_4 = arith.constant dense<0.000000e+00> : vector<720x64xf32>
    %9 = tpu.matmul %6, %8, %cst_4 {dimension_numbers = #tpu.dot_dimension_numbers<[1], [0], [0], [1], [0, 0, 1, 1], [], []>} : vector<720x64xf32>, vector<64x64xf32>, vector<720x64xf32> -> vector<720x64xf32>
    %10 = arith.addf %2, %9 : vector<720x64xf32>
    %c0_5 = arith.constant 0 : index
    %c0_6 = arith.constant 0 : index
    %11 = vector.load %arg4[%c0_5, %c0_6] : memref<1x64xf32, #tpu.memory_space<vmem>>, vector<1x64xf32>
    %12 = vector.broadcast %11 : vector<1x64xf32> to vector<720x64xf32>
    %13 = arith.mulf %10, %12 : vector<720x64xf32>
    %c0_7 = arith.constant 0 : index
    %c0_8 = arith.constant 0 : index
    %14 = vector.load %arg5[%c0_7, %c0_8] : memref<1x64xf32, #tpu.memory_space<vmem>>, vector<1x64xf32>
    %15 = vector.broadcast %14 : vector<1x64xf32> to vector<720x64xf32>
    %16 = arith.addf %13, %15 : vector<720x64xf32>
    %cst_9 = arith.constant 0.000000e+00 : f32
    %17 = vector.broadcast %cst_9 : f32 to vector<720x64xf32>
    %18 = arith.maximumf %16, %17 : vector<720x64xf32>
    %c0_10 = arith.constant 0 : index
    %c0_11 = arith.constant 0 : index
    %19 = vector.load %arg6[%c0_10, %c0_11] : memref<64x64xf32, #tpu.memory_space<vmem>>, vector<64x64xf32>
    %cst_12 = arith.constant dense<0.000000e+00> : vector<720x64xf32>
    %20 = tpu.matmul %18, %19, %cst_12 {dimension_numbers = #tpu.dot_dimension_numbers<[1], [0], [0], [1], [0, 0, 1, 1], [], []>} : vector<720x64xf32>, vector<64x64xf32>, vector<720x64xf32> -> vector<720x64xf32>
    %c0_13 = arith.constant 0 : index
    %c0_14 = arith.constant 0 : index
    %21 = vector.load %arg7[%c0_13, %c0_14] : memref<1x64xf32, #tpu.memory_space<vmem>>, vector<1x64xf32>
    %22 = vector.broadcast %21 : vector<1x64xf32> to vector<720x64xf32>
    %23 = arith.addf %20, %22 : vector<720x64xf32>
    %24 = arith.negf %23 : vector<720x64xf32>
    %25 = math.exp %24 : vector<720x64xf32>
    %cst_15 = arith.constant 1.000000e+00 : f32
    %26 = vector.broadcast %cst_15 : f32 to vector<720x64xf32>
    %27 = arith.addf %26, %25 : vector<720x64xf32>
    %28 = arith.divf %26, %27 : vector<720x64xf32>
    %29 = arith.mulf %18, %28 : vector<720x64xf32>
    %c0_16 = arith.constant 0 : index
    %c0_17 = arith.constant 0 : index
    %30 = vector.load %arg9[%c0_16, %c0_17] : memref<720x64xf32, #tpu.memory_space<vmem>>, vector<720x64xf32>
    tpu.vector_store %arg9[%c0_16, %c0_17], %29 {strides = array<i32>} : memref<720x64xf32, #tpu.memory_space<vmem>>, vector<720x64xf32>,
    %c0_18 = arith.constant 0 : index
    %c0_19 = arith.constant 0 : index
    %31 = tpu.strided_load %arg9[%c0_18, %c0_19] {strides = array<i32: 2, 1>} : memref<720x64xf32, #tpu.memory_space<vmem>>, vector<360x64xf32>
    %c1 = arith.constant 1 : index
    %c0_20 = arith.constant 0 : index
    %32 = tpu.strided_load %arg9[%c1, %c0_20] {strides = array<i32: 2, 1>} : memref<720x64xf32, #tpu.memory_space<vmem>>, vector<360x64xf32>
    %33 = arith.maximumf %31, %32 : vector<360x64xf32>
    %c0_21 = arith.constant 0 : index
    %c0_22 = arith.constant 0 : index
    %c0_23 = arith.constant 0 : index
    %34 = vector.load %arg8[%c0_21, %c0_22, %c0_23] : memref<1x360x64xf32, #tpu.memory_space<vmem>>, vector<1x360x64xf32>
    %35 = vector.shape_cast %34 : vector<1x360x64xf32> to vector<360x64xf32>
    %36 = vector.shape_cast %33 : vector<360x64xf32> to vector<1x360x64xf32>
    tpu.vector_store %arg8[%c0_21, %c0_22, %c0_23], %36 {strides = array<i32>} : memref<1x360x64xf32, #tpu.memory_space<vmem>>, vector<1x360x64xf32>,
    return
  }
  func.func @transform_0(%arg0: i32, %arg1: i32) -> (i32, i32, i32) {
    %c0_i32 = arith.constant 0 : i32
    %c0_i32_0 = arith.constant 0 : i32
    %c0_i32_1 = arith.constant 0 : i32
    return %arg0, %c0_i32, %c0_i32_0 : i32, i32, i32
  }
  func.func @transform_1(%arg0: i32, %arg1: i32) -> (i32, i32, i32) {
    %c0_i32 = arith.constant 0 : i32
    %c0_i32_0 = arith.constant 0 : i32
    %c0_i32_1 = arith.constant 0 : i32
    %c0_i32_2 = arith.constant 0 : i32
    return %c0_i32, %c0_i32_0, %c0_i32_1 : i32, i32, i32
  }
  func.func @transform_2(%arg0: i32, %arg1: i32) -> (i32, i32) {
    %c0_i32 = arith.constant 0 : i32
    %c0_i32_0 = arith.constant 0 : i32
    %c0_i32_1 = arith.constant 0 : i32
    return %c0_i32, %c0_i32_0 : i32, i32
  }
  func.func @transform_3(%arg0: i32, %arg1: i32) -> (i32, i32) {
    %c0_i32 = arith.constant 0 : i32
    %c0_i32_0 = arith.constant 0 : i32
    %c0_i32_1 = arith.constant 0 : i32
    return %c0_i32, %c0_i32_0 : i32, i32
  }
  func.func @transform_4(%arg0: i32, %arg1: i32) -> (i32, i32) {
    %c0_i32 = arith.constant 0 : i32
    %c0_i32_0 = arith.constant 0 : i32
    %c0_i32_1 = arith.constant 0 : i32
    return %c0_i32, %c0_i32_0 : i32, i32
  }
  func.func @transform_5(%arg0: i32, %arg1: i32) -> (i32, i32) {
    %c0_i32 = arith.constant 0 : i32
    %c0_i32_0 = arith.constant 0 : i32
    %c0_i32_1 = arith.constant 0 : i32
    return %c0_i32, %c0_i32_0 : i32, i32
  }
  func.func @transform_6(%arg0: i32, %arg1: i32) -> (i32, i32, i32) {
    %c0_i32 = arith.constant 0 : i32
    %c0_i32_0 = arith.constant 0 : i32
    return %arg0, %arg1, %c0_i32 : i32, i32, i32
  }
}

</mosaic_0001>

<llo_original>
// kernel: tpu_custom_call.1
$region0: #{tpu_custom_call.1}
  #allocation0 [shape = 'u32[]', space=smem, size = 0x4, offset = 0x4, fixed_abs, tag = 'smem constant byte address 0x4 - core index']
  #allocation1 [shape = 'u32[144,128]{1,0:T(1,128)}', space=vmem, size = 0x12000, scoped, tag = 'internal scratch']
  #allocation2 [shape = 'f32[720,64]{1,0:T(8,128)}', space=vmem, size = 0x5a000, scoped, tag = 'scratch operand']
  %s0 = inlined_call_operand.vmem [shape: f32[2,3600,64], index: 0, kind: input, shape index: {}]
  %s1 = inlined_call_operand.vmem [shape: f32[1,64,64], index: 1, kind: input, shape index: {}]
  %s2 = inlined_call_operand.vmem [shape: f32[1,64], index: 2, kind: input, shape index: {}]
  %s3 = inlined_call_operand.vmem [shape: f32[1,64], index: 3, kind: input, shape index: {}]
  %s4 = inlined_call_operand.vmem [shape: f32[64,64], index: 4, kind: input, shape index: {}]
  %s5 = inlined_call_operand.vmem [shape: f32[1,64], index: 5, kind: input, shape index: {}]
  %s6 = inlined_call_operand.vmem [shape: f32[2,1800,64], index: 6, kind: output, shape index: {}]
  %s7 = sld [smem:[#allocation0]]
  $region57: #{tpu_custom_call.1} parent=0
    _
  %s9 = ssub.s32 1, %s7
  %s10 = scalar_select 0, %s9, %s7
  loop: start=0, step=1, limit=12
  $region2: #{tpu_custom_call.1} parent=0 // loop_pre_header
    _
  $region3: #{tpu_custom_call.1} parent=0 // loop_header
    %s12 = sphi 0, %s16
    %p13 = scmp.ge.s32.totalorder %s12, 12
    %s19 = sphi 0, %s31
    %s20 = sphi 0, %s27
    %s21 = sphi 0, %s19
    %s22 = sphi 0, %s20
    %s23 = sphi 0, %s21
    %s24 = sphi 0, %s22
    %s34 = sphi 0, %s36
    %s37 = sphi 0, %s34
    %s38 = sphi 0, %s37
    %s54 = sphi 0, %s38
    %s58 = sphi 0, %s58
    %s60 = sphi 0, %s58
    %s61 = sphi 0, %s60
    %s75 = sphi 0, %s61
    %s79 = sphi 0, %s79
    %s81 = sphi 0, %s79
    %s82 = sphi 0, %s81
    %s96 = sphi 0, %s82
    %s100 = sphi 0, %s100
    %s102 = sphi 0, %s100
    %s103 = sphi 0, %s102
    %s117 = sphi 0, %s103
    %s121 = sphi 0, %s121
    %s123 = sphi 0, %s121
    %s124 = sphi 0, %s123
    %s138 = sphi 0, %s124
    %s142 = sphi 0, %s142
    %s144 = sphi 0, %s142
    %s145 = sphi 0, %s144
    %s159 = sphi 0, %s145
    %s167 = sphi 0, %s169
    %s170 = sphi 0, %s167
    %s171 = sphi 0, %s170
    %s187 = sphi 0, %s171
  $region4: #{tpu_custom_call.1} parent=0 // loop_header_branch
    %15 = sbr.rel (%p13) target = $region8
  $region5: #{tpu_custom_call.1} parent=0 // loop_body
    %s17 = ssub.s32 %s12, 1
    %s18 = ssub.s32 %s12, 2
    %s25 = sadd.s32 1, %s20
    %p26 = scmp.ge.s32.totalorder %s25, 5
    %s27 = scalar_select %p26, 0, %s25
    %s28 = sadd.s32 1, %s19
    %s29 = scalar_select %p26, %s28, %s19
    %p30 = scmp.ge.s32.totalorder %s29, 2
    %s31 = scalar_select %p30, 0, %s29
    %s32 = ssub.s32 %s19, %s31
    %p33 = scmp.eq.s32.totalorder %s32, 0
    %s35 = sadd.s32 %s34, 1
    %s36 = scalar_select %p33, %s34, %s35
    %p39 = pneg %p33
    %p40 = scmp.eq.s32.totalorder %s12, 9
    %p41 = por %p39, %p40
    %p42 = scmp.ne.s32.totalorder %s34, %s37
    %p43 = scmp.eq.s32.totalorder %s12, 0
    %p44 = por %p42, %p43
    %p45 = scmp.ne.s32.totalorder %s34, %s37
    %p46 = scmp.eq.s32.totalorder %s17, 9
    %p47 = por %p45, %p46
    %p48 = scmp.ne.s32.totalorder %s37, %s38
    %p49 = scmp.eq.s32.totalorder %s17, 0
    %p50 = por %p48, %p49
    %p51 = scmp.ne.s32.totalorder %s37, %s38
    %p52 = scmp.eq.s32.totalorder %s18, 9
    %p53 = por %p51, %p52
    %p55 = scmp.ne.s32.totalorder %s38, %s54
    %p56 = scmp.eq.s32.totalorder %s18, 0
    %p57 = por %p55, %p56
    %s59 = sadd.s32 %s58, 1
    %p62 = scmp.eq.s32.totalorder %s12, 9
    %p63 = scmp.ne.s32.totalorder %s58, %s60
    %p64 = scmp.eq.s32.totalorder %s12, 0
    %p65 = por %p63, %p64
    %p66 = scmp.ne.s32.totalorder %s58, %s60
    %p67 = scmp.eq.s32.totalorder %s17, 9
    %p68 = por %p66, %p67
    %p69 = scmp.ne.s32.totalorder %s60, %s61
    %p70 = scmp.eq.s32.totalorder %s17, 0
    %p71 = por %p69, %p70
    %p72 = scmp.ne.s32.totalorder %s60, %s61
    %p73 = scmp.eq.s32.totalorder %s18, 9
    %p74 = por %p72, %p73
    %p76 = scmp.ne.s32.totalorder %s61, %s75
    %p77 = scmp.eq.s32.totalorder %s18, 0
    %p78 = por %p76, %p77
    %s80 = sadd.s32 %s79, 1
    %p83 = scmp.eq.s32.totalorder %s12, 9
    %p84 = scmp.ne.s32.totalorder %s79, %s81
    %p85 = scmp.eq.s32.totalorder %s12, 0
    %p86 = por %p84, %p85
    %p87 = scmp.ne.s32.totalorder %s79, %s81
    %p88 = scmp.eq.s32.totalorder %s17, 9
    %p89 = por %p87, %p88
    %p90 = scmp.ne.s32.totalorder %s81, %s82
    %p91 = scmp.eq.s32.totalorder %s17, 0
    %p92 = por %p90, %p91
    %p93 = scmp.ne.s32.totalorder %s81, %s82
    %p94 = scmp.eq.s32.totalorder %s18, 9
    %p95 = por %p93, %p94
    %p97 = scmp.ne.s32.totalorder %s82, %s96
    %p98 = scmp.eq.s32.totalorder %s18, 0
    %p99 = por %p97, %p98
    %s101 = sadd.s32 %s100, 1
    %p104 = scmp.eq.s32.totalorder %s12, 9
    %p105 = scmp.ne.s32.totalorder %s100, %s102
    %p106 = scmp.eq.s32.totalorder %s12, 0
    %p107 = por %p105, %p106
    %p108 = scmp.ne.s32.totalorder %s100, %s102
    %p109 = scmp.eq.s32.totalorder %s17, 9
    %p110 = por %p108, %p109
    %p111 = scmp.ne.s32.totalorder %s102, %s103
    %p112 = scmp.eq.s32.totalorder %s17, 0
    %p113 = por %p111, %p112
    %p114 = scmp.ne.s32.totalorder %s102, %s103
    %p115 = scmp.eq.s32.totalorder %s18, 9
    %p116 = por %p114, %p115
    %p118 = scmp.ne.s32.totalorder %s103, %s117
    %p119 = scmp.eq.s32.totalorder %s18, 0
    %p120 = por %p118, %p119
    %s122 = sadd.s32 %s121, 1
    %p125 = scmp.eq.s32.totalorder %s12, 9
    %p126 = scmp.ne.s32.totalorder %s121, %s123
    %p127 = scmp.eq.s32.totalorder %s12, 0
    %p128 = por %p126, %p127
    %p129 = scmp.ne.s32.totalorder %s121, %s123
    %p130 = scmp.eq.s32.totalorder %s17, 9
    %p131 = por %p129, %p130
    %p132 = scmp.ne.s32.totalorder %s123, %s124
    %p133 = scmp.eq.s32.totalorder %s17, 0
    %p134 = por %p132, %p133
    %p135 = scmp.ne.s32.totalorder %s123, %s124
    %p136 = scmp.eq.s32.totalorder %s18, 9
    %p137 = por %p135, %p136
    %p139 = scmp.ne.s32.totalorder %s124, %s138
    %p140 = scmp.eq.s32.totalorder %s18, 0
    %p141 = por %p139, %p140
    %s143 = sadd.s32 %s142, 1
    %p146 = scmp.eq.s32.totalorder %s12, 9
    %p147 = scmp.ne.s32.totalorder %s142, %s144
    %p148 = scmp.eq.s32.totalorder %s12, 0
    %p149 = por %p147, %p148
    %p150 = scmp.ne.s32.totalorder %s142, %s144
    %p151 = scmp.eq.s32.totalorder %s17, 9
    %p152 = por %p150, %p151
    %p153 = scmp.ne.s32.totalorder %s144, %s145
    %p154 = scmp.eq.s32.totalorder %s17, 0
    %p155 = por %p153, %p154
    %p156 = scmp.ne.s32.totalorder %s144, %s145
    %p157 = scmp.eq.s32.totalorder %s18, 9
    %p158 = por %p156, %p157
    %p160 = scmp.ne.s32.totalorder %s145, %s159
    %p161 = scmp.eq.s32.totalorder %s18, 0
    %p162 = por %p160, %p161
    %s163 = ssub.s32 %s19, %s31
    %s164 = ssub.s32 %s20, %s27
    %s165 = sor.u32 %s163, %s164
    %p166 = scmp.eq.s32.totalorder %s165, 0
    %s168 = sadd.s32 %s167, 1
    %s169 = scalar_select %p166, %s167, %s168
    %p172 = pneg %p166
    %p173 = scmp.eq.s32.totalorder %s12, 9
    %p174 = por %p172, %p173
    %p175 = scmp.ne.s32.totalorder %s167, %s170
    %p176 = scmp.eq.s32.totalorder %s12, 0
    %p177 = por %p175, %p176
    %p178 = scmp.ne.s32.totalorder %s167, %s170
    %p179 = scmp.eq.s32.totalorder %s17, 9
    %p180 = por %p178, %p179
    %p181 = scmp.ne.s32.totalorder %s170, %s171
    %p182 = scmp.eq.s32.totalorder %s17, 0
    %p183 = por %p181, %p182
    %p184 = scmp.ne.s32.totalorder %s170, %s171
    %p185 = scmp.eq.s32.totalorder %s18, 9
    %p186 = por %p184, %p185
    %p188 = scmp.ne.s32.totalorder %s171, %s187
    %p189 = scmp.eq.s32.totalorder %s18, 0
    %p190 = por %p188, %p189
    %p191 = scmp.le.s32.totalorder 1, %s12
    %p192 = scmp.lt.s32.totalorder %s12, 11
    %p193 = pnand %p191, %p192
    %p194 = pneg %p193
    // Predicated region
    $region9: #{tpu_custom_call.1} parent=5 // pred_check
      _
    $region10: #{tpu_custom_call.1} parent=5 // pred_check_branch
      %196 = sbr.rel (%p193) target = $region12
    $region11: #{tpu_custom_call.1} parent=5 // pred_region
      %s197 = ssub.s32 %s12, 1
      // Predicated region
      $region13: #{tpu_custom_call.1} parent=11 // pred_check
        %p198 = pneg %p71
      $region14: #{tpu_custom_call.1} parent=11 // pred_check_branch
        %200 = sbr.rel (%p198) target = $region16
      $region15: #{tpu_custom_call.1} parent=11 // pred_region
        _
      $region16: #{tpu_custom_call.1} parent=11 // pred_fallthru
        _
      // Predicated region
      $region17: #{tpu_custom_call.1} parent=11 // pred_check
        %p201 = pneg %p92
      $region18: #{tpu_custom_call.1} parent=11 // pred_check_branch
        %203 = sbr.rel (%p201) target = $region20
      $region19: #{tpu_custom_call.1} parent=11 // pred_region
        _
      $region20: #{tpu_custom_call.1} parent=11 // pred_fallthru
        _
      // Predicated region
      $region21: #{tpu_custom_call.1} parent=11 // pred_check
        %p204 = pneg %p113
      $region22: #{tpu_custom_call.1} parent=11 // pred_check_branch
        %206 = sbr.rel (%p204) target = $region24
      $region23: #{tpu_custom_call.1} parent=11 // pred_region
        _
      $region24: #{tpu_custom_call.1} parent=11 // pred_fallthru
        _
      // Predicated region
      $region25: #{tpu_custom_call.1} parent=11 // pred_check
        %p207 = pneg %p134
      $region26: #{tpu_custom_call.1} parent=11 // pred_check_branch
        %209 = sbr.rel (%p207) target = $region28
      $region27: #{tpu_custom_call.1} parent=11 // pred_region
        _
      $region28: #{tpu_custom_call.1} parent=11 // pred_fallthru
        _
      // Predicated region
      $region29: #{tpu_custom_call.1} parent=11 // pred_check
        %p210 = pneg %p155
      $region30: #{tpu_custom_call.1} parent=11 // pred_check_branch
        %212 = sbr.rel (%p210) target = $region32
      $region31: #{tpu_custom_call.1} parent=11 // pred_region
        _
      $region32: #{tpu_custom_call.1} parent=11 // pred_fallthru
        _
    $region12: #{tpu_custom_call.1} parent=5 // pred_fallthru
      _
    %p213 = scmp.lt.s32.totalorder %s12, 10
    // Predicated region
    $region33: #{tpu_custom_call.1} parent=5 // pred_check
      %p214 = pneg %p213
    $region34: #{tpu_custom_call.1} parent=5 // pred_check_branch
      %216 = sbr.rel (%p214) target = $region36
    $region35: #{tpu_custom_call.1} parent=5 // pred_region
      // Predicated region
      $region37: #{tpu_custom_call.1} parent=35 // pred_check
        %p217 = pneg %p44
      $region38: #{tpu_custom_call.1} parent=35 // pred_check_branch
        %219 = sbr.rel (%p217) target = $region40
      $region39: #{tpu_custom_call.1} parent=35 // pred_region
        %p220 = scmp.lt.s32.totalorder %s19, 1
        %s221 = scalar_select %p220, %s19, 1
        %s222 = smul.addr %s221, 450
        %s223 = smul.addr %s222, 8
        %s224 = scalar_lea.vmem %s0, %s223
      $region40: #{tpu_custom_call.1} parent=35 // pred_fallthru
        _
    $region36: #{tpu_custom_call.1} parent=5 // pred_fallthru
      _
    %p225 = scmp.le.s32.totalorder 1, %s12
    %p226 = scmp.lt.s32.totalorder %s12, 11
    %p227 = pnand %p225, %p226
    %p228 = pneg %p227
    // Predicated region
    $region41: #{tpu_custom_call.1} parent=5 // pred_check
      _
    $region42: #{tpu_custom_call.1} parent=5 // pred_check_branch
      %230 = sbr.rel (%p227) target = $region44
    $region43: #{tpu_custom_call.1} parent=5 // pred_region
      %s231 = ssub.s32 %s12, 1
      %p232 = scmp.lt.s32.totalorder %s21, 1
      %s233 = scalar_select %p232, %s21, 1
      %s234 = smul.addr %s233, 450
      %s235 = smul.addr %s234, 8
      %s236 = scalar_lea.vmem %s0, %s235
      %p237 = pneg %p50
      %p238 = pneg %p47
      %p239 = pneg %p71
      %p240 = pneg %p68
      %p241 = pneg %p92
      %p242 = pneg %p89
      %p243 = pneg %p113
      %p244 = pneg %p110
      %p245 = pneg %p134
      %p246 = pneg %p131
      %p247 = pneg %p155
      %p248 = pneg %p152
      %p249 = pneg %p183
      %p250 = pneg %p180
      %s251 = smul.u32 45, %s22
      %p252 = scmp.lt.s32.totalorder %s21, 1
      %s253 = scalar_select %p252, %s21, 1
      %p254 = scmp.lt.s32.totalorder %s251, 224
      %s255 = scalar_select %p254, %s251, 224
      %s256 = smul.addr %s253, 225
      %s257 = sadd.s32 %s255, %s256
      %s258 = smul.addr %s257, 8
      %s259 = scalar_lea.vmem %s6, %s258
      %p260 = scmp.lt.s32.totalorder %s21, 1
      %s261 = scalar_select %p260, %s21, 1
      %s262 = smul.addr %s261, 450
      %s263 = smul.addr %s262, 8
      %s264 = scalar_lea.vmem %s0, %s263
      %s265 = smul.u32 45, %s22
      %p266 = scmp.lt.s32.totalorder %s21, 1
      %s267 = scalar_select %p266, %s21, 1
      %p268 = scmp.lt.s32.totalorder %s265, 224
      %s269 = scalar_select %p268, %s265, 224
      %s270 = smul.addr %s267, 225
      %s271 = sadd.s32 %s269, %s270
      %s272 = smul.addr %s271, 8
      %s273 = scalar_lea.vmem %s6, %s272
      %s274 = smul.u32 45, %s22
      %s275 = smul.u32 %s22, 720
      %s276 = scalar_lea.vmem %s264, %s275
      %v277 = vld [vmem:[%s276] sm:$0xff]
      %v278 = vld [vmem:[%s276 + $0x8] sm:$0xff]
      %v279 = vld [vmem:[%s276 + $0x10] sm:$0xff]
      %v280 = vld [vmem:[%s276 + $0x18] sm:$0xff]
      %v281 = vld [vmem:[%s276 + $0x20] sm:$0xff]
      %v282 = vld [vmem:[%s276 + $0x28] sm:$0xff]
      %v283 = vld [vmem:[%s276 + $0x30] sm:$0xff]
      %v284 = vld [vmem:[%s276 + $0x38] sm:$0xff]
      %v285 = vld [vmem:[%s276 + $0x40] sm:$0xff]
      %v286 = vld [vmem:[%s276 + $0x48] sm:$0xff]
      %v287 = vld [vmem:[%s276 + $0x50] sm:$0xff]
      %v288 = vld [vmem:[%s276 + $0x58] sm:$0xff]
      %v289 = vld [vmem:[%s276 + $0x60] sm:$0xff]
      %v290 = vld [vmem:[%s276 + $0x68] sm:$0xff]
      %v291 = vld [vmem:[%s276 + $0x70] sm:$0xff]
      %v292 = vld [vmem:[%s276 + $0x78] sm:$0xff]
      %v293 = vld [vmem:[%s276 + $0x80] sm:$0xff]
      %v294 = vld [vmem:[%s276 + $0x88] sm:$0xff]
      %v295 = vld [vmem:[%s276 + $0x90] sm:$0xff]
      %v296 = vld [vmem:[%s276 + $0x98] sm:$0xff]
      %v297 = vld [vmem:[%s276 + $0xa0] sm:$0xff]
      %v298 = vld [vmem:[%s276 + $0xa8] sm:$0xff]
      %v299 = vld [vmem:[%s276 + $0xb0] sm:$0xff]
      %v300 = vld [vmem:[%s276 + $0xb8] sm:$0xff]
      %v301 = vld [vmem:[%s276 + $0xc0] sm:$0xff]
      %v302 = vld [vmem:[%s276 + $0xc8] sm:$0xff]
      %v303 = vld [vmem:[%s276 + $0xd0] sm:$0xff]
      %v304 = vld [vmem:[%s276 + $0xd8] sm:$0xff]
      %v305 = vld [vmem:[%s276 + $0xe0] sm:$0xff]
      %v306 = vld [vmem:[%s276 + $0xe8] sm:$0xff]
      %v307 = vld [vmem:[%s276 + $0xf0] sm:$0xff]
      %v308 = vld [vmem:[%s276 + $0xf8] sm:$0xff]
      %v309 = vld [vmem:[%s276 + $0x100] sm:$0xff]
      %v310 = vld [vmem:[%s276 + $0x108] sm:$0xff]
      %v311 = vld [vmem:[%s276 + $0x110] sm:$0xff]
      %v312 = vld [vmem:[%s276 + $0x118] sm:$0xff]
      %v313 = vld [vmem:[%s276 + $0x120] sm:$0xff]
      %v314 = vld [vmem:[%s276 + $0x128] sm:$0xff]
      %v315 = vld [vmem:[%s276 + $0x130] sm:$0xff]
      %v316 = vld [vmem:[%s276 + $0x138] sm:$0xff]
      %v317 = vld [vmem:[%s276 + $0x140] sm:$0xff]
      %v318 = vld [vmem:[%s276 + $0x148] sm:$0xff]
      %v319 = vld [vmem:[%s276 + $0x150] sm:$0xff]
      %v320 = vld [vmem:[%s276 + $0x158] sm:$0xff]
      %v321 = vld [vmem:[%s276 + $0x160] sm:$0xff]
      %v322 = vld [vmem:[%s276 + $0x168] sm:$0xff]
      %v323 = vld [vmem:[%s276 + $0x170] sm:$0xff]
      %v324 = vld [vmem:[%s276 + $0x178] sm:$0xff]
      %v325 = vld [vmem:[%s276 + $0x180] sm:$0xff]
      %v326 = vld [vmem:[%s276 + $0x188] sm:$0xff]
      %v327 = vld [vmem:[%s276 + $0x190] sm:$0xff]
      %v328 = vld [vmem:[%s276 + $0x198] sm:$0xff]
      %v329 = vld [vmem:[%s276 + $0x1a0] sm:$0xff]
      %v330 = vld [vmem:[%s276 + $0x1a8] sm:$0xff]
      %v331 = vld [vmem:[%s276 + $0x1b0] sm:$0xff]
      %v332 = vld [vmem:[%s276 + $0x1b8] sm:$0xff]
      %v333 = vld [vmem:[%s276 + $0x1c0] sm:$0xff]
      %v334 = vld [vmem:[%s276 + $0x1c8] sm:$0xff]
      %v335 = vld [vmem:[%s276 + $0x1d0] sm:$0xff]
      %v336 = vld [vmem:[%s276 + $0x1d8] sm:$0xff]
      %v337 = vld [vmem:[%s276 + $0x1e0] sm:$0xff]
      %v338 = vld [vmem:[%s276 + $0x1e8] sm:$0xff]
      %v339 = vld [vmem:[%s276 + $0x1f0] sm:$0xff]
      %v340 = vld [vmem:[%s276 + $0x1f8] sm:$0xff]
      %v341 = vld [vmem:[%s276 + $0x200] sm:$0xff]
      %v342 = vld [vmem:[%s276 + $0x208] sm:$0xff]
      %v343 = vld [vmem:[%s276 + $0x210] sm:$0xff]
      %v344 = vld [vmem:[%s276 + $0x218] sm:$0xff]
      %v345 = vld [vmem:[%s276 + $0x220] sm:$0xff]
      %v346 = vld [vmem:[%s276 + $0x228] sm:$0xff]
      %v347 = vld [vmem:[%s276 + $0x230] sm:$0xff]
      %v348 = vld [vmem:[%s276 + $0x238] sm:$0xff]
      %v349 = vld [vmem:[%s276 + $0x240] sm:$0xff]
      %v350 = vld [vmem:[%s276 + $0x248] sm:$0xff]
      %v351 = vld [vmem:[%s276 + $0x250] sm:$0xff]
      %v352 = vld [vmem:[%s276 + $0x258] sm:$0xff]
      %v353 = vld [vmem:[%s276 + $0x260] sm:$0xff]
      %v354 = vld [vmem:[%s276 + $0x268] sm:$0xff]
      %v355 = vld [vmem:[%s276 + $0x270] sm:$0xff]
      %v356 = vld [vmem:[%s276 + $0x278] sm:$0xff]
      %v357 = vld [vmem:[%s276 + $0x280] sm:$0xff]
      %v358 = vld [vmem:[%s276 + $0x288] sm:$0xff]
      %v359 = vld [vmem:[%s276 + $0x290] sm:$0xff]
      %v360 = vld [vmem:[%s276 + $0x298] sm:$0xff]
      %v361 = vld [vmem:[%s276 + $0x2a0] sm:$0xff]
      %v362 = vld [vmem:[%s276 + $0x2a8] sm:$0xff]
      %v363 = vld [vmem:[%s276 + $0x2b0] sm:$0xff]
      %v364 = vld [vmem:[%s276 + $0x2b8] sm:$0xff]
      %v365 = vld [vmem:[%s276 + $0x2c0] sm:$0xff]
      %v366 = vld [vmem:[%s276 + $0x2c8] sm:$0xff]
      %v367 = vld [vmem:[%s1] sm:$0xff]
      %v368 = vld [vmem:[%s1 + $0x8] sm:$0xff]
      %v369 = vld [vmem:[%s1 + $0x10] sm:$0xff]
      %v370 = vld [vmem:[%s1 + $0x18] sm:$0xff]
      %v371 = vld [vmem:[%s1 + $0x20] sm:$0xff]
      %v372 = vld [vmem:[%s1 + $0x28] sm:$0xff]
      %v373 = vld [vmem:[%s1 + $0x30] sm:$0xff]
      %v374 = vld [vmem:[%s1 + $0x38] sm:$0xff]
      %vm375 = vcmask 523264
      %v377 = vsel %vm375, %v277, 0
      %v380 = vsel %vm375, %v278, 0
      %v383 = vsel %vm375, %v279, 0
      %v386 = vsel %vm375, %v280, 0
      %v389 = vsel %vm375, %v281, 0
      %v392 = vsel %vm375, %v282, 0
      %v395 = vsel %vm375, %v283, 0
      %v398 = vsel %vm375, %v284, 0
      %v401 = vsel %vm375, %v285, 0
      %v404 = vsel %vm375, %v286, 0
      %v407 = vsel %vm375, %v287, 0
      %v410 = vsel %vm375, %v288, 0
      %v413 = vsel %vm375, %v289, 0
      %v416 = vsel %vm375, %v290, 0
      %v419 = vsel %vm375, %v291, 0
      %v422 = vsel %vm375, %v292, 0
      %v425 = vsel %vm375, %v293, 0
      %v428 = vsel %vm375, %v294, 0
      %v431 = vsel %vm375, %v295, 0
      %v434 = vsel %vm375, %v296, 0
      %v437 = vsel %vm375, %v297, 0
      %v440 = vsel %vm375, %v298, 0
      %v443 = vsel %vm375, %v299, 0
      %v446 = vsel %vm375, %v300, 0
      %v449 = vsel %vm375, %v301, 0
      %v452 = vsel %vm375, %v302, 0
      %v455 = vsel %vm375, %v303, 0
      %v458 = vsel %vm375, %v304, 0
      %v461 = vsel %vm375, %v305, 0
      %v464 = vsel %vm375, %v306, 0
      %v467 = vsel %vm375, %v307, 0
      %v470 = vsel %vm375, %v308, 0
      %v473 = vsel %vm375, %v309, 0
      %v476 = vsel %vm375, %v310, 0
      %v479 = vsel %vm375, %v311, 0
      %v482 = vsel %vm375, %v312, 0
      %v485 = vsel %vm375, %v313, 0
      %v488 = vsel %vm375, %v314, 0
      %v491 = vsel %vm375, %v315, 0
      %v494 = vsel %vm375, %v316, 0
      %v497 = vsel %vm375, %v317, 0
      %v500 = vsel %vm375, %v318, 0
      %v503 = vsel %vm375, %v319, 0
      %v506 = vsel %vm375, %v320, 0
      %v509 = vsel %vm375, %v321, 0
      %v512 = vsel %vm375, %v322, 0
      %v515 = vsel %vm375, %v323, 0
      %v518 = vsel %vm375, %v324, 0
      %v521 = vsel %vm375, %v325, 0
      %v524 = vsel %vm375, %v326, 0
      %v527 = vsel %vm375, %v327, 0
      %v530 = vsel %vm375, %v328, 0
      %v533 = vsel %vm375, %v329, 0
      %v536 = vsel %vm375, %v330, 0
      %v539 = vsel %vm375, %v331, 0
      %v542 = vsel %vm375, %v332, 0
      %v545 = vsel %vm375, %v333, 0
      %v548 = vsel %vm375, %v334, 0
      %v551 = vsel %vm375, %v335, 0
      %v554 = vsel %vm375, %v336, 0
      %v557 = vsel %vm375, %v337, 0
      %v560 = vsel %vm375, %v338, 0
      %v563 = vsel %vm375, %v339, 0
      %v566 = vsel %vm375, %v340, 0
      %v569 = vsel %vm375, %v341, 0
      %v572 = vsel %vm375, %v342, 0
      %v575 = vsel %vm375, %v343, 0
      %v578 = vsel %vm375, %v344, 0
      %v581 = vsel %vm375, %v345, 0
      %v584 = vsel %vm375, %v346, 0
      %v587 = vsel %vm375, %v347, 0
      %v590 = vsel %vm375, %v348, 0
      %v593 = vsel %vm375, %v349, 0
      %v596 = vsel %vm375, %v350, 0
      %v599 = vsel %vm375, %v351, 0
      %v602 = vsel %vm375, %v352, 0
      %v605 = vsel %vm375, %v353, 0
      %v608 = vsel %vm375, %v354, 0
      %v611 = vsel %vm375, %v355, 0
      %v614 = vsel %vm375, %v356, 0
      %v617 = vsel %vm375, %v357, 0
      %v620 = vsel %vm375, %v358, 0
      %v623 = vsel %vm375, %v359, 0
      %v626 = vsel %vm375, %v360, 0
      %v629 = vsel %vm375, %v361, 0
      %v632 = vsel %vm375, %v362, 0
      %v635 = vsel %vm375, %v363, 0
      %v638 = vsel %vm375, %v364, 0
      %v641 = vsel %vm375, %v365, 0
      %v644 = vsel %vm375, %v366, 0
      %646 = vmatprep.subr.mxu0 0.0
      %647 = vmatpush1.msra.mxu0 0.0
      %648 = vmatprep.subr.mxu0 0.0
      %649 = vmatpush1.msra.mxu0 0.0
      %650 = vmatprep.subr.mxu0 0.0
      %651 = vmatpush1.msra.mxu0 0.0
      %652 = vmatprep.subr.mxu0 0.0
      %653 = vmatpush1.msra.mxu0 0.0
      %654 = vmatprep.subr.mxu0 0.0
      %655 = vmatpush1.msra.mxu0 0.0
      %656 = vmatprep.subr.mxu0 0.0
      %657 = vmatpush1.msra.mxu0 0.0
      %658 = vmatprep.subr.mxu0 0.0
      %659 = vmatpush1.msra.mxu0 0.0
      %660 = vmatprep.subr.mxu0 0.0
      %661 = vmatpush1.msra.mxu0 0.0
      %662 = vmatprep.subr.mxu0 0.0
      %663 = vmatpush1.msra.mxu0 %v374
      %664 = vmatprep.subr.mxu0 0.0
      %665 = vmatpush1.msra.mxu0 %v373
      %666 = vmatprep.subr.mxu0 0.0
      %667 = vmatpush1.msra.mxu0 %v372
      %668 = vmatprep.subr.mxu0 0.0
      %669 = vmatpush1.msra.mxu0 %v371
      %670 = vmatprep.subr.mxu0 0.0
      %671 = vmatpush1.msra.mxu0 %v370
      %672 = vmatprep.subr.mxu0 0.0
      %673 = vmatpush1.msra.mxu0 %v369
      %674 = vmatprep.subr.mxu0 0.0
      %675 = vmatpush1.msra.mxu0 %v368
      %676 = vmatprep.subr.mxu0 0.0
      %677 = vmatpush1.msra.mxu0 %v367
      %678 = vmatprep.subr.mxu0 0.0
      %679 = vmatpush2.msra.mxu0 0.0
      %680 = vmatprep.subr.mxu0 0.0
      %681 = vmatpush2.msra.mxu0 0.0
      %682 = vmatprep.subr.mxu0 0.0
      %683 = vmatpush2.msra.mxu0 0.0
      %684 = vmatprep.subr.mxu0 0.0
      %685 = vmatpush2.msra.mxu0 0.0
      %686 = vmatprep.subr.mxu0 0.0
      %687 = vmatpush2.msra.mxu0 0.0
      %688 = vmatprep.subr.mxu0 0.0
      %689 = vmatpush2.msra.mxu0 0.0
      %690 = vmatprep.subr.mxu0 0.0
      %691 = vmatpush2.msra.mxu0 0.0
      %692 = vmatprep.subr.mxu0 0.0
      %693 = vmatpush2.msra.mxu0 0.0
      %694 = vmatprep.subr.mxu0 0.0
      %695 = vmatpush2.msra.mxu0 0.0
      %696 = vmatprep.subr.mxu0 0.0
      %697 = vmatpush2.msra.mxu0 0.0
      %698 = vmatprep.subr.mxu0 0.0
      %699 = vmatpush2.msra.mxu0 0.0
      %700 = vmatprep.subr.mxu0 0.0
      %701 = vmatpush2.msra.mxu0 0.0
      %702 = vmatprep.subr.mxu0 0.0
      %703 = vmatpush2.msra.mxu0 0.0
      %704 = vmatprep.subr.mxu0 0.0
      %705 = vmatpush2.msra.mxu0 0.0
      %706 = vmatprep.subr.mxu0 0.0
      %707 = vmatpush2.msra.mxu0 0.0
      %708 = vmatprep.subr.mxu0 0.0
      %709 = vmatpush2.msra.mxu0 0.0
      %710 = vmatprep.mubr.f32.mxu0 0.0
      %711 = vmatmul.mubr.f32.gmra.mxu0 %v377
      %v712 = vpop.f32.mrf.mxu0
      %v713 = vadd.f32 0.0, %v712
      %v714 = vpop.f32.mrf.mxu0
      %715 = vmatprep.mubr.f32.mxu0 0.0
      %716 = vmatmul.mubr.f32.gmra.mxu0 %v380
      %v717 = vpop.f32.mrf.mxu0
      %v718 = vadd.f32 0.0, %v717
      %v719 = vpop.f32.mrf.mxu0
      %720 = vmatprep.mubr.f32.mxu0 0.0
      %721 = vmatmul.mubr.f32.gmra.mxu0 %v383
      %v722 = vpop.f32.mrf.mxu0
      %v723 = vadd.f32 0.0, %v722
      %v724 = vpop.f32.mrf.mxu0
      %725 = vmatprep.mubr.f32.mxu0 0.0
      %726 = vmatmul.mubr.f32.gmra.mxu0 %v386
      %v727 = vpop.f32.mrf.mxu0
      %v728 = vadd.f32 0.0, %v727
      %v729 = vpop.f32.mrf.mxu0
      %730 = vmatprep.mubr.f32.mxu0 0.0
      %731 = vmatmul.mubr.f32.gmra.mxu0 %v389
      %v732 = vpop.f32.mrf.mxu0
      %v733 = vadd.f32 0.0, %v732
      %v734 = vpop.f32.mrf.mxu0
      %735 = vmatprep.mubr.f32.mxu0 0.0
      %736 = vmatmul.mubr.f32.gmra.mxu0 %v392
      %v737 = vpop.f32.mrf.mxu0
      %v738 = vadd.f32 0.0, %v737
      %v739 = vpop.f32.mrf.mxu0
      %740 = vmatprep.mubr.f32.mxu0 0.0
      %741 = vmatmul.mubr.f32.gmra.mxu0 %v395
      %v742 = vpop.f32.mrf.mxu0
      %v743 = vadd.f32 0.0, %v742
      %v744 = vpop.f32.mrf.mxu0
      %745 = vmatprep.mubr.f32.mxu0 0.0
      %746 = vmatmul.mubr.f32.gmra.mxu0 %v398
      %v747 = vpop.f32.mrf.mxu0
      %v748 = vadd.f32 0.0, %v747
      %v749 = vpop.f32.mrf.mxu0
      %750 = vmatprep.mubr.f32.mxu0 0.0
      %751 = vmatmul.mubr.f32.gmra.mxu0 %v401
      %v752 = vpop.f32.mrf.mxu0
      %v753 = vadd.f32 0.0, %v752
      %v754 = vpop.f32.mrf.mxu0
      %755 = vmatprep.mubr.f32.mxu0 0.0
      %756 = vmatmul.mubr.f32.gmra.mxu0 %v404
      %v757 = vpop.f32.mrf.mxu0
      %v758 = vadd.f32 0.0, %v757
      %v759 = vpop.f32.mrf.mxu0
      %760 = vmatprep.mubr.f32.mxu0 0.0
      %761 = vmatmul.mubr.f32.gmra.mxu0 %v407
      %v762 = vpop.f32.mrf.mxu0
      %v763 = vadd.f32 0.0, %v762
      %v764 = vpop.f32.mrf.mxu0
      %765 = vmatprep.mubr.f32.mxu0 0.0
      %766 = vmatmul.mubr.f32.gmra.mxu0 %v410
      %v767 = vpop.f32.mrf.mxu0
      %v768 = vadd.f32 0.0, %v767
      %v769 = vpop.f32.mrf.mxu0
      %770 = vmatprep.mubr.f32.mxu0 0.0
      %771 = vmatmul.mubr.f32.gmra.mxu0 %v413
      %v772 = vpop.f32.mrf.mxu0
      %v773 = vadd.f32 0.0, %v772
      %v774 = vpop.f32.mrf.mxu0
      %775 = vmatprep.mubr.f32.mxu0 0.0
      %776 = vmatmul.mubr.f32.gmra.mxu0 %v416
      %v777 = vpop.f32.mrf.mxu0
      %v778 = vadd.f32 0.0, %v777
      %v779 = vpop.f32.mrf.mxu0
      %780 = vmatprep.mubr.f32.mxu0 0.0
      %781 = vmatmul.mubr.f32.gmra.mxu0 %v419
      %v782 = vpop.f32.mrf.mxu0
      %v783 = vadd.f32 0.0, %v782
      %v784 = vpop.f32.mrf.mxu0
      %785 = vmatprep.mubr.f32.mxu0 0.0
      %786 = vmatmul.mubr.f32.gmra.mxu0 %v422
      %v787 = vpop.f32.mrf.mxu0
      %v788 = vadd.f32 0.0, %v787
      %v789 = vpop.f32.mrf.mxu0
      %790 = vmatprep.mubr.f32.mxu0 0.0
      %791 = vmatmul.mubr.f32.gmra.mxu0 %v425
      %v792 = vpop.f32.mrf.mxu0
      %v793 = vadd.f32 0.0, %v792
      %v794 = vpop.f32.mrf.mxu0
      %795 = vmatprep.mubr.f32.mxu0 0.0
      %796 = vmatmul.mubr.f32.gmra.mxu0 %v428
      %v797 = vpop.f32.mrf.mxu0
      %v798 = vadd.f32 0.0, %v797
      %v799 = vpop.f32.mrf.mxu0
      %800 = vmatprep.mubr.f32.mxu0 0.0
      %801 = vmatmul.mubr.f32.gmra.mxu0 %v431
      %v802 = vpop.f32.mrf.mxu0
      %v803 = vadd.f32 0.0, %v802
      %v804 = vpop.f32.mrf.mxu0
      %805 = vmatprep.mubr.f32.mxu0 0.0
      %806 = vmatmul.mubr.f32.gmra.mxu0 %v434
      %v807 = vpop.f32.mrf.mxu0
      %v808 = vadd.f32 0.0, %v807
      %v809 = vpop.f32.mrf.mxu0
      %810 = vmatprep.mubr.f32.mxu0 0.0
      %811 = vmatmul.mubr.f32.gmra.mxu0 %v437
      %v812 = vpop.f32.mrf.mxu0
      %v813 = vadd.f32 0.0, %v812
      %v814 = vpop.f32.mrf.mxu0
      %815 = vmatprep.mubr.f32.mxu0 0.0
      %816 = vmatmul.mubr.f32.gmra.mxu0 %v440
      %v817 = vpop.f32.mrf.mxu0
      %v818 = vadd.f32 0.0, %v817
      %v819 = vpop.f32.mrf.mxu0
      %820 = vmatprep.mubr.f32.mxu0 0.0
      %821 = vmatmul.mubr.f32.gmra.mxu0 %v443
      %v822 = vpop.f32.mrf.mxu0
      %v823 = vadd.f32 0.0, %v822
      %v824 = vpop.f32.mrf.mxu0
      %825 = vmatprep.mubr.f32.mxu0 0.0
      %826 = vmatmul.mubr.f32.gmra.mxu0 %v446
      %v827 = vpop.f32.mrf.mxu0
      %v828 = vadd.f32 0.0, %v827
      %v829 = vpop.f32.mrf.mxu0
      %830 = vmatprep.mubr.f32.mxu0 0.0
      %831 = vmatmul.mubr.f32.gmra.mxu0 %v449
      %v832 = vpop.f32.mrf.mxu0
      %v833 = vadd.f32 0.0, %v832
      %v834 = vpop.f32.mrf.mxu0
      %835 = vmatprep.mubr.f32.mxu0 0.0
      %836 = vmatmul.mubr.f32.gmra.mxu0 %v452
      %v837 = vpop.f32.mrf.mxu0
      %v838 = vadd.f32 0.0, %v837
      %v839 = vpop.f32.mrf.mxu0
      %840 = vmatprep.mubr.f32.mxu0 0.0
      %841 = vmatmul.mubr.f32.gmra.mxu0 %v455
      %v842 = vpop.f32.mrf.mxu0
      %v843 = vadd.f32 0.0, %v842
      %v844 = vpop.f32.mrf.mxu0
      %845 = vmatprep.mubr.f32.mxu0 0.0
      %846 = vmatmul.mubr.f32.gmra.mxu0 %v458
      %v847 = vpop.f32.mrf.mxu0
      %v848 = vadd.f32 0.0, %v847
      %v849 = vpop.f32.mrf.mxu0
      %850 = vmatprep.mubr.f32.mxu0 0.0
      %851 = vmatmul.mubr.f32.gmra.mxu0 %v461
      %v852 = vpop.f32.mrf.mxu0
      %v853 = vadd.f32 0.0, %v852
      %v854 = vpop.f32.mrf.mxu0
      %855 = vmatprep.mubr.f32.mxu0 0.0
      %856 = vmatmul.mubr.f32.gmra.mxu0 %v464
      %v857 = vpop.f32.mrf.mxu0
      %v858 = vadd.f32 0.0, %v857
      %v859 = vpop.f32.mrf.mxu0
      %860 = vmatprep.mubr.f32.mxu0 0.0
      %861 = vmatmul.mubr.f32.gmra.mxu0 %v467
      %v862 = vpop.f32.mrf.mxu0
      %v863 = vadd.f32 0.0, %v862
      %v864 = vpop.f32.mrf.mxu0
      %865 = vmatprep.mubr.f32.mxu0 0.0
      %866 = vmatmul.mubr.f32.gmra.mxu0 %v470
      %v867 = vpop.f32.mrf.mxu0
      %v868 = vadd.f32 0.0, %v867
      %v869 = vpop.f32.mrf.mxu0
      %870 = vmatprep.mubr.f32.mxu0 0.0
      %871 = vmatmul.mubr.f32.gmra.mxu0 %v473
      %v872 = vpop.f32.mrf.mxu0
      %v873 = vadd.f32 0.0, %v872
      %v874 = vpop.f32.mrf.mxu0
      %875 = vmatprep.mubr.f32.mxu0 0.0
      %876 = vmatmul.mubr.f32.gmra.mxu0 %v476
      %v877 = vpop.f32.mrf.mxu0
      %v878 = vadd.f32 0.0, %v877
      %v879 = vpop.f32.mrf.mxu0
      %880 = vmatprep.mubr.f32.mxu0 0.0
      %881 = vmatmul.mubr.f32.gmra.mxu0 %v479
      %v882 = vpop.f32.mrf.mxu0
      %v883 = vadd.f32 0.0, %v882
      %v884 = vpop.f32.mrf.mxu0
      %885 = vmatprep.mubr.f32.mxu0 0.0
      %886 = vmatmul.mubr.f32.gmra.mxu0 %v482
      %v887 = vpop.f32.mrf.mxu0
      %v888 = vadd.f32 0.0, %v887
      %v889 = vpop.f32.mrf.mxu0
      %890 = vmatprep.mubr.f32.mxu0 0.0
      %891 = vmatmul.mubr.f32.gmra.mxu0 %v485
      %v892 = vpop.f32.mrf.mxu0
      %v893 = vadd.f32 0.0, %v892
      %v894 = vpop.f32.mrf.mxu0
      %895 = vmatprep.mubr.f32.mxu0 0.0
      %896 = vmatmul.mubr.f32.gmra.mxu0 %v488
      %v897 = vpop.f32.mrf.mxu0
      %v898 = vadd.f32 0.0, %v897
      %v899 = vpop.f32.mrf.mxu0
      %900 = vmatprep.mubr.f32.mxu0 0.0
      %901 = vmatmul.mubr.f32.gmra.mxu0 %v491
      %v902 = vpop.f32.mrf.mxu0
      %v903 = vadd.f32 0.0, %v902
      %v904 = vpop.f32.mrf.mxu0
      %905 = vmatprep.mubr.f32.mxu0 0.0
      %906 = vmatmul.mubr.f32.gmra.mxu0 %v494
      %v907 = vpop.f32.mrf.mxu0
      %v908 = vadd.f32 0.0, %v907
      %v909 = vpop.f32.mrf.mxu0
      %910 = vmatprep.mubr.f32.mxu0 0.0
      %911 = vmatmul.mubr.f32.gmra.mxu0 %v497
      %v912 = vpop.f32.mrf.mxu0
      %v913 = vadd.f32 0.0, %v912
      %v914 = vpop.f32.mrf.mxu0
      %915 = vmatprep.mubr.f32.mxu0 0.0
      %916 = vmatmul.mubr.f32.gmra.mxu0 %v500
      %v917 = vpop.f32.mrf.mxu0
      %v918 = vadd.f32 0.0, %v917
      %v919 = vpop.f32.mrf.mxu0
      %920 = vmatprep.mubr.f32.mxu0 0.0
      %921 = vmatmul.mubr.f32.gmra.mxu0 %v503
      %v922 = vpop.f32.mrf.mxu0
      %v923 = vadd.f32 0.0, %v922
      %v924 = vpop.f32.mrf.mxu0
      %925 = vmatprep.mubr.f32.mxu0 0.0
      %926 = vmatmul.mubr.f32.gmra.mxu0 %v506
      %v927 = vpop.f32.mrf.mxu0
      %v928 = vadd.f32 0.0, %v927
      %v929 = vpop.f32.mrf.mxu0
      %930 = vmatprep.mubr.f32.mxu0 0.0
      %931 = vmatmul.mubr.f32.gmra.mxu0 %v509
      %v932 = vpop.f32.mrf.mxu0
      %v933 = vadd.f32 0.0, %v932
      %v934 = vpop.f32.mrf.mxu0
      %935 = vmatprep.mubr.f32.mxu0 0.0
      %936 = vmatmul.mubr.f32.gmra.mxu0 %v512
      %v937 = vpop.f32.mrf.mxu0
      %v938 = vadd.f32 0.0, %v937
      %v939 = vpop.f32.mrf.mxu0
      %940 = vmatprep.mubr.f32.mxu0 0.0
      %941 = vmatmul.mubr.f32.gmra.mxu0 %v515
      %v942 = vpop.f32.mrf.mxu0
      %v943 = vadd.f32 0.0, %v942
      %v944 = vpop.f32.mrf.mxu0
      %945 = vmatprep.mubr.f32.mxu0 0.0
      %946 = vmatmul.mubr.f32.gmra.mxu0 %v518
      %v947 = vpop.f32.mrf.mxu0
      %v948 = vadd.f32 0.0, %v947
      %v949 = vpop.f32.mrf.mxu0
      %950 = vmatprep.mubr.f32.mxu0 0.0
      %951 = vmatmul.mubr.f32.gmra.mxu0 %v521
      %v952 = vpop.f32.mrf.mxu0
      %v953 = vadd.f32 0.0, %v952
      %v954 = vpop.f32.mrf.mxu0
      %955 = vmatprep.mubr.f32.mxu0 0.0
      %956 = vmatmul.mubr.f32.gmra.mxu0 %v524
      %v957 = vpop.f32.mrf.mxu0
      %v958 = vadd.f32 0.0, %v957
      %v959 = vpop.f32.mrf.mxu0
      %960 = vmatprep.mubr.f32.mxu0 0.0
      %961 = vmatmul.mubr.f32.gmra.mxu0 %v527
      %v962 = vpop.f32.mrf.mxu0
      %v963 = vadd.f32 0.0, %v962
      %v964 = vpop.f32.mrf.mxu0
      %965 = vmatprep.mubr.f32.mxu0 0.0
      %966 = vmatmul.mubr.f32.gmra.mxu0 %v530
      %v967 = vpop.f32.mrf.mxu0
      %v968 = vadd.f32 0.0, %v967
      %v969 = vpop.f32.mrf.mxu0
      %970 = vmatprep.mubr.f32.mxu0 0.0
      %971 = vmatmul.mubr.f32.gmra.mxu0 %v533
      %v972 = vpop.f32.mrf.mxu0
      %v973 = vadd.f32 0.0, %v972
      %v974 = vpop.f32.mrf.mxu0
      %975 = vmatprep.mubr.f32.mxu0 0.0
      %976 = vmatmul.mubr.f32.gmra.mxu0 %v536
      %v977 = vpop.f32.mrf.mxu0
      %v978 = vadd.f32 0.0, %v977
      %v979 = vpop.f32.mrf.mxu0
      %980 = vmatprep.mubr.f32.mxu0 0.0
      %981 = vmatmul.mubr.f32.gmra.mxu0 %v539
      %v982 = vpop.f32.mrf.mxu0
      %v983 = vadd.f32 0.0, %v982
      %v984 = vpop.f32.mrf.mxu0
      %985 = vmatprep.mubr.f32.mxu0 0.0
      %986 = vmatmul.mubr.f32.gmra.mxu0 %v542
      %v987 = vpop.f32.mrf.mxu0
      %v988 = vadd.f32 0.0, %v987
      %v989 = vpop.f32.mrf.mxu0
      %990 = vmatprep.mubr.f32.mxu0 0.0
      %991 = vmatmul.mubr.f32.gmra.mxu0 %v545
      %v992 = vpop.f32.mrf.mxu0
      %v993 = vadd.f32 0.0, %v992
      %v994 = vpop.f32.mrf.mxu0
      %995 = vmatprep.mubr.f32.mxu0 0.0
      %996 = vmatmul.mubr.f32.gmra.mxu0 %v548
      %v997 = vpop.f32.mrf.mxu0
      %v998 = vadd.f32 0.0, %v997
      %v999 = vpop.f32.mrf.mxu0
      %1000 = vmatprep.mubr.f32.mxu0 0.0
      %1001 = vmatmul.mubr.f32.gmra.mxu0 %v551
      %v1002 = vpop.f32.mrf.mxu0
      %v1003 = vadd.f32 0.0, %v1002
      %v1004 = vpop.f32.mrf.mxu0
      %1005 = vmatprep.mubr.f32.mxu0 0.0
      %1006 = vmatmul.mubr.f32.gmra.mxu0 %v554
      %v1007 = vpop.f32.mrf.mxu0
      %v1008 = vadd.f32 0.0, %v1007
      %v1009 = vpop.f32.mrf.mxu0
      %1010 = vmatprep.mubr.f32.mxu0 0.0
      %1011 = vmatmul.mubr.f32.gmra.mxu0 %v557
      %v1012 = vpop.f32.mrf.mxu0
      %v1013 = vadd.f32 0.0, %v1012
      %v1014 = vpop.f32.mrf.mxu0
      %1015 = vmatprep.mubr.f32.mxu0 0.0
      %1016 = vmatmul.mubr.f32.gmra.mxu0 %v560
      %v1017 = vpop.f32.mrf.mxu0
      %v1018 = vadd.f32 0.0, %v1017
      %v1019 = vpop.f32.mrf.mxu0
      %1020 = vmatprep.mubr.f32.mxu0 0.0
      %1021 = vmatmul.mubr.f32.gmra.mxu0 %v563
      %v1022 = vpop.f32.mrf.mxu0
      %v1023 = vadd.f32 0.0, %v1022
      %v1024 = vpop.f32.mrf.mxu0
      %1025 = vmatprep.mubr.f32.mxu0 0.0
      %1026 = vmatmul.mubr.f32.gmra.mxu0 %v566
      %v1027 = vpop.f32.mrf.mxu0
      %v1028 = vadd.f32 0.0, %v1027
      %v1029 = vpop.f32.mrf.mxu0
      %1030 = vmatprep.mubr.f32.mxu0 0.0
      %1031 = vmatmul.mubr.f32.gmra.mxu0 %v569
      %v1032 = vpop.f32.mrf.mxu0
      %v1033 = vadd.f32 0.0, %v1032
      %v1034 = vpop.f32.mrf.mxu0
      %1035 = vmatprep.mubr.f32.mxu0 0.0
      %1036 = vmatmul.mubr.f32.gmra.mxu0 %v572
      %v1037 = vpop.f32.mrf.mxu0
      %v1038 = vadd.f32 0.0, %v1037
      %v1039 = vpop.f32.mrf.mxu0
      %1040 = vmatprep.mubr.f32.mxu0 0.0
      %1041 = vmatmul.mubr.f32.gmra.mxu0 %v575
      %v1042 = vpop.f32.mrf.mxu0
      %v1043 = vadd.f32 0.0, %v1042
      %v1044 = vpop.f32.mrf.mxu0
      %1045 = vmatprep.mubr.f32.mxu0 0.0
      %1046 = vmatmul.mubr.f32.gmra.mxu0 %v578
      %v1047 = vpop.f32.mrf.mxu0
      %v1048 = vadd.f32 0.0, %v1047
      %v1049 = vpop.f32.mrf.mxu0
      %1050 = vmatprep.mubr.f32.mxu0 0.0
      %1051 = vmatmul.mubr.f32.gmra.mxu0 %v581
      %v1052 = vpop.f32.mrf.mxu0
      %v1053 = vadd.f32 0.0, %v1052
      %v1054 = vpop.f32.mrf.mxu0
      %1055 = vmatprep.mubr.f32.mxu0 0.0
      %1056 = vmatmul.mubr.f32.gmra.mxu0 %v584
      %v1057 = vpop.f32.mrf.mxu0
      %v1058 = vadd.f32 0.0, %v1057
      %v1059 = vpop.f32.mrf.mxu0
      %1060 = vmatprep.mubr.f32.mxu0 0.0
      %1061 = vmatmul.mubr.f32.gmra.mxu0 %v587
      %v1062 = vpop.f32.mrf.mxu0
      %v1063 = vadd.f32 0.0, %v1062
      %v1064 = vpop.f32.mrf.mxu0
      %1065 = vmatprep.mubr.f32.mxu0 0.0
      %1066 = vmatmul.mubr.f32.gmra.mxu0 %v590
      %v1067 = vpop.f32.mrf.mxu0
      %v1068 = vadd.f32 0.0, %v1067
      %v1069 = vpop.f32.mrf.mxu0
      %1070 = vmatprep.mubr.f32.mxu0 0.0
      %1071 = vmatmul.mubr.f32.gmra.mxu0 %v593
      %v1072 = vpop.f32.mrf.mxu0
      %v1073 = vadd.f32 0.0, %v1072
      %v1074 = vpop.f32.mrf.mxu0
      %1075 = vmatprep.mubr.f32.mxu0 0.0
      %1076 = vmatmul.mubr.f32.gmra.mxu0 %v596
      %v1077 = vpop.f32.mrf.mxu0
      %v1078 = vadd.f32 0.0, %v1077
      %v1079 = vpop.f32.mrf.mxu0
      %1080 = vmatprep.mubr.f32.mxu0 0.0
      %1081 = vmatmul.mubr.f32.gmra.mxu0 %v599
      %v1082 = vpop.f32.mrf.mxu0
      %v1083 = vadd.f32 0.0, %v1082
      %v1084 = vpop.f32.mrf.mxu0
      %1085 = vmatprep.mubr.f32.mxu0 0.0
      %1086 = vmatmul.mubr.f32.gmra.mxu0 %v602
      %v1087 = vpop.f32.mrf.mxu0
      %v1088 = vadd.f32 0.0, %v1087
      %v1089 = vpop.f32.mrf.mxu0
      %1090 = vmatprep.mubr.f32.mxu0 0.0
      %1091 = vmatmul.mubr.f32.gmra.mxu0 %v605
      %v1092 = vpop.f32.mrf.mxu0
      %v1093 = vadd.f32 0.0, %v1092
      %v1094 = vpop.f32.mrf.mxu0
      %1095 = vmatprep.mubr.f32.mxu0 0.0
      %1096 = vmatmul.mubr.f32.gmra.mxu0 %v608
      %v1097 = vpop.f32.mrf.mxu0
      %v1098 = vadd.f32 0.0, %v1097
      %v1099 = vpop.f32.mrf.mxu0
      %1100 = vmatprep.mubr.f32.mxu0 0.0
      %1101 = vmatmul.mubr.f32.gmra.mxu0 %v611
      %v1102 = vpop.f32.mrf.mxu0
      %v1103 = vadd.f32 0.0, %v1102
      %v1104 = vpop.f32.mrf.mxu0
      %1105 = vmatprep.mubr.f32.mxu0 0.0
      %1106 = vmatmul.mubr.f32.gmra.mxu0 %v614
      %v1107 = vpop.f32.mrf.mxu0
      %v1108 = vadd.f32 0.0, %v1107
      %v1109 = vpop.f32.mrf.mxu0
      %1110 = vmatprep.mubr.f32.mxu0 0.0
      %1111 = vmatmul.mubr.f32.gmra.mxu0 %v617
      %v1112 = vpop.f32.mrf.mxu0
      %v1113 = vadd.f32 0.0, %v1112
      %v1114 = vpop.f32.mrf.mxu0
      %1115 = vmatprep.mubr.f32.mxu0 0.0
      %1116 = vmatmul.mubr.f32.gmra.mxu0 %v620
      %v1117 = vpop.f32.mrf.mxu0
      %v1118 = vadd.f32 0.0, %v1117
      %v1119 = vpop.f32.mrf.mxu0
      %1120 = vmatprep.mubr.f32.mxu0 0.0
      %1121 = vmatmul.mubr.f32.gmra.mxu0 %v623
      %v1122 = vpop.f32.mrf.mxu0
      %v1123 = vadd.f32 0.0, %v1122
      %v1124 = vpop.f32.mrf.mxu0
      %1125 = vmatprep.mubr.f32.mxu0 0.0
      %1126 = vmatmul.mubr.f32.gmra.mxu0 %v626
      %v1127 = vpop.f32.mrf.mxu0
      %v1128 = vadd.f32 0.0, %v1127
      %v1129 = vpop.f32.mrf.mxu0
      %1130 = vmatprep.mubr.f32.mxu0 0.0
      %1131 = vmatmul.mubr.f32.gmra.mxu0 %v629
      %v1132 = vpop.f32.mrf.mxu0
      %v1133 = vadd.f32 0.0, %v1132
      %v1134 = vpop.f32.mrf.mxu0
      %1135 = vmatprep.mubr.f32.mxu0 0.0
      %1136 = vmatmul.mubr.f32.gmra.mxu0 %v632
      %v1137 = vpop.f32.mrf.mxu0
      %v1138 = vadd.f32 0.0, %v1137
      %v1139 = vpop.f32.mrf.mxu0
      %1140 = vmatprep.mubr.f32.mxu0 0.0
      %1141 = vmatmul.mubr.f32.gmra.mxu0 %v635
      %v1142 = vpop.f32.mrf.mxu0
      %v1143 = vadd.f32 0.0, %v1142
      %v1144 = vpop.f32.mrf.mxu0
      %1145 = vmatprep.mubr.f32.mxu0 0.0
      %1146 = vmatmul.mubr.f32.gmra.mxu0 %v638
      %v1147 = vpop.f32.mrf.mxu0
      %v1148 = vadd.f32 0.0, %v1147
      %v1149 = vpop.f32.mrf.mxu0
      %1150 = vmatprep.mubr.f32.mxu0 0.0
      %1151 = vmatmul.mubr.f32.gmra.mxu0 %v641
      %v1152 = vpop.f32.mrf.mxu0
      %v1153 = vadd.f32 0.0, %v1152
      %v1154 = vpop.f32.mrf.mxu0
      %1155 = vmatprep.mubr.f32.mxu0 0.0
      %1156 = vmatmul.mubr.f32.gmra.mxu0 %v644
      %v1157 = vpop.f32.mrf.mxu0
      %v1158 = vadd.f32 0.0, %v1157
      %v1159 = vpop.f32.mrf.mxu0
      %1160 = vdwg.mxu0
      %v1161 = vld [vmem:[%s2] sm:$0x1]
      %v1163 = vlaneseq
      %v1164 = vshrl.u32 %v1163, 7
      %v1165 = vsub.s32 0, %v1164
      %v1166 = vrot.slane %v1161, %v1165
      %v1168 = vmul.f32 %v713, %v1166
      %v1169 = vmul.f32 %v718, %v1166
      %v1170 = vmul.f32 %v723, %v1166
      %v1171 = vmul.f32 %v728, %v1166
      %v1172 = vmul.f32 %v733, %v1166
      %v1173 = vmul.f32 %v738, %v1166
      %v1174 = vmul.f32 %v743, %v1166
      %v1175 = vmul.f32 %v748, %v1166
      %v1176 = vmul.f32 %v753, %v1166
      %v1177 = vmul.f32 %v758, %v1166
      %v1178 = vmul.f32 %v763, %v1166
      %v1179 = vmul.f32 %v768, %v1166
      %v1180 = vmul.f32 %v773, %v1166
      %v1181 = vmul.f32 %v778, %v1166
      %v1182 = vmul.f32 %v783, %v1166
      %v1183 = vmul.f32 %v788, %v1166
      %v1184 = vmul.f32 %v793, %v1166
      %v1185 = vmul.f32 %v798, %v1166
      %v1186 = vmul.f32 %v803, %v1166
      %v1187 = vmul.f32 %v808, %v1166
      %v1188 = vmul.f32 %v813, %v1166
      %v1189 = vmul.f32 %v818, %v1166
      %v1190 = vmul.f32 %v823, %v1166
      %v1191 = vmul.f32 %v828, %v1166
      %v1192 = vmul.f32 %v833, %v1166
      %v1193 = vmul.f32 %v838, %v1166
      %v1194 = vmul.f32 %v843, %v1166
      %v1195 = vmul.f32 %v848, %v1166
      %v1196 = vmul.f32 %v853, %v1166
      %v1197 = vmul.f32 %v858, %v1166
      %v1198 = vmul.f32 %v863, %v1166
      %v1199 = vmul.f32 %v868, %v1166
      %v1200 = vmul.f32 %v873, %v1166
      %v1201 = vmul.f32 %v878, %v1166
      %v1202 = vmul.f32 %v883, %v1166
      %v1203 = vmul.f32 %v888, %v1166
      %v1204 = vmul.f32 %v893, %v1166
      %v1205 = vmul.f32 %v898, %v1166
      %v1206 = vmul.f32 %v903, %v1166
      %v1207 = vmul.f32 %v908, %v1166
      %v1208 = vmul.f32 %v913, %v1166
      %v1209 = vmul.f32 %v918, %v1166
      %v1210 = vmul.f32 %v923, %v1166
      %v1211 = vmul.f32 %v928, %v1166
      %v1212 = vmul.f32 %v933, %v1166
      %v1213 = vmul.f32 %v938, %v1166
      %v1214 = vmul.f32 %v943, %v1166
      %v1215 = vmul.f32 %v948, %v1166
      %v1216 = vmul.f32 %v953, %v1166
      %v1217 = vmul.f32 %v958, %v1166
      %v1218 = vmul.f32 %v963, %v1166
      %v1219 = vmul.f32 %v968, %v1166
      %v1220 = vmul.f32 %v973, %v1166
      %v1221 = vmul.f32 %v978, %v1166
      %v1222 = vmul.f32 %v983, %v1166
      %v1223 = vmul.f32 %v988, %v1166
      %v1224 = vmul.f32 %v993, %v1166
      %v1225 = vmul.f32 %v998, %v1166
      %v1226 = vmul.f32 %v1003, %v1166
      %v1227 = vmul.f32 %v1008, %v1166
      %v1228 = vmul.f32 %v1013, %v1166
      %v1229 = vmul.f32 %v1018, %v1166
      %v1230 = vmul.f32 %v1023, %v1166
      %v1231 = vmul.f32 %v1028, %v1166
      %v1232 = vmul.f32 %v1033, %v1166
      %v1233 = vmul.f32 %v1038, %v1166
      %v1234 = vmul.f32 %v1043, %v1166
      %v1235 = vmul.f32 %v1048, %v1166
      %v1236 = vmul.f32 %v1053, %v1166
      %v1237 = vmul.f32 %v1058, %v1166
      %v1238 = vmul.f32 %v1063, %v1166
      %v1239 = vmul.f32 %v1068, %v1166
      %v1240 = vmul.f32 %v1073, %v1166
      %v1241 = vmul.f32 %v1078, %v1166
      %v1242 = vmul.f32 %v1083, %v1166
      %v1243 = vmul.f32 %v1088, %v1166
      %v1244 = vmul.f32 %v1093, %v1166
      %v1245 = vmul.f32 %v1098, %v1166
      %v1246 = vmul.f32 %v1103, %v1166
      %v1247 = vmul.f32 %v1108, %v1166
      %v1248 = vmul.f32 %v1113, %v1166
      %v1249 = vmul.f32 %v1118, %v1166
      %v1250 = vmul.f32 %v1123, %v1166
      %v1251 = vmul.f32 %v1128, %v1166
      %v1252 = vmul.f32 %v1133, %v1166
      %v1253 = vmul.f32 %v1138, %v1166
      %v1254 = vmul.f32 %v1143, %v1166
      %v1255 = vmul.f32 %v1148, %v1166
      %v1256 = vmul.f32 %v1153, %v1166
      %v1257 = vmul.f32 %v1158, %v1166
      %v1258 = vld [vmem:[%s3] sm:$0x1]
      %v1260 = vlaneseq
      %v1261 = vshrl.u32 %v1260, 7
      %v1262 = vsub.s32 0, %v1261
      %v1263 = vrot.slane %v1258, %v1262
      %v1265 = vadd.f32 %v1168, %v1263
      %v1266 = vadd.f32 %v1169, %v1263
      %v1267 = vadd.f32 %v1170, %v1263
      %v1268 = vadd.f32 %v1171, %v1263
      %v1269 = vadd.f32 %v1172, %v1263
      %v1270 = vadd.f32 %v1173, %v1263
      %v1271 = vadd.f32 %v1174, %v1263
      %v1272 = vadd.f32 %v1175, %v1263
      %v1273 = vadd.f32 %v1176, %v1263
      %v1274 = vadd.f32 %v1177, %v1263
      %v1275 = vadd.f32 %v1178, %v1263
      %v1276 = vadd.f32 %v1179, %v1263
      %v1277 = vadd.f32 %v1180, %v1263
      %v1278 = vadd.f32 %v1181, %v1263
      %v1279 = vadd.f32 %v1182, %v1263
      %v1280 = vadd.f32 %v1183, %v1263
      %v1281 = vadd.f32 %v1184, %v1263
      %v1282 = vadd.f32 %v1185, %v1263
      %v1283 = vadd.f32 %v1186, %v1263
      %v1284 = vadd.f32 %v1187, %v1263
      %v1285 = vadd.f32 %v1188, %v1263
      %v1286 = vadd.f32 %v1189, %v1263
      %v1287 = vadd.f32 %v1190, %v1263
      %v1288 = vadd.f32 %v1191, %v1263
      %v1289 = vadd.f32 %v1192, %v1263
      %v1290 = vadd.f32 %v1193, %v1263
      %v1291 = vadd.f32 %v1194, %v1263
      %v1292 = vadd.f32 %v1195, %v1263
      %v1293 = vadd.f32 %v1196, %v1263
      %v1294 = vadd.f32 %v1197, %v1263
      %v1295 = vadd.f32 %v1198, %v1263
      %v1296 = vadd.f32 %v1199, %v1263
      %v1297 = vadd.f32 %v1200, %v1263
      %v1298 = vadd.f32 %v1201, %v1263
      %v1299 = vadd.f32 %v1202, %v1263
      %v1300 = vadd.f32 %v1203, %v1263
      %v1301 = vadd.f32 %v1204, %v1263
      %v1302 = vadd.f32 %v1205, %v1263
      %v1303 = vadd.f32 %v1206, %v1263
      %v1304 = vadd.f32 %v1207, %v1263
      %v1305 = vadd.f32 %v1208, %v1263
      %v1306 = vadd.f32 %v1209, %v1263
      %v1307 = vadd.f32 %v1210, %v1263
      %v1308 = vadd.f32 %v1211, %v1263
      %v1309 = vadd.f32 %v1212, %v1263
      %v1310 = vadd.f32 %v1213, %v1263
      %v1311 = vadd.f32 %v1214, %v1263
      %v1312 = vadd.f32 %v1215, %v1263
      %v1313 = vadd.f32 %v1216, %v1263
      %v1314 = vadd.f32 %v1217, %v1263
      %v1315 = vadd.f32 %v1218, %v1263
      %v1316 = vadd.f32 %v1219, %v1263
      %v1317 = vadd.f32 %v1220, %v1263
      %v1318 = vadd.f32 %v1221, %v1263
      %v1319 = vadd.f32 %v1222, %v1263
      %v1320 = vadd.f32 %v1223, %v1263
      %v1321 = vadd.f32 %v1224, %v1263
      %v1322 = vadd.f32 %v1225, %v1263
      %v1323 = vadd.f32 %v1226, %v1263
      %v1324 = vadd.f32 %v1227, %v1263
      %v1325 = vadd.f32 %v1228, %v1263
      %v1326 = vadd.f32 %v1229, %v1263
      %v1327 = vadd.f32 %v1230, %v1263
      %v1328 = vadd.f32 %v1231, %v1263
      %v1329 = vadd.f32 %v1232, %v1263
      %v1330 = vadd.f32 %v1233, %v1263
      %v1331 = vadd.f32 %v1234, %v1263
      %v1332 = vadd.f32 %v1235, %v1263
      %v1333 = vadd.f32 %v1236, %v1263
      %v1334 = vadd.f32 %v1237, %v1263
      %v1335 = vadd.f32 %v1238, %v1263
      %v1336 = vadd.f32 %v1239, %v1263
      %v1337 = vadd.f32 %v1240, %v1263
      %v1338 = vadd.f32 %v1241, %v1263
      %v1339 = vadd.f32 %v1242, %v1263
      %v1340 = vadd.f32 %v1243, %v1263
      %v1341 = vadd.f32 %v1244, %v1263
      %v1342 = vadd.f32 %v1245, %v1263
      %v1343 = vadd.f32 %v1246, %v1263
      %v1344 = vadd.f32 %v1247, %v1263
      %v1345 = vadd.f32 %v1248, %v1263
      %v1346 = vadd.f32 %v1249, %v1263
      %v1347 = vadd.f32 %v1250, %v1263
      %v1348 = vadd.f32 %v1251, %v1263
      %v1349 = vadd.f32 %v1252, %v1263
      %v1350 = vadd.f32 %v1253, %v1263
      %v1351 = vadd.f32 %v1254, %v1263
      %v1352 = vadd.f32 %v1255, %v1263
      %v1353 = vadd.f32 %v1256, %v1263
      %v1354 = vadd.f32 %v1257, %v1263
      %v1355 = vmax.f32 %v1265, 0.0
      %v1356 = vmax.f32 %v1266, 0.0
      %v1357 = vmax.f32 %v1267, 0.0
      %v1358 = vmax.f32 %v1268, 0.0
      %v1359 = vmax.f32 %v1269, 0.0
      %v1360 = vmax.f32 %v1270, 0.0
      %v1361 = vmax.f32 %v1271, 0.0
      %v1362 = vmax.f32 %v1272, 0.0
      %v1363 = vmax.f32 %v1273, 0.0
      %v1364 = vmax.f32 %v1274, 0.0
      %v1365 = vmax.f32 %v1275, 0.0
      %v1366 = vmax.f32 %v1276, 0.0
      %v1367 = vmax.f32 %v1277, 0.0
      %v1368 = vmax.f32 %v1278, 0.0
      %v1369 = vmax.f32 %v1279, 0.0
      %v1370 = vmax.f32 %v1280, 0.0
      %v1371 = vmax.f32 %v1281, 0.0
      %v1372 = vmax.f32 %v1282, 0.0
      %v1373 = vmax.f32 %v1283, 0.0
      %v1374 = vmax.f32 %v1284, 0.0
      %v1375 = vmax.f32 %v1285, 0.0
      %v1376 = vmax.f32 %v1286, 0.0
      %v1377 = vmax.f32 %v1287, 0.0
      %v1378 = vmax.f32 %v1288, 0.0
      %v1379 = vmax.f32 %v1289, 0.0
      %v1380 = vmax.f32 %v1290, 0.0
      %v1381 = vmax.f32 %v1291, 0.0
      %v1382 = vmax.f32 %v1292, 0.0
      %v1383 = vmax.f32 %v1293, 0.0
      %v1384 = vmax.f32 %v1294, 0.0
      %v1385 = vmax.f32 %v1295, 0.0
      %v1386 = vmax.f32 %v1296, 0.0
      %v1387 = vmax.f32 %v1297, 0.0
      %v1388 = vmax.f32 %v1298, 0.0
      %v1389 = vmax.f32 %v1299, 0.0
      %v1390 = vmax.f32 %v1300, 0.0
      %v1391 = vmax.f32 %v1301, 0.0
      %v1392 = vmax.f32 %v1302, 0.0
      %v1393 = vmax.f32 %v1303, 0.0
      %v1394 = vmax.f32 %v1304, 0.0
      %v1395 = vmax.f32 %v1305, 0.0
      %v1396 = vmax.f32 %v1306, 0.0
      %v1397 = vmax.f32 %v1307, 0.0
      %v1398 = vmax.f32 %v1308, 0.0
      %v1399 = vmax.f32 %v1309, 0.0
      %v1400 = vmax.f32 %v1310, 0.0
      %v1401 = vmax.f32 %v1311, 0.0
      %v1402 = vmax.f32 %v1312, 0.0
      %v1403 = vmax.f32 %v1313, 0.0
      %v1404 = vmax.f32 %v1314, 0.0
      %v1405 = vmax.f32 %v1315, 0.0
      %v1406 = vmax.f32 %v1316, 0.0
      %v1407 = vmax.f32 %v1317, 0.0
      %v1408 = vmax.f32 %v1318, 0.0
      %v1409 = vmax.f32 %v1319, 0.0
      %v1410 = vmax.f32 %v1320, 0.0
      %v1411 = vmax.f32 %v1321, 0.0
      %v1412 = vmax.f32 %v1322, 0.0
      %v1413 = vmax.f32 %v1323, 0.0
      %v1414 = vmax.f32 %v1324, 0.0
      %v1415 = vmax.f32 %v1325, 0.0
      %v1416 = vmax.f32 %v1326, 0.0
      %v1417 = vmax.f32 %v1327, 0.0
      %v1418 = vmax.f32 %v1328, 0.0
      %v1419 = vmax.f32 %v1329, 0.0
      %v1420 = vmax.f32 %v1330, 0.0
      %v1421 = vmax.f32 %v1331, 0.0
      %v1422 = vmax.f32 %v1332, 0.0
      %v1423 = vmax.f32 %v1333, 0.0
      %v1424 = vmax.f32 %v1334, 0.0
      %v1425 = vmax.f32 %v1335, 0.0
      %v1426 = vmax.f32 %v1336, 0.0
      %v1427 = vmax.f32 %v1337, 0.0
      %v1428 = vmax.f32 %v1338, 0.0
      %v1429 = vmax.f32 %v1339, 0.0
      %v1430 = vmax.f32 %v1340, 0.0
      %v1431 = vmax.f32 %v1341, 0.0
      %v1432 = vmax.f32 %v1342, 0.0
      %v1433 = vmax.f32 %v1343, 0.0
      %v1434 = vmax.f32 %v1344, 0.0
      %v1435 = vmax.f32 %v1345, 0.0
      %v1436 = vmax.f32 %v1346, 0.0
      %v1437 = vmax.f32 %v1347, 0.0
      %v1438 = vmax.f32 %v1348, 0.0
      %v1439 = vmax.f32 %v1349, 0.0
      %v1440 = vmax.f32 %v1350, 0.0
      %v1441 = vmax.f32 %v1351, 0.0
      %v1442 = vmax.f32 %v1352, 0.0
      %v1443 = vmax.f32 %v1353, 0.0
      %v1444 = vmax.f32 %v1354, 0.0
      %v1445 = vld [vmem:[%s4] sm:$0xff]
      %v1446 = vld [vmem:[%s4 + $0x8] sm:$0xff]
      %v1447 = vld [vmem:[%s4 + $0x10] sm:$0xff]
      %v1448 = vld [vmem:[%s4 + $0x18] sm:$0xff]
      %v1449 = vld [vmem:[%s4 + $0x20] sm:$0xff]
      %v1450 = vld [vmem:[%s4 + $0x28] sm:$0xff]
      %v1451 = vld [vmem:[%s4 + $0x30] sm:$0xff]
      %v1452 = vld [vmem:[%s4 + $0x38] sm:$0xff]
      %v1453 = vld [vmem:[%s5] sm:$0x1]
      %v1455 = vlaneseq
      %v1456 = vshrl.u32 %v1455, 7
      %v1457 = vsub.s32 0, %v1456
      %v1458 = vrot.slane %v1453, %v1457
      %v1461 = vsel %vm375, %v1355, 0
      %v1464 = vsel %vm375, %v1356, 0
      %v1467 = vsel %vm375, %v1357, 0
      %v1470 = vsel %vm375, %v1358, 0
      %v1473 = vsel %vm375, %v1359, 0
      %v1476 = vsel %vm375, %v1360, 0
      %v1479 = vsel %vm375, %v1361, 0
      %v1482 = vsel %vm375, %v1362, 0
      %v1485 = vsel %vm375, %v1363, 0
      %v1488 = vsel %vm375, %v1364, 0
      %v1491 = vsel %vm375, %v1365, 0
      %v1494 = vsel %vm375, %v1366, 0
      %v1497 = vsel %vm375, %v1367, 0
      %v1500 = vsel %vm375, %v1368, 0
      %v1503 = vsel %vm375, %v1369, 0
      %v1506 = vsel %vm375, %v1370, 0
      %v1509 = vsel %vm375, %v1371, 0
      %v1512 = vsel %vm375, %v1372, 0
      %v1515 = vsel %vm375, %v1373, 0
      %v1518 = vsel %vm375, %v1374, 0
      %v1521 = vsel %vm375, %v1375, 0
      %v1524 = vsel %vm375, %v1376, 0
      %v1527 = vsel %vm375, %v1377, 0
      %v1530 = vsel %vm375, %v1378, 0
      %v1533 = vsel %vm375, %v1379, 0
      %v1536 = vsel %vm375, %v1380, 0
      %v1539 = vsel %vm375, %v1381, 0
      %v1542 = vsel %vm375, %v1382, 0
      %v1545 = vsel %vm375, %v1383, 0
      %v1548 = vsel %vm375, %v1384, 0
      %v1551 = vsel %vm375, %v1385, 0
      %v1554 = vsel %vm375, %v1386, 0
      %v1557 = vsel %vm375, %v1387, 0
      %v1560 = vsel %vm375, %v1388, 0
      %v1563 = vsel %vm375, %v1389, 0
      %v1566 = vsel %vm375, %v1390, 0
      %v1569 = vsel %vm375, %v1391, 0
      %v1572 = vsel %vm375, %v1392, 0
      %v1575 = vsel %vm375, %v1393, 0
      %v1578 = vsel %vm375, %v1394, 0
      %v1581 = vsel %vm375, %v1395, 0
      %v1584 = vsel %vm375, %v1396, 0
      %v1587 = vsel %vm375, %v1397, 0
      %v1590 = vsel %vm375, %v1398, 0
      %v1593 = vsel %vm375, %v1399, 0
      %v1596 = vsel %vm375, %v1400, 0
      %v1599 = vsel %vm375, %v1401, 0
      %v1602 = vsel %vm375, %v1402, 0
      %v1605 = vsel %vm375, %v1403, 0
      %v1608 = vsel %vm375, %v1404, 0
      %v1611 = vsel %vm375, %v1405, 0
      %v1614 = vsel %vm375, %v1406, 0
      %v1617 = vsel %vm375, %v1407, 0
      %v1620 = vsel %vm375, %v1408, 0
      %v1623 = vsel %vm375, %v1409, 0
      %v1626 = vsel %vm375, %v1410, 0
      %v1629 = vsel %vm375, %v1411, 0
      %v1632 = vsel %vm375, %v1412, 0
      %v1635 = vsel %vm375, %v1413, 0
      %v1638 = vsel %vm375, %v1414, 0
      %v1641 = vsel %vm375, %v1415, 0
      %v1644 = vsel %vm375, %v1416, 0
      %v1647 = vsel %vm375, %v1417, 0
      %v1650 = vsel %vm375, %v1418, 0
      %v1653 = vsel %vm375, %v1419, 0
      %v1656 = vsel %vm375, %v1420, 0
      %v1659 = vsel %vm375, %v1421, 0
      %v1662 = vsel %vm375, %v1422, 0
      %v1665 = vsel %vm375, %v1423, 0
      %v1668 = vsel %vm375, %v1424, 0
      %v1671 = vsel %vm375, %v1425, 0
      %v1674 = vsel %vm375, %v1426, 0
      %v1677 = vsel %vm375, %v1427, 0
      %v1680 = vsel %vm375, %v1428, 0
      %v1683 = vsel %vm375, %v1429, 0
      %v1686 = vsel %vm375, %v1430, 0
      %v1689 = vsel %vm375, %v1431, 0
      %v1692 = vsel %vm375, %v1432, 0
      %v1695 = vsel %vm375, %v1433, 0
      %v1698 = vsel %vm375, %v1434, 0
      %v1701 = vsel %vm375, %v1435, 0
      %v1704 = vsel %vm375, %v1436, 0
      %v1707 = vsel %vm375, %v1437, 0
      %v1710 = vsel %vm375, %v1438, 0
      %v1713 = vsel %vm375, %v1439, 0
      %v1716 = vsel %vm375, %v1440, 0
      %v1719 = vsel %vm375, %v1441, 0
      %v1722 = vsel %vm375, %v1442, 0
      %v1725 = vsel %vm375, %v1443, 0
      %v1728 = vsel %vm375, %v1444, 0
      %1730 = vmatprep.subr.mxu0 0.0
      %1731 = vmatpush1.msra.mxu0 0.0
      %1732 = vmatprep.subr.mxu0 0.0
      %1733 = vmatpush1.msra.mxu0 0.0
      %1734 = vmatprep.subr.mxu0 0.0
      %1735 = vmatpush1.msra.mxu0 0.0
      %1736 = vmatprep.subr.mxu0 0.0
      %1737 = vmatpush1.msra.mxu0 0.0
      %1738 = vmatprep.subr.mxu0 0.0
      %1739 = vmatpush1.msra.mxu0 0.0
      %1740 = vmatprep.subr.mxu0 0.0
      %1741 = vmatpush1.msra.mxu0 0.0
      %1742 = vmatprep.subr.mxu0 0.0
      %1743 = vmatpush1.msra.mxu0 0.0
      %1744 = vmatprep.subr.mxu0 0.0
      %1745 = vmatpush1.msra.mxu0 0.0
      %1746 = vmatprep.subr.mxu0 0.0
      %1747 = vmatpush1.msra.mxu0 %v1452
      %1748 = vmatprep.subr.mxu0 0.0
      %1749 = vmatpush1.msra.mxu0 %v1451
      %1750 = vmatprep.subr.mxu0 0.0
      %1751 = vmatpush1.msra.mxu0 %v1450
      %1752 = vmatprep.subr.mxu0 0.0
      %1753 = vmatpush1.msra.mxu0 %v1449
      %1754 = vmatprep.subr.mxu0 0.0
      %1755 = vmatpush1.msra.mxu0 %v1448
      %1756 = vmatprep.subr.mxu0 0.0
      %1757 = vmatpush1.msra.mxu0 %v1447
      %1758 = vmatprep.subr.mxu0 0.0
      %1759 = vmatpush1.msra.mxu0 %v1446
      %1760 = vmatprep.subr.mxu0 0.0
      %1761 = vmatpush1.msra.mxu0 %v1445
      %1762 = vmatprep.subr.mxu0 0.0
      %1763 = vmatpush2.msra.mxu0 0.0
      %1764 = vmatprep.subr.mxu0 0.0
      %1765 = vmatpush2.msra.mxu0 0.0
      %1766 = vmatprep.subr.mxu0 0.0
      %1767 = vmatpush2.msra.mxu0 0.0
      %1768 = vmatprep.subr.mxu0 0.0
      %1769 = vmatpush2.msra.mxu0 0.0
      %1770 = vmatprep.subr.mxu0 0.0
      %1771 = vmatpush2.msra.mxu0 0.0
      %1772 = vmatprep.subr.mxu0 0.0
      %1773 = vmatpush2.msra.mxu0 0.0
      %1774 = vmatprep.subr.mxu0 0.0
      %1775 = vmatpush2.msra.mxu0 0.0
      %1776 = vmatprep.subr.mxu0 0.0
      %1777 = vmatpush2.msra.mxu0 0.0
      %1778 = vmatprep.subr.mxu0 0.0
      %1779 = vmatpush2.msra.mxu0 0.0
      %1780 = vmatprep.subr.mxu0 0.0
      %1781 = vmatpush2.msra.mxu0 0.0
      %1782 = vmatprep.subr.mxu0 0.0
      %1783 = vmatpush2.msra.mxu0 0.0
      %1784 = vmatprep.subr.mxu0 0.0
      %1785 = vmatpush2.msra.mxu0 0.0
      %1786 = vmatprep.subr.mxu0 0.0
      %1787 = vmatpush2.msra.mxu0 0.0
      %1788 = vmatprep.subr.mxu0 0.0
      %1789 = vmatpush2.msra.mxu0 0.0
      %1790 = vmatprep.subr.mxu0 0.0
      %1791 = vmatpush2.msra.mxu0 0.0
      %1792 = vmatprep.subr.mxu0 0.0
      %1793 = vmatpush2.msra.mxu0 0.0
      %1794 = vmatprep.mubr.f32.mxu0 0.0
      %1795 = vmatmul.mubr.f32.gmra.mxu0 %v1461
      %v1796 = vpop.f32.mrf.mxu0
      %v1797 = vadd.f32 %v1458, %v1796
      %v1798 = vpop.f32.mrf.mxu0
      %1799 = vmatprep.mubr.f32.mxu0 0.0
      %1800 = vmatmul.mubr.f32.gmra.mxu0 %v1464
      %v1801 = vpop.f32.mrf.mxu0
      %v1802 = vadd.f32 %v1458, %v1801
      %v1803 = vpop.f32.mrf.mxu0
      %1804 = vmatprep.mubr.f32.mxu0 0.0
      %1805 = vmatmul.mubr.f32.gmra.mxu0 %v1467
      %v1806 = vpop.f32.mrf.mxu0
      %v1807 = vadd.f32 %v1458, %v1806
      %v1808 = vpop.f32.mrf.mxu0
      %1809 = vmatprep.mubr.f32.mxu0 0.0
      %1810 = vmatmul.mubr.f32.gmra.mxu0 %v1470
      %v1811 = vpop.f32.mrf.mxu0
      %v1812 = vadd.f32 %v1458, %v1811
      %v1813 = vpop.f32.mrf.mxu0
      %1814 = vmatprep.mubr.f32.mxu0 0.0
      %1815 = vmatmul.mubr.f32.gmra.mxu0 %v1473
      %v1816 = vpop.f32.mrf.mxu0
      %v1817 = vadd.f32 %v1458, %v1816
      %v1818 = vpop.f32.mrf.mxu0
      %1819 = vmatprep.mubr.f32.mxu0 0.0
      %1820 = vmatmul.mubr.f32.gmra.mxu0 %v1476
      %v1821 = vpop.f32.mrf.mxu0
      %v1822 = vadd.f32 %v1458, %v1821
      %v1823 = vpop.f32.mrf.mxu0
      %1824 = vmatprep.mubr.f32.mxu0 0.0
      %1825 = vmatmul.mubr.f32.gmra.mxu0 %v1479
      %v1826 = vpop.f32.mrf.mxu0
      %v1827 = vadd.f32 %v1458, %v1826
      %v1828 = vpop.f32.mrf.mxu0
      %1829 = vmatprep.mubr.f32.mxu0 0.0
      %1830 = vmatmul.mubr.f32.gmra.mxu0 %v1482
      %v1831 = vpop.f32.mrf.mxu0
      %v1832 = vadd.f32 %v1458, %v1831
      %v1833 = vpop.f32.mrf.mxu0
      %1834 = vmatprep.mubr.f32.mxu0 0.0
      %1835 = vmatmul.mubr.f32.gmra.mxu0 %v1485
      %v1836 = vpop.f32.mrf.mxu0
      %v1837 = vadd.f32 %v1458, %v1836
      %v1838 = vpop.f32.mrf.mxu0
      %1839 = vmatprep.mubr.f32.mxu0 0.0
      %1840 = vmatmul.mubr.f32.gmra.mxu0 %v1488
      %v1841 = vpop.f32.mrf.mxu0
      %v1842 = vadd.f32 %v1458, %v1841
      %v1843 = vpop.f32.mrf.mxu0
      %1844 = vmatprep.mubr.f32.mxu0 0.0
      %1845 = vmatmul.mubr.f32.gmra.mxu0 %v1491
      %v1846 = vpop.f32.mrf.mxu0
      %v1847 = vadd.f32 %v1458, %v1846
      %v1848 = vpop.f32.mrf.mxu0
      %1849 = vmatprep.mubr.f32.mxu0 0.0
      %1850 = vmatmul.mubr.f32.gmra.mxu0 %v1494
      %v1851 = vpop.f32.mrf.mxu0
      %v1852 = vadd.f32 %v1458, %v1851
      %v1853 = vpop.f32.mrf.mxu0
      %1854 = vmatprep.mubr.f32.mxu0 0.0
      %1855 = vmatmul.mubr.f32.gmra.mxu0 %v1497
      %v1856 = vpop.f32.mrf.mxu0
      %v1857 = vadd.f32 %v1458, %v1856
      %v1858 = vpop.f32.mrf.mxu0
      %1859 = vmatprep.mubr.f32.mxu0 0.0
      %1860 = vmatmul.mubr.f32.gmra.mxu0 %v1500
      %v1861 = vpop.f32.mrf.mxu0
      %v1862 = vadd.f32 %v1458, %v1861
      %v1863 = vpop.f32.mrf.mxu0
      %1864 = vmatprep.mubr.f32.mxu0 0.0
      %1865 = vmatmul.mubr.f32.gmra.mxu0 %v1503
      %v1866 = vpop.f32.mrf.mxu0
      %v1867 = vadd.f32 %v1458, %v1866
      %v1868 = vpop.f32.mrf.mxu0
      %1869 = vmatprep.mubr.f32.mxu0 0.0
      %1870 = vmatmul.mubr.f32.gmra.mxu0 %v1506
      %v1871 = vpop.f32.mrf.mxu0
      %v1872 = vadd.f32 %v1458, %v1871
      %v1873 = vpop.f32.mrf.mxu0
      %1874 = vmatprep.mubr.f32.mxu0 0.0
      %1875 = vmatmul.mubr.f32.gmra.mxu0 %v1509
      %v1876 = vpop.f32.mrf.mxu0
      %v1877 = vadd.f32 %v1458, %v1876
      %v1878 = vpop.f32.mrf.mxu0
      %1879 = vmatprep.mubr.f32.mxu0 0.0
      %1880 = vmatmul.mubr.f32.gmra.mxu0 %v1512
      %v1881 = vpop.f32.mrf.mxu0
      %v1882 = vadd.f32 %v1458, %v1881
      %v1883 = vpop.f32.mrf.mxu0
      %1884 = vmatprep.mubr.f32.mxu0 0.0
      %1885 = vmatmul.mubr.f32.gmra.mxu0 %v1515
      %v1886 = vpop.f32.mrf.mxu0
      %v1887 = vadd.f32 %v1458, %v1886
      %v1888 = vpop.f32.mrf.mxu0
      %1889 = vmatprep.mubr.f32.mxu0 0.0
      %1890 = vmatmul.mubr.f32.gmra.mxu0 %v1518
      %v1891 = vpop.f32.mrf.mxu0
      %v1892 = vadd.f32 %v1458, %v1891
      %v1893 = vpop.f32.mrf.mxu0
      %1894 = vmatprep.mubr.f32.mxu0 0.0
      %1895 = vmatmul.mubr.f32.gmra.mxu0 %v1521
      %v1896 = vpop.f32.mrf.mxu0
      %v1897 = vadd.f32 %v1458, %v1896
      %v1898 = vpop.f32.mrf.mxu0
      %1899 = vmatprep.mubr.f32.mxu0 0.0
      %1900 = vmatmul.mubr.f32.gmra.mxu0 %v1524
      %v1901 = vpop.f32.mrf.mxu0
      %v1902 = vadd.f32 %v1458, %v1901
      %v1903 = vpop.f32.mrf.mxu0
      %1904 = vmatprep.mubr.f32.mxu0 0.0
      %1905 = vmatmul.mubr.f32.gmra.mxu0 %v1527
      %v1906 = vpop.f32.mrf.mxu0
      %v1907 = vadd.f32 %v1458, %v1906
      %v1908 = vpop.f32.mrf.mxu0
      %1909 = vmatprep.mubr.f32.mxu0 0.0
      %1910 = vmatmul.mubr.f32.gmra.mxu0 %v1530
      %v1911 = vpop.f32.mrf.mxu0
      %v1912 = vadd.f32 %v1458, %v1911
      %v1913 = vpop.f32.mrf.mxu0
      %1914 = vmatprep.mubr.f32.mxu0 0.0
      %1915 = vmatmul.mubr.f32.gmra.mxu0 %v1533
      %v1916 = vpop.f32.mrf.mxu0
      %v1917 = vadd.f32 %v1458, %v1916
      %v1918 = vpop.f32.mrf.mxu0
      %1919 = vmatprep.mubr.f32.mxu0 0.0
      %1920 = vmatmul.mubr.f32.gmra.mxu0 %v1536
      %v1921 = vpop.f32.mrf.mxu0
      %v1922 = vadd.f32 %v1458, %v1921
      %v1923 = vpop.f32.mrf.mxu0
      %1924 = vmatprep.mubr.f32.mxu0 0.0
      %1925 = vmatmul.mubr.f32.gmra.mxu0 %v1539
      %v1926 = vpop.f32.mrf.mxu0
      %v1927 = vadd.f32 %v1458, %v1926
      %v1928 = vpop.f32.mrf.mxu0
      %1929 = vmatprep.mubr.f32.mxu0 0.0
      %1930 = vmatmul.mubr.f32.gmra.mxu0 %v1542
      %v1931 = vpop.f32.mrf.mxu0
      %v1932 = vadd.f32 %v1458, %v1931
      %v1933 = vpop.f32.mrf.mxu0
      %1934 = vmatprep.mubr.f32.mxu0 0.0
      %1935 = vmatmul.mubr.f32.gmra.mxu0 %v1545
      %v1936 = vpop.f32.mrf.mxu0
      %v1937 = vadd.f32 %v1458, %v1936
      %v1938 = vpop.f32.mrf.mxu0
      %1939 = vmatprep.mubr.f32.mxu0 0.0
      %1940 = vmatmul.mubr.f32.gmra.mxu0 %v1548
      %v1941 = vpop.f32.mrf.mxu0
      %v1942 = vadd.f32 %v1458, %v1941
      %v1943 = vpop.f32.mrf.mxu0
      %1944 = vmatprep.mubr.f32.mxu0 0.0
      %1945 = vmatmul.mubr.f32.gmra.mxu0 %v1551
      %v1946 = vpop.f32.mrf.mxu0
      %v1947 = vadd.f32 %v1458, %v1946
      %v1948 = vpop.f32.mrf.mxu0
      %1949 = vmatprep.mubr.f32.mxu0 0.0
      %1950 = vmatmul.mubr.f32.gmra.mxu0 %v1554
      %v1951 = vpop.f32.mrf.mxu0
      %v1952 = vadd.f32 %v1458, %v1951
      %v1953 = vpop.f32.mrf.mxu0
      %1954 = vmatprep.mubr.f32.mxu0 0.0
      %1955 = vmatmul.mubr.f32.gmra.mxu0 %v1557
      %v1956 = vpop.f32.mrf.mxu0
      %v1957 = vadd.f32 %v1458, %v1956
      %v1958 = vpop.f32.mrf.mxu0
      %1959 = vmatprep.mubr.f32.mxu0 0.0
      %1960 = vmatmul.mubr.f32.gmra.mxu0 %v1560
      %v1961 = vpop.f32.mrf.mxu0
      %v1962 = vadd.f32 %v1458, %v1961
      %v1963 = vpop.f32.mrf.mxu0
      %1964 = vmatprep.mubr.f32.mxu0 0.0
      %1965 = vmatmul.mubr.f32.gmra.mxu0 %v1563
      %v1966 = vpop.f32.mrf.mxu0
      %v1967 = vadd.f32 %v1458, %v1966
      %v1968 = vpop.f32.mrf.mxu0
      %1969 = vmatprep.mubr.f32.mxu0 0.0
      %1970 = vmatmul.mubr.f32.gmra.mxu0 %v1566
      %v1971 = vpop.f32.mrf.mxu0
      %v1972 = vadd.f32 %v1458, %v1971
      %v1973 = vpop.f32.mrf.mxu0
      %1974 = vmatprep.mubr.f32.mxu0 0.0
      %1975 = vmatmul.mubr.f32.gmra.mxu0 %v1569
      %v1976 = vpop.f32.mrf.mxu0
      %v1977 = vadd.f32 %v1458, %v1976
      %v1978 = vpop.f32.mrf.mxu0
      %1979 = vmatprep.mubr.f32.mxu0 0.0
      %1980 = vmatmul.mubr.f32.gmra.mxu0 %v1572
      %v1981 = vpop.f32.mrf.mxu0
      %v1982 = vadd.f32 %v1458, %v1981
      %v1983 = vpop.f32.mrf.mxu0
      %1984 = vmatprep.mubr.f32.mxu0 0.0
      %1985 = vmatmul.mubr.f32.gmra.mxu0 %v1575
      %v1986 = vpop.f32.mrf.mxu0
      %v1987 = vadd.f32 %v1458, %v1986
      %v1988 = vpop.f32.mrf.mxu0
      %1989 = vmatprep.mubr.f32.mxu0 0.0
      %1990 = vmatmul.mubr.f32.gmra.mxu0 %v1578
      %v1991 = vpop.f32.mrf.mxu0
      %v1992 = vadd.f32 %v1458, %v1991
      %v1993 = vpop.f32.mrf.mxu0
      %1994 = vmatprep.mubr.f32.mxu0 0.0
      %1995 = vmatmul.mubr.f32.gmra.mxu0 %v1581
      %v1996 = vpop.f32.mrf.mxu0
      %v1997 = vadd.f32 %v1458, %v1996
      %v1998 = vpop.f32.mrf.mxu0
      %1999 = vmatprep.mubr.f32.mxu0 0.0
      %2000 = vmatmul.mubr.f32.gmra.mxu0 %v1584
      %v2001 = vpop.f32.mrf.mxu0
      %v2002 = vadd.f32 %v1458, %v2001
      %v2003 = vpop.f32.mrf.mxu0
      %2004 = vmatprep.mubr.f32.mxu0 0.0
      %2005 = vmatmul.mubr.f32.gmra.mxu0 %v1587
      %v2006 = vpop.f32.mrf.mxu0
      %v2007 = vadd.f32 %v1458, %v2006
      %v2008 = vpop.f32.mrf.mxu0
      %2009 = vmatprep.mubr.f32.mxu0 0.0
      %2010 = vmatmul.mubr.f32.gmra.mxu0 %v1590
      %v2011 = vpop.f32.mrf.mxu0
      %v2012 = vadd.f32 %v1458, %v2011
      %v2013 = vpop.f32.mrf.mxu0
      %2014 = vmatprep.mubr.f32.mxu0 0.0
      %2015 = vmatmul.mubr.f32.gmra.mxu0 %v1593
      %v2016 = vpop.f32.mrf.mxu0
      %v2017 = vadd.f32 %v1458, %v2016
      %v2018 = vpop.f32.mrf.mxu0
      %2019 = vmatprep.mubr.f32.mxu0 0.0
      %2020 = vmatmul.mubr.f32.gmra.mxu0 %v1596
      %v2021 = vpop.f32.mrf.mxu0
      %v2022 = vadd.f32 %v1458, %v2021
      %v2023 = vpop.f32.mrf.mxu0
      %2024 = vmatprep.mubr.f32.mxu0 0.0
      %2025 = vmatmul.mubr.f32.gmra.mxu0 %v1599
      %v2026 = vpop.f32.mrf.mxu0
      %v2027 = vadd.f32 %v1458, %v2026
      %v2028 = vpop.f32.mrf.mxu0
      %2029 = vmatprep.mubr.f32.mxu0 0.0
      %2030 = vmatmul.mubr.f32.gmra.mxu0 %v1602
      %v2031 = vpop.f32.mrf.mxu0
      %v2032 = vadd.f32 %v1458, %v2031
      %v2033 = vpop.f32.mrf.mxu0
      %2034 = vmatprep.mubr.f32.mxu0 0.0
      %2035 = vmatmul.mubr.f32.gmra.mxu0 %v1605
      %v2036 = vpop.f32.mrf.mxu0
      %v2037 = vadd.f32 %v1458, %v2036
      %v2038 = vpop.f32.mrf.mxu0
      %2039 = vmatprep.mubr.f32.mxu0 0.0
      %2040 = vmatmul.mubr.f32.gmra.mxu0 %v1608
      %v2041 = vpop.f32.mrf.mxu0
      %v2042 = vadd.f32 %v1458, %v2041
      %v2043 = vpop.f32.mrf.mxu0
      %2044 = vmatprep.mubr.f32.mxu0 0.0
      %2045 = vmatmul.mubr.f32.gmra.mxu0 %v1611
      %v2046 = vpop.f32.mrf.mxu0
      %v2047 = vadd.f32 %v1458, %v2046
      %v2048 = vpop.f32.mrf.mxu0
      %2049 = vmatprep.mubr.f32.mxu0 0.0
      %2050 = vmatmul.mubr.f32.gmra.mxu0 %v1614
      %v2051 = vpop.f32.mrf.mxu0
      %v2052 = vadd.f32 %v1458, %v2051
      %v2053 = vpop.f32.mrf.mxu0
      %2054 = vmatprep.mubr.f32.mxu0 0.0
      %2055 = vmatmul.mubr.f32.gmra.mxu0 %v1617
      %v2056 = vpop.f32.mrf.mxu0
      %v2057 = vadd.f32 %v1458, %v2056
      %v2058 = vpop.f32.mrf.mxu0
      %2059 = vmatprep.mubr.f32.mxu0 0.0
      %2060 = vmatmul.mubr.f32.gmra.mxu0 %v1620
      %v2061 = vpop.f32.mrf.mxu0
      %v2062 = vadd.f32 %v1458, %v2061
      %v2063 = vpop.f32.mrf.mxu0
      %2064 = vmatprep.mubr.f32.mxu0 0.0
      %2065 = vmatmul.mubr.f32.gmra.mxu0 %v1623
      %v2066 = vpop.f32.mrf.mxu0
      %v2067 = vadd.f32 %v1458, %v2066
      %v2068 = vpop.f32.mrf.mxu0
      %2069 = vmatprep.mubr.f32.mxu0 0.0
      %2070 = vmatmul.mubr.f32.gmra.mxu0 %v1626
      %v2071 = vpop.f32.mrf.mxu0
      %v2072 = vadd.f32 %v1458, %v2071
      %v2073 = vpop.f32.mrf.mxu0
      %2074 = vmatprep.mubr.f32.mxu0 0.0
      %2075 = vmatmul.mubr.f32.gmra.mxu0 %v1629
      %v2076 = vpop.f32.mrf.mxu0
      %v2077 = vadd.f32 %v1458, %v2076
      %v2078 = vpop.f32.mrf.mxu0
      %2079 = vmatprep.mubr.f32.mxu0 0.0
      %2080 = vmatmul.mubr.f32.gmra.mxu0 %v1632
      %v2081 = vpop.f32.mrf.mxu0
      %v2082 = vadd.f32 %v1458, %v2081
      %v2083 = vpop.f32.mrf.mxu0
      %2084 = vmatprep.mubr.f32.mxu0 0.0
      %2085 = vmatmul.mubr.f32.gmra.mxu0 %v1635
      %v2086 = vpop.f32.mrf.mxu0
      %v2087 = vadd.f32 %v1458, %v2086
      %v2088 = vpop.f32.mrf.mxu0
      %2089 = vmatprep.mubr.f32.mxu0 0.0
      %2090 = vmatmul.mubr.f32.gmra.mxu0 %v1638
      %v2091 = vpop.f32.mrf.mxu0
      %v2092 = vadd.f32 %v1458, %v2091
      %v2093 = vpop.f32.mrf.mxu0
      %2094 = vmatprep.mubr.f32.mxu0 0.0
      %2095 = vmatmul.mubr.f32.gmra.mxu0 %v1641
      %v2096 = vpop.f32.mrf.mxu0
      %v2097 = vadd.f32 %v1458, %v2096
      %v2098 = vpop.f32.mrf.mxu0
      %2099 = vmatprep.mubr.f32.mxu0 0.0
      %2100 = vmatmul.mubr.f32.gmra.mxu0 %v1644
      %v2101 = vpop.f32.mrf.mxu0
      %v2102 = vadd.f32 %v1458, %v2101
      %v2103 = vpop.f32.mrf.mxu0
      %2104 = vmatprep.mubr.f32.mxu0 0.0
      %2105 = vmatmul.mubr.f32.gmra.mxu0 %v1647
      %v2106 = vpop.f32.mrf.mxu0
      %v2107 = vadd.f32 %v1458, %v2106
      %v2108 = vpop.f32.mrf.mxu0
      %2109 = vmatprep.mubr.f32.mxu0 0.0
      %2110 = vmatmul.mubr.f32.gmra.mxu0 %v1650
      %v2111 = vpop.f32.mrf.mxu0
      %v2112 = vadd.f32 %v1458, %v2111
      %v2113 = vpop.f32.mrf.mxu0
      %2114 = vmatprep.mubr.f32.mxu0 0.0
      %2115 = vmatmul.mubr.f32.gmra.mxu0 %v1653
      %v2116 = vpop.f32.mrf.mxu0
      %v2117 = vadd.f32 %v1458, %v2116
      %v2118 = vpop.f32.mrf.mxu0
      %2119 = vmatprep.mubr.f32.mxu0 0.0
      %2120 = vmatmul.mubr.f32.gmra.mxu0 %v1656
      %v2121 = vpop.f32.mrf.mxu0
      %v2122 = vadd.f32 %v1458, %v2121
      %v2123 = vpop.f32.mrf.mxu0
      %2124 = vmatprep.mubr.f32.mxu0 0.0
      %2125 = vmatmul.mubr.f32.gmra.mxu0 %v1659
      %v2126 = vpop.f32.mrf.mxu0
      %v2127 = vadd.f32 %v1458, %v2126
      %v2128 = vpop.f32.mrf.mxu0
      %2129 = vmatprep.mubr.f32.mxu0 0.0
      %2130 = vmatmul.mubr.f32.gmra.mxu0 %v1662
      %v2131 = vpop.f32.mrf.mxu0
      %v2132 = vadd.f32 %v1458, %v2131
      %v2133 = vpop.f32.mrf.mxu0
      %2134 = vmatprep.mubr.f32.mxu0 0.0
      %2135 = vmatmul.mubr.f32.gmra.mxu0 %v1665
      %v2136 = vpop.f32.mrf.mxu0
      %v2137 = vadd.f32 %v1458, %v2136
      %v2138 = vpop.f32.mrf.mxu0
      %2139 = vmatprep.mubr.f32.mxu0 0.0
      %2140 = vmatmul.mubr.f32.gmra.mxu0 %v1668
      %v2141 = vpop.f32.mrf.mxu0
      %v2142 = vadd.f32 %v1458, %v2141
      %v2143 = vpop.f32.mrf.mxu0
      %2144 = vmatprep.mubr.f32.mxu0 0.0
      %2145 = vmatmul.mubr.f32.gmra.mxu0 %v1671
      %v2146 = vpop.f32.mrf.mxu0
      %v2147 = vadd.f32 %v1458, %v2146
      %v2148 = vpop.f32.mrf.mxu0
      %2149 = vmatprep.mubr.f32.mxu0 0.0
      %2150 = vmatmul.mubr.f32.gmra.mxu0 %v1674
      %v2151 = vpop.f32.mrf.mxu0
      %v2152 = vadd.f32 %v1458, %v2151
      %v2153 = vpop.f32.mrf.mxu0
      %2154 = vmatprep.mubr.f32.mxu0 0.0
      %2155 = vmatmul.mubr.f32.gmra.mxu0 %v1677
      %v2156 = vpop.f32.mrf.mxu0
      %v2157 = vadd.f32 %v1458, %v2156
      %v2158 = vpop.f32.mrf.mxu0
      %2159 = vmatprep.mubr.f32.mxu0 0.0
      %2160 = vmatmul.mubr.f32.gmra.mxu0 %v1680
      %v2161 = vpop.f32.mrf.mxu0
      %v2162 = vadd.f32 %v1458, %v2161
      %v2163 = vpop.f32.mrf.mxu0
      %2164 = vmatprep.mubr.f32.mxu0 0.0
      %2165 = vmatmul.mubr.f32.gmra.mxu0 %v1683
      %v2166 = vpop.f32.mrf.mxu0
      %v2167 = vadd.f32 %v1458, %v2166
      %v2168 = vpop.f32.mrf.mxu0
      %2169 = vmatprep.mubr.f32.mxu0 0.0
      %2170 = vmatmul.mubr.f32.gmra.mxu0 %v1686
      %v2171 = vpop.f32.mrf.mxu0
      %v2172 = vadd.f32 %v1458, %v2171
      %v2173 = vpop.f32.mrf.mxu0
      %2174 = vmatprep.mubr.f32.mxu0 0.0
      %2175 = vmatmul.mubr.f32.gmra.mxu0 %v1689
      %v2176 = vpop.f32.mrf.mxu0
      %v2177 = vadd.f32 %v1458, %v2176
      %v2178 = vpop.f32.mrf.mxu0
      %2179 = vmatprep.mubr.f32.mxu0 0.0
      %2180 = vmatmul.mubr.f32.gmra.mxu0 %v1692
      %v2181 = vpop.f32.mrf.mxu0
      %v2182 = vadd.f32 %v1458, %v2181
      %v2183 = vpop.f32.mrf.mxu0
      %2184 = vmatprep.mubr.f32.mxu0 0.0
      %2185 = vmatmul.mubr.f32.gmra.mxu0 %v1695
      %v2186 = vpop.f32.mrf.mxu0
      %v2187 = vadd.f32 %v1458, %v2186
      %v2188 = vpop.f32.mrf.mxu0
      %2189 = vmatprep.mubr.f32.mxu0 0.0
      %2190 = vmatmul.mubr.f32.gmra.mxu0 %v1698
      %v2191 = vpop.f32.mrf.mxu0
      %v2192 = vadd.f32 %v1458, %v2191
      %v2193 = vpop.f32.mrf.mxu0
      %2194 = vmatprep.mubr.f32.mxu0 0.0
      %2195 = vmatmul.mubr.f32.gmra.mxu0 %v1701
      %v2196 = vpop.f32.mrf.mxu0
      %v2197 = vadd.f32 %v1458, %v2196
      %v2198 = vpop.f32.mrf.mxu0
      %2199 = vmatprep.mubr.f32.mxu0 0.0
      %2200 = vmatmul.mubr.f32.gmra.mxu0 %v1704
      %v2201 = vpop.f32.mrf.mxu0
      %v2202 = vadd.f32 %v1458, %v2201
      %v2203 = vpop.f32.mrf.mxu0
      %2204 = vmatprep.mubr.f32.mxu0 0.0
      %2205 = vmatmul.mubr.f32.gmra.mxu0 %v1707
      %v2206 = vpop.f32.mrf.mxu0
      %v2207 = vadd.f32 %v1458, %v2206
      %v2208 = vpop.f32.mrf.mxu0
      %2209 = vmatprep.mubr.f32.mxu0 0.0
      %2210 = vmatmul.mubr.f32.gmra.mxu0 %v1710
      %v2211 = vpop.f32.mrf.mxu0
      %v2212 = vadd.f32 %v1458, %v2211
      %v2213 = vpop.f32.mrf.mxu0
      %2214 = vmatprep.mubr.f32.mxu0 0.0
      %2215 = vmatmul.mubr.f32.gmra.mxu0 %v1713
      %v2216 = vpop.f32.mrf.mxu0
      %v2217 = vadd.f32 %v1458, %v2216
      %v2218 = vpop.f32.mrf.mxu0
      %2219 = vmatprep.mubr.f32.mxu0 0.0
      %2220 = vmatmul.mubr.f32.gmra.mxu0 %v1716
      %v2221 = vpop.f32.mrf.mxu0
      %v2222 = vadd.f32 %v1458, %v2221
      %v2223 = vpop.f32.mrf.mxu0
      %2224 = vmatprep.mubr.f32.mxu0 0.0
      %2225 = vmatmul.mubr.f32.gmra.mxu0 %v1719
      %v2226 = vpop.f32.mrf.mxu0
      %v2227 = vadd.f32 %v1458, %v2226
      %v2228 = vpop.f32.mrf.mxu0
      %2229 = vmatprep.mubr.f32.mxu0 0.0
      %2230 = vmatmul.mubr.f32.gmra.mxu0 %v1722
      %v2231 = vpop.f32.mrf.mxu0
      %v2232 = vadd.f32 %v1458, %v2231
      %v2233 = vpop.f32.mrf.mxu0
      %2234 = vmatprep.mubr.f32.mxu0 0.0
      %2235 = vmatmul.mubr.f32.gmra.mxu0 %v1725
      %v2236 = vpop.f32.mrf.mxu0
      %v2237 = vadd.f32 %v1458, %v2236
      %v2238 = vpop.f32.mrf.mxu0
      %2239 = vmatprep.mubr.f32.mxu0 0.0
      %2240 = vmatmul.mubr.f32.gmra.mxu0 %v1728
      %v2241 = vpop.f32.mrf.mxu0
      %v2242 = vadd.f32 %v1458, %v2241
      %v2243 = vpop.f32.mrf.mxu0
      %2244 = vdwg.mxu0
      %v2245 = vxor.u32 %v1797, 2147483648
      %v2246 = vxor.u32 %v1802, 2147483648
      %v2247 = vxor.u32 %v1807, 2147483648
      %v2248 = vxor.u32 %v1812, 2147483648
      %v2249 = vxor.u32 %v1817, 2147483648
      %v2250 = vxor.u32 %v1822, 2147483648
      %v2251 = vxor.u32 %v1827, 2147483648
      %v2252 = vxor.u32 %v1832, 2147483648
      %v2253 = vxor.u32 %v1837, 2147483648
      %v2254 = vxor.u32 %v1842, 2147483648
      %v2255 = vxor.u32 %v1847, 2147483648
      %v2256 = vxor.u32 %v1852, 2147483648
      %v2257 = vxor.u32 %v1857, 2147483648
      %v2258 = vxor.u32 %v1862, 2147483648
      %v2259 = vxor.u32 %v1867, 2147483648
      %v2260 = vxor.u32 %v1872, 2147483648
      %v2261 = vxor.u32 %v1877, 2147483648
      %v2262 = vxor.u32 %v1882, 2147483648
      %v2263 = vxor.u32 %v1887, 2147483648
      %v2264 = vxor.u32 %v1892, 2147483648
      %v2265 = vxor.u32 %v1897, 2147483648
      %v2266 = vxor.u32 %v1902, 2147483648
      %v2267 = vxor.u32 %v1907, 2147483648
      %v2268 = vxor.u32 %v1912, 2147483648
      %v2269 = vxor.u32 %v1917, 2147483648
      %v2270 = vxor.u32 %v1922, 2147483648
      %v2271 = vxor.u32 %v1927, 2147483648
      %v2272 = vxor.u32 %v1932, 2147483648
      %v2273 = vxor.u32 %v1937, 2147483648
      %v2274 = vxor.u32 %v1942, 2147483648
      %v2275 = vxor.u32 %v1947, 2147483648
      %v2276 = vxor.u32 %v1952, 2147483648
      %v2277 = vxor.u32 %v1957, 2147483648
      %v2278 = vxor.u32 %v1962, 2147483648
      %v2279 = vxor.u32 %v1967, 2147483648
      %v2280 = vxor.u32 %v1972, 2147483648
      %v2281 = vxor.u32 %v1977, 2147483648
      %v2282 = vxor.u32 %v1982, 2147483648
      %v2283 = vxor.u32 %v1987, 2147483648
      %v2284 = vxor.u32 %v1992, 2147483648
      %v2285 = vxor.u32 %v1997, 2147483648
      %v2286 = vxor.u32 %v2002, 2147483648
      %v2287 = vxor.u32 %v2007, 2147483648
      %v2288 = vxor.u32 %v2012, 2147483648
      %v2289 = vxor.u32 %v2017, 2147483648
      %v2290 = vxor.u32 %v2022, 2147483648
      %v2291 = vxor.u32 %v2027, 2147483648
      %v2292 = vxor.u32 %v2032, 2147483648
      %v2293 = vxor.u32 %v2037, 2147483648
      %v2294 = vxor.u32 %v2042, 2147483648
      %v2295 = vxor.u32 %v2047, 2147483648
      %v2296 = vxor.u32 %v2052, 2147483648
      %v2297 = vxor.u32 %v2057, 2147483648
      %v2298 = vxor.u32 %v2062, 2147483648
      %v2299 = vxor.u32 %v2067, 2147483648
      %v2300 = vxor.u32 %v2072, 2147483648
      %v2301 = vxor.u32 %v2077, 2147483648
      %v2302 = vxor.u32 %v2082, 2147483648
      %v2303 = vxor.u32 %v2087, 2147483648
      %v2304 = vxor.u32 %v2092, 2147483648
      %v2305 = vxor.u32 %v2097, 2147483648
      %v2306 = vxor.u32 %v2102, 2147483648
      %v2307 = vxor.u32 %v2107, 2147483648
      %v2308 = vxor.u32 %v2112, 2147483648
      %v2309 = vxor.u32 %v2117, 2147483648
      %v2310 = vxor.u32 %v2122, 2147483648
      %v2311 = vxor.u32 %v2127, 2147483648
      %v2312 = vxor.u32 %v2132, 2147483648
      %v2313 = vxor.u32 %v2137, 2147483648
      %v2314 = vxor.u32 %v2142, 2147483648
      %v2315 = vxor.u32 %v2147, 2147483648
      %v2316 = vxor.u32 %v2152, 2147483648
      %v2317 = vxor.u32 %v2157, 2147483648
      %v2318 = vxor.u32 %v2162, 2147483648
      %v2319 = vxor.u32 %v2167, 2147483648
      %v2320 = vxor.u32 %v2172, 2147483648
      %v2321 = vxor.u32 %v2177, 2147483648
      %v2322 = vxor.u32 %v2182, 2147483648
      %v2323 = vxor.u32 %v2187, 2147483648
      %v2324 = vxor.u32 %v2192, 2147483648
      %v2325 = vxor.u32 %v2197, 2147483648
      %v2326 = vxor.u32 %v2202, 2147483648
      %v2327 = vxor.u32 %v2207, 2147483648
      %v2328 = vxor.u32 %v2212, 2147483648
      %v2329 = vxor.u32 %v2217, 2147483648
      %v2330 = vxor.u32 %v2222, 2147483648
      %v2331 = vxor.u32 %v2227, 2147483648
      %v2332 = vxor.u32 %v2232, 2147483648
      %v2333 = vxor.u32 %v2237, 2147483648
      %v2334 = vxor.u32 %v2242, 2147483648
      %v2335 = vmul.f32 %v2245, 1.442695
      %v2336 = vpow.pop %v2335
      %v2337 = vmul.f32 %v2246, 1.442695
      %v2338 = vpow.pop %v2337
      %v2339 = vmul.f32 %v2247, 1.442695
      %v2340 = vpow.pop %v2339
      %v2341 = vmul.f32 %v2248, 1.442695
      %v2342 = vpow.pop %v2341
      %v2343 = vmul.f32 %v2249, 1.442695
      %v2344 = vpow.pop %v2343
      %v2345 = vmul.f32 %v2250, 1.442695
      %v2346 = vpow.pop %v2345
      %v2347 = vmul.f32 %v2251, 1.442695
      %v2348 = vpow.pop %v2347
      %v2349 = vmul.f32 %v2252, 1.442695
      %v2350 = vpow.pop %v2349
      %v2351 = vmul.f32 %v2253, 1.442695
      %v2352 = vpow.pop %v2351
      %v2353 = vmul.f32 %v2254, 1.442695
      %v2354 = vpow.pop %v2353
      %v2355 = vmul.f32 %v2255, 1.442695
      %v2356 = vpow.pop %v2355
      %v2357 = vmul.f32 %v2256, 1.442695
      %v2358 = vpow.pop %v2357
      %v2359 = vmul.f32 %v2257, 1.442695
      %v2360 = vpow.pop %v2359
      %v2361 = vmul.f32 %v2258, 1.442695
      %v2362 = vpow.pop %v2361
      %v2363 = vmul.f32 %v2259, 1.442695
      %v2364 = vpow.pop %v2363
      %v2365 = vmul.f32 %v2260, 1.442695
      %v2366 = vpow.pop %v2365
      %v2367 = vmul.f32 %v2261, 1.442695
      %v2368 = vpow.pop %v2367
      %v2369 = vmul.f32 %v2262, 1.442695
      %v2370 = vpow.pop %v2369
      %v2371 = vmul.f32 %v2263, 1.442695
      %v2372 = vpow.pop %v2371
      %v2373 = vmul.f32 %v2264, 1.442695
      %v2374 = vpow.pop %v2373
      %v2375 = vmul.f32 %v2265, 1.442695
      %v2376 = vpow.pop %v2375
      %v2377 = vmul.f32 %v2266, 1.442695
      %v2378 = vpow.pop %v2377
      %v2379 = vmul.f32 %v2267, 1.442695
      %v2380 = vpow.pop %v2379
      %v2381 = vmul.f32 %v2268, 1.442695
      %v2382 = vpow.pop %v2381
      %v2383 = vmul.f32 %v2269, 1.442695
      %v2384 = vpow.pop %v2383
      %v2385 = vmul.f32 %v2270, 1.442695
      %v2386 = vpow.pop %v2385
      %v2387 = vmul.f32 %v2271, 1.442695
      %v2388 = vpow.pop %v2387
      %v2389 = vmul.f32 %v2272, 1.442695
      %v2390 = vpow.pop %v2389
      %v2391 = vmul.f32 %v2273, 1.442695
      %v2392 = vpow.pop %v2391
      %v2393 = vmul.f32 %v2274, 1.442695
      %v2394 = vpow.pop %v2393
      %v2395 = vmul.f32 %v2275, 1.442695
      %v2396 = vpow.pop %v2395
      %v2397 = vmul.f32 %v2276, 1.442695
      %v2398 = vpow.pop %v2397
      %v2399 = vmul.f32 %v2277, 1.442695
      %v2400 = vpow.pop %v2399
      %v2401 = vmul.f32 %v2278, 1.442695
      %v2402 = vpow.pop %v2401
      %v2403 = vmul.f32 %v2279, 1.442695
      %v2404 = vpow.pop %v2403
      %v2405 = vmul.f32 %v2280, 1.442695
      %v2406 = vpow.pop %v2405
      %v2407 = vmul.f32 %v2281, 1.442695
      %v2408 = vpow.pop %v2407
      %v2409 = vmul.f32 %v2282, 1.442695
      %v2410 = vpow.pop %v2409
      %v2411 = vmul.f32 %v2283, 1.442695
      %v2412 = vpow.pop %v2411
      %v2413 = vmul.f32 %v2284, 1.442695
      %v2414 = vpow.pop %v2413
      %v2415 = vmul.f32 %v2285, 1.442695
      %v2416 = vpow.pop %v2415
      %v2417 = vmul.f32 %v2286, 1.442695
      %v2418 = vpow.pop %v2417
      %v2419 = vmul.f32 %v2287, 1.442695
      %v2420 = vpow.pop %v2419
      %v2421 = vmul.f32 %v2288, 1.442695
      %v2422 = vpow.pop %v2421
      %v2423 = vmul.f32 %v2289, 1.442695
      %v2424 = vpow.pop %v2423
      %v2425 = vmul.f32 %v2290, 1.442695
      %v2426 = vpow.pop %v2425
      %v2427 = vmul.f32 %v2291, 1.442695
      %v2428 = vpow.pop %v2427
      %v2429 = vmul.f32 %v2292, 1.442695
      %v2430 = vpow.pop %v2429
      %v2431 = vmul.f32 %v2293, 1.442695
      %v2432 = vpow.pop %v2431
      %v2433 = vmul.f32 %v2294, 1.442695
      %v2434 = vpow.pop %v2433
      %v2435 = vmul.f32 %v2295, 1.442695
      %v2436 = vpow.pop %v2435
      %v2437 = vmul.f32 %v2296, 1.442695
      %v2438 = vpow.pop %v2437
      %v2439 = vmul.f32 %v2297, 1.442695
      %v2440 = vpow.pop %v2439
      %v2441 = vmul.f32 %v2298, 1.442695
      %v2442 = vpow.pop %v2441
      %v2443 = vmul.f32 %v2299, 1.442695
      %v2444 = vpow.pop %v2443
      %v2445 = vmul.f32 %v2300, 1.442695
      %v2446 = vpow.pop %v2445
      %v2447 = vmul.f32 %v2301, 1.442695
      %v2448 = vpow.pop %v2447
      %v2449 = vmul.f32 %v2302, 1.442695
      %v2450 = vpow.pop %v2449
      %v2451 = vmul.f32 %v2303, 1.442695
      %v2452 = vpow.pop %v2451
      %v2453 = vmul.f32 %v2304, 1.442695
      %v2454 = vpow.pop %v2453
      %v2455 = vmul.f32 %v2305, 1.442695
      %v2456 = vpow.pop %v2455
      %v2457 = vmul.f32 %v2306, 1.442695
      %v2458 = vpow.pop %v2457
      %v2459 = vmul.f32 %v2307, 1.442695
      %v2460 = vpow.pop %v2459
      %v2461 = vmul.f32 %v2308, 1.442695
      %v2462 = vpow.pop %v2461
      %v2463 = vmul.f32 %v2309, 1.442695
      %v2464 = vpow.pop %v2463
      %v2465 = vmul.f32 %v2310, 1.442695
      %v2466 = vpow.pop %v2465
      %v2467 = vmul.f32 %v2311, 1.442695
      %v2468 = vpow.pop %v2467
      %v2469 = vmul.f32 %v2312, 1.442695
      %v2470 = vpow.pop %v2469
      %v2471 = vmul.f32 %v2313, 1.442695
      %v2472 = vpow.pop %v2471
      %v2473 = vmul.f32 %v2314, 1.442695
      %v2474 = vpow.pop %v2473
      %v2475 = vmul.f32 %v2315, 1.442695
      %v2476 = vpow.pop %v2475
      %v2477 = vmul.f32 %v2316, 1.442695
      %v2478 = vpow.pop %v2477
      %v2479 = vmul.f32 %v2317, 1.442695
      %v2480 = vpow.pop %v2479
      %v2481 = vmul.f32 %v2318, 1.442695
      %v2482 = vpow.pop %v2481
      %v2483 = vmul.f32 %v2319, 1.442695
      %v2484 = vpow.pop %v2483
      %v2485 = vmul.f32 %v2320, 1.442695
      %v2486 = vpow.pop %v2485
      %v2487 = vmul.f32 %v2321, 1.442695
      %v2488 = vpow.pop %v2487
      %v2489 = vmul.f32 %v2322, 1.442695
      %v2490 = vpow.pop %v2489
      %v2491 = vmul.f32 %v2323, 1.442695
      %v2492 = vpow.pop %v2491
      %v2493 = vmul.f32 %v2324, 1.442695
      %v2494 = vpow.pop %v2493
      %v2495 = vmul.f32 %v2325, 1.442695
      %v2496 = vpow.pop %v2495
      %v2497 = vmul.f32 %v2326, 1.442695
      %v2498 = vpow.pop %v2497
      %v2499 = vmul.f32 %v2327, 1.442695
      %v2500 = vpow.pop %v2499
      %v2501 = vmul.f32 %v2328, 1.442695
      %v2502 = vpow.pop %v2501
      %v2503 = vmul.f32 %v2329, 1.442695
      %v2504 = vpow.pop %v2503
      %v2505 = vmul.f32 %v2330, 1.442695
      %v2506 = vpow.pop %v2505
      %v2507 = vmul.f32 %v2331, 1.442695
      %v2508 = vpow.pop %v2507
      %v2509 = vmul.f32 %v2332, 1.442695
      %v2510 = vpow.pop %v2509
      %v2511 = vmul.f32 %v2333, 1.442695
      %v2512 = vpow.pop %v2511
      %v2513 = vmul.f32 %v2334, 1.442695
      %v2514 = vpow.pop %v2513
      %v2515 = vadd.f32 %v2336, 1.0
      %v2516 = vadd.f32 %v2338, 1.0
      %v2517 = vadd.f32 %v2340, 1.0
      %v2518 = vadd.f32 %v2342, 1.0
      %v2519 = vadd.f32 %v2344, 1.0
      %v2520 = vadd.f32 %v2346, 1.0
      %v2521 = vadd.f32 %v2348, 1.0
      %v2522 = vadd.f32 %v2350, 1.0
      %v2523 = vadd.f32 %v2352, 1.0
      %v2524 = vadd.f32 %v2354, 1.0
      %v2525 = vadd.f32 %v2356, 1.0
      %v2526 = vadd.f32 %v2358, 1.0
      %v2527 = vadd.f32 %v2360, 1.0
      %v2528 = vadd.f32 %v2362, 1.0
      %v2529 = vadd.f32 %v2364, 1.0
      %v2530 = vadd.f32 %v2366, 1.0
      %v2531 = vadd.f32 %v2368, 1.0
      %v2532 = vadd.f32 %v2370, 1.0
      %v2533 = vadd.f32 %v2372, 1.0
      %v2534 = vadd.f32 %v2374, 1.0
      %v2535 = vadd.f32 %v2376, 1.0
      %v2536 = vadd.f32 %v2378, 1.0
      %v2537 = vadd.f32 %v2380, 1.0
      %v2538 = vadd.f32 %v2382, 1.0
      %v2539 = vadd.f32 %v2384, 1.0
      %v2540 = vadd.f32 %v2386, 1.0
      %v2541 = vadd.f32 %v2388, 1.0
      %v2542 = vadd.f32 %v2390, 1.0
      %v2543 = vadd.f32 %v2392, 1.0
      %v2544 = vadd.f32 %v2394, 1.0
      %v2545 = vadd.f32 %v2396, 1.0
      %v2546 = vadd.f32 %v2398, 1.0
      %v2547 = vadd.f32 %v2400, 1.0
      %v2548 = vadd.f32 %v2402, 1.0
      %v2549 = vadd.f32 %v2404, 1.0
      %v2550 = vadd.f32 %v2406, 1.0
      %v2551 = vadd.f32 %v2408, 1.0
      %v2552 = vadd.f32 %v2410, 1.0
      %v2553 = vadd.f32 %v2412, 1.0
      %v2554 = vadd.f32 %v2414, 1.0
      %v2555 = vadd.f32 %v2416, 1.0
      %v2556 = vadd.f32 %v2418, 1.0
      %v2557 = vadd.f32 %v2420, 1.0
      %v2558 = vadd.f32 %v2422, 1.0
      %v2559 = vadd.f32 %v2424, 1.0
      %v2560 = vadd.f32 %v2426, 1.0
      %v2561 = vadd.f32 %v2428, 1.0
      %v2562 = vadd.f32 %v2430, 1.0
      %v2563 = vadd.f32 %v2432, 1.0
      %v2564 = vadd.f32 %v2434, 1.0
      %v2565 = vadd.f32 %v2436, 1.0
      %v2566 = vadd.f32 %v2438, 1.0
      %v2567 = vadd.f32 %v2440, 1.0
      %v2568 = vadd.f32 %v2442, 1.0
      %v2569 = vadd.f32 %v2444, 1.0
      %v2570 = vadd.f32 %v2446, 1.0
      %v2571 = vadd.f32 %v2448, 1.0
      %v2572 = vadd.f32 %v2450, 1.0
      %v2573 = vadd.f32 %v2452, 1.0
      %v2574 = vadd.f32 %v2454, 1.0
      %v2575 = vadd.f32 %v2456, 1.0
      %v2576 = vadd.f32 %v2458, 1.0
      %v2577 = vadd.f32 %v2460, 1.0
      %v2578 = vadd.f32 %v2462, 1.0
      %v2579 = vadd.f32 %v2464, 1.0
      %v2580 = vadd.f32 %v2466, 1.0
      %v2581 = vadd.f32 %v2468, 1.0
      %v2582 = vadd.f32 %v2470, 1.0
      %v2583 = vadd.f32 %v2472, 1.0
      %v2584 = vadd.f32 %v2474, 1.0
      %v2585 = vadd.f32 %v2476, 1.0
      %v2586 = vadd.f32 %v2478, 1.0
      %v2587 = vadd.f32 %v2480, 1.0
      %v2588 = vadd.f32 %v2482, 1.0
      %v2589 = vadd.f32 %v2484, 1.0
      %v2590 = vadd.f32 %v2486, 1.0
      %v2591 = vadd.f32 %v2488, 1.0
      %v2592 = vadd.f32 %v2490, 1.0
      %v2593 = vadd.f32 %v2492, 1.0
      %v2594 = vadd.f32 %v2494, 1.0
      %v2595 = vadd.f32 %v2496, 1.0
      %v2596 = vadd.f32 %v2498, 1.0
      %v2597 = vadd.f32 %v2500, 1.0
      %v2598 = vadd.f32 %v2502, 1.0
      %v2599 = vadd.f32 %v2504, 1.0
      %v2600 = vadd.f32 %v2506, 1.0
      %v2601 = vadd.f32 %v2508, 1.0
      %v2602 = vadd.f32 %v2510, 1.0
      %v2603 = vadd.f32 %v2512, 1.0
      %v2604 = vadd.f32 %v2514, 1.0
      %v2605 = vrcp.pop %v2515
      %v2606 = vmul.f32 1.0, %v2605
      %v2607 = vrcp.pop %v2516
      %v2608 = vmul.f32 1.0, %v2607
      %v2609 = vrcp.pop %v2517
      %v2610 = vmul.f32 1.0, %v2609
      %v2611 = vrcp.pop %v2518
      %v2612 = vmul.f32 1.0, %v2611
      %v2613 = vrcp.pop %v2519
      %v2614 = vmul.f32 1.0, %v2613
      %v2615 = vrcp.pop %v2520
      %v2616 = vmul.f32 1.0, %v2615
      %v2617 = vrcp.pop %v2521
      %v2618 = vmul.f32 1.0, %v2617
      %v2619 = vrcp.pop %v2522
      %v2620 = vmul.f32 1.0, %v2619
      %v2621 = vrcp.pop %v2523
      %v2622 = vmul.f32 1.0, %v2621
      %v2623 = vrcp.pop %v2524
      %v2624 = vmul.f32 1.0, %v2623
      %v2625 = vrcp.pop %v2525
      %v2626 = vmul.f32 1.0, %v2625
      %v2627 = vrcp.pop %v2526
      %v2628 = vmul.f32 1.0, %v2627
      %v2629 = vrcp.pop %v2527
      %v2630 = vmul.f32 1.0, %v2629
      %v2631 = vrcp.pop %v2528
      %v2632 = vmul.f32 1.0, %v2631
      %v2633 = vrcp.pop %v2529
      %v2634 = vmul.f32 1.0, %v2633
      %v2635 = vrcp.pop %v2530
      %v2636 = vmul.f32 1.0, %v2635
      %v2637 = vrcp.pop %v2531
      %v2638 = vmul.f32 1.0, %v2637
      %v2639 = vrcp.pop %v2532
      %v2640 = vmul.f32 1.0, %v2639
      %v2641 = vrcp.pop %v2533
      %v2642 = vmul.f32 1.0, %v2641
      %v2643 = vrcp.pop %v2534
      %v2644 = vmul.f32 1.0, %v2643
      %v2645 = vrcp.pop %v2535
      %v2646 = vmul.f32 1.0, %v2645
      %v2647 = vrcp.pop %v2536
      %v2648 = vmul.f32 1.0, %v2647
      %v2649 = vrcp.pop %v2537
      %v2650 = vmul.f32 1.0, %v2649
      %v2651 = vrcp.pop %v2538
      %v2652 = vmul.f32 1.0, %v2651
      %v2653 = vrcp.pop %v2539
      %v2654 = vmul.f32 1.0, %v2653
      %v2655 = vrcp.pop %v2540
      %v2656 = vmul.f32 1.0, %v2655
      %v2657 = vrcp.pop %v2541
      %v2658 = vmul.f32 1.0, %v2657
      %v2659 = vrcp.pop %v2542
      %v2660 = vmul.f32 1.0, %v2659
      %v2661 = vrcp.pop %v2543
      %v2662 = vmul.f32 1.0, %v2661
      %v2663 = vrcp.pop %v2544
      %v2664 = vmul.f32 1.0, %v2663
      %v2665 = vrcp.pop %v2545
      %v2666 = vmul.f32 1.0, %v2665
      %v2667 = vrcp.pop %v2546
      %v2668 = vmul.f32 1.0, %v2667
      %v2669 = vrcp.pop %v2547
      %v2670 = vmul.f32 1.0, %v2669
      %v2671 = vrcp.pop %v2548
      %v2672 = vmul.f32 1.0, %v2671
      %v2673 = vrcp.pop %v2549
      %v2674 = vmul.f32 1.0, %v2673
      %v2675 = vrcp.pop %v2550
      %v2676 = vmul.f32 1.0, %v2675
      %v2677 = vrcp.pop %v2551
      %v2678 = vmul.f32 1.0, %v2677
      %v2679 = vrcp.pop %v2552
      %v2680 = vmul.f32 1.0, %v2679
      %v2681 = vrcp.pop %v2553
      %v2682 = vmul.f32 1.0, %v2681
      %v2683 = vrcp.pop %v2554
      %v2684 = vmul.f32 1.0, %v2683
      %v2685 = vrcp.pop %v2555
      %v2686 = vmul.f32 1.0, %v2685
      %v2687 = vrcp.pop %v2556
      %v2688 = vmul.f32 1.0, %v2687
      %v2689 = vrcp.pop %v2557
      %v2690 = vmul.f32 1.0, %v2689
      %v2691 = vrcp.pop %v2558
      %v2692 = vmul.f32 1.0, %v2691
      %v2693 = vrcp.pop %v2559
      %v2694 = vmul.f32 1.0, %v2693
      %v2695 = vrcp.pop %v2560
      %v2696 = vmul.f32 1.0, %v2695
      %v2697 = vrcp.pop %v2561
      %v2698 = vmul.f32 1.0, %v2697
      %v2699 = vrcp.pop %v2562
      %v2700 = vmul.f32 1.0, %v2699
      %v2701 = vrcp.pop %v2563
      %v2702 = vmul.f32 1.0, %v2701
      %v2703 = vrcp.pop %v2564
      %v2704 = vmul.f32 1.0, %v2703
      %v2705 = vrcp.pop %v2565
      %v2706 = vmul.f32 1.0, %v2705
      %v2707 = vrcp.pop %v2566
      %v2708 = vmul.f32 1.0, %v2707
      %v2709 = vrcp.pop %v2567
      %v2710 = vmul.f32 1.0, %v2709
      %v2711 = vrcp.pop %v2568
      %v2712 = vmul.f32 1.0, %v2711
      %v2713 = vrcp.pop %v2569
      %v2714 = vmul.f32 1.0, %v2713
      %v2715 = vrcp.pop %v2570
      %v2716 = vmul.f32 1.0, %v2715
      %v2717 = vrcp.pop %v2571
      %v2718 = vmul.f32 1.0, %v2717
      %v2719 = vrcp.pop %v2572
      %v2720 = vmul.f32 1.0, %v2719
      %v2721 = vrcp.pop %v2573
      %v2722 = vmul.f32 1.0, %v2721
      %v2723 = vrcp.pop %v2574
      %v2724 = vmul.f32 1.0, %v2723
      %v2725 = vrcp.pop %v2575
      %v2726 = vmul.f32 1.0, %v2725
      %v2727 = vrcp.pop %v2576
      %v2728 = vmul.f32 1.0, %v2727
      %v2729 = vrcp.pop %v2577
      %v2730 = vmul.f32 1.0, %v2729
      %v2731 = vrcp.pop %v2578
      %v2732 = vmul.f32 1.0, %v2731
      %v2733 = vrcp.pop %v2579
      %v2734 = vmul.f32 1.0, %v2733
      %v2735 = vrcp.pop %v2580
      %v2736 = vmul.f32 1.0, %v2735
      %v2737 = vrcp.pop %v2581
      %v2738 = vmul.f32 1.0, %v2737
      %v2739 = vrcp.pop %v2582
      %v2740 = vmul.f32 1.0, %v2739
      %v2741 = vrcp.pop %v2583
      %v2742 = vmul.f32 1.0, %v2741
      %v2743 = vrcp.pop %v2584
      %v2744 = vmul.f32 1.0, %v2743
      %v2745 = vrcp.pop %v2585
      %v2746 = vmul.f32 1.0, %v2745
      %v2747 = vrcp.pop %v2586
      %v2748 = vmul.f32 1.0, %v2747
      %v2749 = vrcp.pop %v2587
      %v2750 = vmul.f32 1.0, %v2749
      %v2751 = vrcp.pop %v2588
      %v2752 = vmul.f32 1.0, %v2751
      %v2753 = vrcp.pop %v2589
      %v2754 = vmul.f32 1.0, %v2753
      %v2755 = vrcp.pop %v2590
      %v2756 = vmul.f32 1.0, %v2755
      %v2757 = vrcp.pop %v2591
      %v2758 = vmul.f32 1.0, %v2757
      %v2759 = vrcp.pop %v2592
      %v2760 = vmul.f32 1.0, %v2759
      %v2761 = vrcp.pop %v2593
      %v2762 = vmul.f32 1.0, %v2761
      %v2763 = vrcp.pop %v2594
      %v2764 = vmul.f32 1.0, %v2763
      %v2765 = vrcp.pop %v2595
      %v2766 = vmul.f32 1.0, %v2765
      %v2767 = vrcp.pop %v2596
      %v2768 = vmul.f32 1.0, %v2767
      %v2769 = vrcp.pop %v2597
      %v2770 = vmul.f32 1.0, %v2769
      %v2771 = vrcp.pop %v2598
      %v2772 = vmul.f32 1.0, %v2771
      %v2773 = vrcp.pop %v2599
      %v2774 = vmul.f32 1.0, %v2773
      %v2775 = vrcp.pop %v2600
      %v2776 = vmul.f32 1.0, %v2775
      %v2777 = vrcp.pop %v2601
      %v2778 = vmul.f32 1.0, %v2777
      %v2779 = vrcp.pop %v2602
      %v2780 = vmul.f32 1.0, %v2779
      %v2781 = vrcp.pop %v2603
      %v2782 = vmul.f32 1.0, %v2781
      %v2783 = vrcp.pop %v2604
      %v2784 = vmul.f32 1.0, %v2783
      %v2785 = vmul.f32 %v1355, %v2606
      %v2786 = vmul.f32 %v1356, %v2608
      %v2787 = vmul.f32 %v1357, %v2610
      %v2788 = vmul.f32 %v1358, %v2612
      %v2789 = vmul.f32 %v1359, %v2614
      %v2790 = vmul.f32 %v1360, %v2616
      %v2791 = vmul.f32 %v1361, %v2618
      %v2792 = vmul.f32 %v1362, %v2620
      %v2793 = vmul.f32 %v1363, %v2622
      %v2794 = vmul.f32 %v1364, %v2624
      %v2795 = vmul.f32 %v1365, %v2626
      %v2796 = vmul.f32 %v1366, %v2628
      %v2797 = vmul.f32 %v1367, %v2630
      %v2798 = vmul.f32 %v1368, %v2632
      %v2799 = vmul.f32 %v1369, %v2634
      %v2800 = vmul.f32 %v1370, %v2636
      %v2801 = vmul.f32 %v1371, %v2638
      %v2802 = vmul.f32 %v1372, %v2640
      %v2803 = vmul.f32 %v1373, %v2642
      %v2804 = vmul.f32 %v1374, %v2644
      %v2805 = vmul.f32 %v1375, %v2646
      %v2806 = vmul.f32 %v1376, %v2648
      %v2807 = vmul.f32 %v1377, %v2650
      %v2808 = vmul.f32 %v1378, %v2652
      %v2809 = vmul.f32 %v1379, %v2654
      %v2810 = vmul.f32 %v1380, %v2656
      %v2811 = vmul.f32 %v1381, %v2658
      %v2812 = vmul.f32 %v1382, %v2660
      %v2813 = vmul.f32 %v1383, %v2662
      %v2814 = vmul.f32 %v1384, %v2664
      %v2815 = vmul.f32 %v1385, %v2666
      %v2816 = vmul.f32 %v1386, %v2668
      %v2817 = vmul.f32 %v1387, %v2670
      %v2818 = vmul.f32 %v1388, %v2672
      %v2819 = vmul.f32 %v1389, %v2674
      %v2820 = vmul.f32 %v1390, %v2676
      %v2821 = vmul.f32 %v1391, %v2678
      %v2822 = vmul.f32 %v1392, %v2680
      %v2823 = vmul.f32 %v1393, %v2682
      %v2824 = vmul.f32 %v1394, %v2684
      %v2825 = vmul.f32 %v1395, %v2686
      %v2826 = vmul.f32 %v1396, %v2688
      %v2827 = vmul.f32 %v1397, %v2690
      %v2828 = vmul.f32 %v1398, %v2692
      %v2829 = vmul.f32 %v1399, %v2694
      %v2830 = vmul.f32 %v1400, %v2696
      %v2831 = vmul.f32 %v1401, %v2698
      %v2832 = vmul.f32 %v1402, %v2700
      %v2833 = vmul.f32 %v1403, %v2702
      %v2834 = vmul.f32 %v1404, %v2704
      %v2835 = vmul.f32 %v1405, %v2706
      %v2836 = vmul.f32 %v1406, %v2708
      %v2837 = vmul.f32 %v1407, %v2710
      %v2838 = vmul.f32 %v1408, %v2712
      %v2839 = vmul.f32 %v1409, %v2714
      %v2840 = vmul.f32 %v1410, %v2716
      %v2841 = vmul.f32 %v1411, %v2718
      %v2842 = vmul.f32 %v1412, %v2720
      %v2843 = vmul.f32 %v1413, %v2722
      %v2844 = vmul.f32 %v1414, %v2724
      %v2845 = vmul.f32 %v1415, %v2726
      %v2846 = vmul.f32 %v1416, %v2728
      %v2847 = vmul.f32 %v1417, %v2730
      %v2848 = vmul.f32 %v1418, %v2732
      %v2849 = vmul.f32 %v1419, %v2734
      %v2850 = vmul.f32 %v1420, %v2736
      %v2851 = vmul.f32 %v1421, %v2738
      %v2852 = vmul.f32 %v1422, %v2740
      %v2853 = vmul.f32 %v1423, %v2742
      %v2854 = vmul.f32 %v1424, %v2744
      %v2855 = vmul.f32 %v1425, %v2746
      %v2856 = vmul.f32 %v1426, %v2748
      %v2857 = vmul.f32 %v1427, %v2750
      %v2858 = vmul.f32 %v1428, %v2752
      %v2859 = vmul.f32 %v1429, %v2754
      %v2860 = vmul.f32 %v1430, %v2756
      %v2861 = vmul.f32 %v1431, %v2758
      %v2862 = vmul.f32 %v1432, %v2760
      %v2863 = vmul.f32 %v1433, %v2762
      %v2864 = vmul.f32 %v1434, %v2764
      %v2865 = vmul.f32 %v1435, %v2766
      %v2866 = vmul.f32 %v1436, %v2768
      %v2867 = vmul.f32 %v1437, %v2770
      %v2868 = vmul.f32 %v1438, %v2772
      %v2869 = vmul.f32 %v1439, %v2774
      %v2870 = vmul.f32 %v1440, %v2776
      %v2871 = vmul.f32 %v1441, %v2778
      %v2872 = vmul.f32 %v1442, %v2780
      %v2873 = vmul.f32 %v1443, %v2782
      %v2874 = vmul.f32 %v1444, %v2784
      %2875 = vst.msk [vmem:[#allocation2] sm:$0xff] %vm375, %v2785
      %2876 = vst.msk [vmem:[#allocation2 + $0x8] sm:$0xff] %vm375, %v2786
      %2877 = vst.msk [vmem:[#allocation2 + $0x10] sm:$0xff] %vm375, %v2787
      %2878 = vst.msk [vmem:[#allocation2 + $0x18] sm:$0xff] %vm375, %v2788
      %2879 = vst.msk [vmem:[#allocation2 + $0x20] sm:$0xff] %vm375, %v2789
      %2880 = vst.msk [vmem:[#allocation2 + $0x28] sm:$0xff] %vm375, %v2790
      %2881 = vst.msk [vmem:[#allocation2 + $0x30] sm:$0xff] %vm375, %v2791
      %2882 = vst.msk [vmem:[#allocation2 + $0x38] sm:$0xff] %vm375, %v2792
      %2883 = vst.msk [vmem:[#allocation2 + $0x40] sm:$0xff] %vm375, %v2793
      %2884 = vst.msk [vmem:[#allocation2 + $0x48] sm:$0xff] %vm375, %v2794
      %2885 = vst.msk [vmem:[#allocation2 + $0x50] sm:$0xff] %vm375, %v2795
      %2886 = vst.msk [vmem:[#allocation2 + $0x58] sm:$0xff] %vm375, %v2796
      %2887 = vst.msk [vmem:[#allocation2 + $0x60] sm:$0xff] %vm375, %v2797
      %2888 = vst.msk [vmem:[#allocation2 + $0x68] sm:$0xff] %vm375, %v2798
      %2889 = vst.msk [vmem:[#allocation2 + $0x70] sm:$0xff] %vm375, %v2799
      %2890 = vst.msk [vmem:[#allocation2 + $0x78] sm:$0xff] %vm375, %v2800
      %2891 = vst.msk [vmem:[#allocation2 + $0x80] sm:$0xff] %vm375, %v2801
      %2892 = vst.msk [vmem:[#allocation2 + $0x88] sm:$0xff] %vm375, %v2802
      %2893 = vst.msk [vmem:[#allocation2 + $0x90] sm:$0xff] %vm375, %v2803
      %2894 = vst.msk [vmem:[#allocation2 + $0x98] sm:$0xff] %vm375, %v2804
      %2895 = vst.msk [vmem:[#allocation2 + $0xa0] sm:$0xff] %vm375, %v2805
      %2896 = vst.msk [vmem:[#allocation2 + $0xa8] sm:$0xff] %vm375, %v2806
      %2897 = vst.msk [vmem:[#allocation2 + $0xb0] sm:$0xff] %vm375, %v2807
      %2898 = vst.msk [vmem:[#allocation2 + $0xb8] sm:$0xff] %vm375, %v2808
      %2899 = vst.msk [vmem:[#allocation2 + $0xc0] sm:$0xff] %vm375, %v2809
      %2900 = vst.msk [vmem:[#allocation2 + $0xc8] sm:$0xff] %vm375, %v2810
      %2901 = vst.msk [vmem:[#allocation2 + $0xd0] sm:$0xff] %vm375, %v2811
      %2902 = vst.msk [vmem:[#allocation2 + $0xd8] sm:$0xff] %vm375, %v2812
      %2903 = vst.msk [vmem:[#allocation2 + $0xe0] sm:$0xff] %vm375, %v2813
      %2904 = vst.msk [vmem:[#allocation2 + $0xe8] sm:$0xff] %vm375, %v2814
      %2905 = vst.msk [vmem:[#allocation2 + $0xf0] sm:$0xff] %vm375, %v2815
      %2906 = vst.msk [vmem:[#allocation2 + $0xf8] sm:$0xff] %vm375, %v2816
      %2907 = vst.msk [vmem:[#allocation2 + $0x100] sm:$0xff] %vm375, %v2817
      %2908 = vst.msk [vmem:[#allocation2 + $0x108] sm:$0xff] %vm375, %v2818
      %2909 = vst.msk [vmem:[#allocation2 + $0x110] sm:$0xff] %vm375, %v2819
      %2910 = vst.msk [vmem:[#allocation2 + $0x118] sm:$0xff] %vm375, %v2820
      %2911 = vst.msk [vmem:[#allocation2 + $0x120] sm:$0xff] %vm375, %v2821
      %2912 = vst.msk [vmem:[#allocation2 + $0x128] sm:$0xff] %vm375, %v2822
      %2913 = vst.msk [vmem:[#allocation2 + $0x130] sm:$0xff] %vm375, %v2823
      %2914 = vst.msk [vmem:[#allocation2 + $0x138] sm:$0xff] %vm375, %v2824
      %2915 = vst.msk [vmem:[#allocation2 + $0x140] sm:$0xff] %vm375, %v2825
      %2916 = vst.msk [vmem:[#allocation2 + $0x148] sm:$0xff] %vm375, %v2826
      %2917 = vst.msk [vmem:[#allocation2 + $0x150] sm:$0xff] %vm375, %v2827
      %2918 = vst.msk [vmem:[#allocation2 + $0x158] sm:$0xff] %vm375, %v2828
      %2919 = vst.msk [vmem:[#allocation2 + $0x160] sm:$0xff] %vm375, %v2829
      %2920 = vst.msk [vmem:[#allocation2 + $0x168] sm:$0xff] %vm375, %v2830
      %2921 = vst.msk [vmem:[#allocation2 + $0x170] sm:$0xff] %vm375, %v2831
      %2922 = vst.msk [vmem:[#allocation2 + $0x178] sm:$0xff] %vm375, %v2832
      %2923 = vst.msk [vmem:[#allocation2 + $0x180] sm:$0xff] %vm375, %v2833
      %2924 = vst.msk [vmem:[#allocation2 + $0x188] sm:$0xff] %vm375, %v2834
      %2925 = vst.msk [vmem:[#allocation2 + $0x190] sm:$0xff] %vm375, %v2835
      %2926 = vst.msk [vmem:[#allocation2 + $0x198] sm:$0xff] %vm375, %v2836
      %2927 = vst.msk [vmem:[#allocation2 + $0x1a0] sm:$0xff] %vm375, %v2837
      %2928 = vst.msk [vmem:[#allocation2 + $0x1a8] sm:$0xff] %vm375, %v2838
      %2929 = vst.msk [vmem:[#allocation2 + $0x1b0] sm:$0xff] %vm375, %v2839
      %2930 = vst.msk [vmem:[#allocation2 + $0x1b8] sm:$0xff] %vm375, %v2840
      %2931 = vst.msk [vmem:[#allocation2 + $0x1c0] sm:$0xff] %vm375, %v2841
      %2932 = vst.msk [vmem:[#allocation2 + $0x1c8] sm:$0xff] %vm375, %v2842
      %2933 = vst.msk [vmem:[#allocation2 + $0x1d0] sm:$0xff] %vm375, %v2843
      %2934 = vst.msk [vmem:[#allocation2 + $0x1d8] sm:$0xff] %vm375, %v2844
      %2935 = vst.msk [vmem:[#allocation2 + $0x1e0] sm:$0xff] %vm375, %v2845
      %2936 = vst.msk [vmem:[#allocation2 + $0x1e8] sm:$0xff] %vm375, %v2846
      %2937 = vst.msk [vmem:[#allocation2 + $0x1f0] sm:$0xff] %vm375, %v2847
      %2938 = vst.msk [vmem:[#allocation2 + $0x1f8] sm:$0xff] %vm375, %v2848
      %2939 = vst.msk [vmem:[#allocation2 + $0x200] sm:$0xff] %vm375, %v2849
      %2940 = vst.msk [vmem:[#allocation2 + $0x208] sm:$0xff] %vm375, %v2850
      %2941 = vst.msk [vmem:[#allocation2 + $0x210] sm:$0xff] %vm375, %v2851
      %2942 = vst.msk [vmem:[#allocation2 + $0x218] sm:$0xff] %vm375, %v2852
      %2943 = vst.msk [vmem:[#allocation2 + $0x220] sm:$0xff] %vm375, %v2853
      %2944 = vst.msk [vmem:[#allocation2 + $0x228] sm:$0xff] %vm375, %v2854
      %2945 = vst.msk [vmem:[#allocation2 + $0x230] sm:$0xff] %vm375, %v2855
      %2946 = vst.msk [vmem:[#allocation2 + $0x238] sm:$0xff] %vm375, %v2856
      %2947 = vst.msk [vmem:[#allocation2 + $0x240] sm:$0xff] %vm375, %v2857
      %2948 = vst.msk [vmem:[#allocation2 + $0x248] sm:$0xff] %vm375, %v2858
      %2949 = vst.msk [vmem:[#allocation2 + $0x250] sm:$0xff] %vm375, %v2859
      %2950 = vst.msk [vmem:[#allocation2 + $0x258] sm:$0xff] %vm375, %v2860
      %2951 = vst.msk [vmem:[#allocation2 + $0x260] sm:$0xff] %vm375, %v2861
      %2952 = vst.msk [vmem:[#allocation2 + $0x268] sm:$0xff] %vm375, %v2862
      %2953 = vst.msk [vmem:[#allocation2 + $0x270] sm:$0xff] %vm375, %v2863
      %2954 = vst.msk [vmem:[#allocation2 + $0x278] sm:$0xff] %vm375, %v2864
      %2955 = vst.msk [vmem:[#allocation2 + $0x280] sm:$0xff] %vm375, %v2865
      %2956 = vst.msk [vmem:[#allocation2 + $0x288] sm:$0xff] %vm375, %v2866
      %2957 = vst.msk [vmem:[#allocation2 + $0x290] sm:$0xff] %vm375, %v2867
      %2958 = vst.msk [vmem:[#allocation2 + $0x298] sm:$0xff] %vm375, %v2868
      %2959 = vst.msk [vmem:[#allocation2 + $0x2a0] sm:$0xff] %vm375, %v2869
      %2960 = vst.msk [vmem:[#allocation2 + $0x2a8] sm:$0xff] %vm375, %v2870
      %2961 = vst.msk [vmem:[#allocation2 + $0x2b0] sm:$0xff] %vm375, %v2871
      %2962 = vst.msk [vmem:[#allocation2 + $0x2b8] sm:$0xff] %vm375, %v2872
      %2963 = vst.msk [vmem:[#allocation2 + $0x2c0] sm:$0xff] %vm375, %v2873
      %2964 = vst.msk [vmem:[#allocation2 + $0x2c8] sm:$0xff] %vm375, %v2874
      %v2965 = vld [vmem:[#allocation2] ss:$2 sm:$0xff]
      %s2966 = scalar_lea.vmem [#allocation2], 16
      %v2967 = vld [vmem:[%s2966] ss:$2 sm:$0xff]
      %s2968 = scalar_lea.vmem [#allocation2], 32
      %v2969 = vld [vmem:[%s2968] ss:$2 sm:$0xff]
      %s2970 = scalar_lea.vmem [#allocation2], 48
      %v2971 = vld [vmem:[%s2970] ss:$2 sm:$0xff]
      %s2972 = scalar_lea.vmem [#allocation2], 64
      %v2973 = vld [vmem:[%s2972] ss:$2 sm:$0xff]
      %s2974 = scalar_lea.vmem [#allocation2], 80
      %v2975 = vld [vmem:[%s2974] ss:$2 sm:$0xff]
      %s2976 = scalar_lea.vmem [#allocation2], 96
      %v2977 = vld [vmem:[%s2976] ss:$2 sm:$0xff]
      %s2978 = scalar_lea.vmem [#allocation2], 112
      %v2979 = vld [vmem:[%s2978] ss:$2 sm:$0xff]
      %s2980 = scalar_lea.vmem [#allocation2], 128
      %v2981 = vld [vmem:[%s2980] ss:$2 sm:$0xff]
      %s2982 = scalar_lea.vmem [#allocation2], 144
      %v2983 = vld [vmem:[%s2982] ss:$2 sm:$0xff]
      %s2984 = scalar_lea.vmem [#allocation2], 160
      %v2985 = vld [vmem:[%s2984] ss:$2 sm:$0xff]
      %s2986 = scalar_lea.vmem [#allocation2], 176
      %v2987 = vld [vmem:[%s2986] ss:$2 sm:$0xff]
      %s2988 = scalar_lea.vmem [#allocation2], 192
      %v2989 = vld [vmem:[%s2988] ss:$2 sm:$0xff]
      %s2990 = scalar_lea.vmem [#allocation2], 208
      %v2991 = vld [vmem:[%s2990] ss:$2 sm:$0xff]
      %s2992 = scalar_lea.vmem [#allocation2], 224
      %v2993 = vld [vmem:[%s2992] ss:$2 sm:$0xff]
      %s2994 = scalar_lea.vmem [#allocation2], 240
      %v2995 = vld [vmem:[%s2994] ss:$2 sm:$0xff]
      %s2996 = scalar_lea.vmem [#allocation2], 256
      %v2997 = vld [vmem:[%s2996] ss:$2 sm:$0xff]
      %s2998 = scalar_lea.vmem [#allocation2], 272
      %v2999 = vld [vmem:[%s2998] ss:$2 sm:$0xff]
      %s3000 = scalar_lea.vmem [#allocation2], 288
      %v3001 = vld [vmem:[%s3000] ss:$2 sm:$0xff]
      %s3002 = scalar_lea.vmem [#allocation2], 304
      %v3003 = vld [vmem:[%s3002] ss:$2 sm:$0xff]
      %s3004 = scalar_lea.vmem [#allocation2], 320
      %v3005 = vld [vmem:[%s3004] ss:$2 sm:$0xff]
      %s3006 = scalar_lea.vmem [#allocation2], 336
      %v3007 = vld [vmem:[%s3006] ss:$2 sm:$0xff]
      %s3008 = scalar_lea.vmem [#allocation2], 352
      %v3009 = vld [vmem:[%s3008] ss:$2 sm:$0xff]
      %s3010 = scalar_lea.vmem [#allocation2], 368
      %v3011 = vld [vmem:[%s3010] ss:$2 sm:$0xff]
      %s3012 = scalar_lea.vmem [#allocation2], 384
      %v3013 = vld [vmem:[%s3012] ss:$2 sm:$0xff]
      %s3014 = scalar_lea.vmem [#allocation2], 400
      %v3015 = vld [vmem:[%s3014] ss:$2 sm:$0xff]
      %s3016 = scalar_lea.vmem [#allocation2], 416
      %v3017 = vld [vmem:[%s3016] ss:$2 sm:$0xff]
      %s3018 = scalar_lea.vmem [#allocation2], 432
      %v3019 = vld [vmem:[%s3018] ss:$2 sm:$0xff]
      %s3020 = scalar_lea.vmem [#allocation2], 448
      %v3021 = vld [vmem:[%s3020] ss:$2 sm:$0xff]
      %s3022 = scalar_lea.vmem [#allocation2], 464
      %v3023 = vld [vmem:[%s3022] ss:$2 sm:$0xff]
      %s3024 = scalar_lea.vmem [#allocation2], 480
      %v3025 = vld [vmem:[%s3024] ss:$2 sm:$0xff]
      %s3026 = scalar_lea.vmem [#allocation2], 496
      %v3027 = vld [vmem:[%s3026] ss:$2 sm:$0xff]
      %s3028 = scalar_lea.vmem [#allocation2], 512
      %v3029 = vld [vmem:[%s3028] ss:$2 sm:$0xff]
      %s3030 = scalar_lea.vmem [#allocation2], 528
      %v3031 = vld [vmem:[%s3030] ss:$2 sm:$0xff]
      %s3032 = scalar_lea.vmem [#allocation2], 544
      %v3033 = vld [vmem:[%s3032] ss:$2 sm:$0xff]
      %s3034 = scalar_lea.vmem [#allocation2], 560
      %v3035 = vld [vmem:[%s3034] ss:$2 sm:$0xff]
      %s3036 = scalar_lea.vmem [#allocation2], 576
      %v3037 = vld [vmem:[%s3036] ss:$2 sm:$0xff]
      %s3038 = scalar_lea.vmem [#allocation2], 592
      %v3039 = vld [vmem:[%s3038] ss:$2 sm:$0xff]
      %s3040 = scalar_lea.vmem [#allocation2], 608
      %v3041 = vld [vmem:[%s3040] ss:$2 sm:$0xff]
      %s3042 = scalar_lea.vmem [#allocation2], 624
      %v3043 = vld [vmem:[%s3042] ss:$2 sm:$0xff]
      %s3044 = scalar_lea.vmem [#allocation2], 640
      %v3045 = vld [vmem:[%s3044] ss:$2 sm:$0xff]
      %s3046 = scalar_lea.vmem [#allocation2], 656
      %v3047 = vld [vmem:[%s3046] ss:$2 sm:$0xff]
      %s3048 = scalar_lea.vmem [#allocation2], 672
      %v3049 = vld [vmem:[%s3048] ss:$2 sm:$0xff]
      %s3050 = scalar_lea.vmem [#allocation2], 688
      %v3051 = vld [vmem:[%s3050] ss:$2 sm:$0xff]
      %s3052 = scalar_lea.vmem [#allocation2], 704
      %v3053 = vld [vmem:[%s3052] ss:$2 sm:$0xff]
      %s3054 = scalar_lea.vmem [#allocation2], 1
      %v3055 = vld [vmem:[%s3054] ss:$2 sm:$0xff]
      %s3056 = scalar_lea.vmem [#allocation2], 17
      %v3057 = vld [vmem:[%s3056] ss:$2 sm:$0xff]
      %s3058 = scalar_lea.vmem [#allocation2], 33
      %v3059 = vld [vmem:[%s3058] ss:$2 sm:$0xff]
      %s3060 = scalar_lea.vmem [#allocation2], 49
      %v3061 = vld [vmem:[%s3060] ss:$2 sm:$0xff]
      %s3062 = scalar_lea.vmem [#allocation2], 65
      %v3063 = vld [vmem:[%s3062] ss:$2 sm:$0xff]
      %s3064 = scalar_lea.vmem [#allocation2], 81
      %v3065 = vld [vmem:[%s3064] ss:$2 sm:$0xff]
      %s3066 = scalar_lea.vmem [#allocation2], 97
      %v3067 = vld [vmem:[%s3066] ss:$2 sm:$0xff]
      %s3068 = scalar_lea.vmem [#allocation2], 113
      %v3069 = vld [vmem:[%s3068] ss:$2 sm:$0xff]
      %s3070 = scalar_lea.vmem [#allocation2], 129
      %v3071 = vld [vmem:[%s3070] ss:$2 sm:$0xff]
      %s3072 = scalar_lea.vmem [#allocation2], 145
      %v3073 = vld [vmem:[%s3072] ss:$2 sm:$0xff]
      %s3074 = scalar_lea.vmem [#allocation2], 161
      %v3075 = vld [vmem:[%s3074] ss:$2 sm:$0xff]
      %s3076 = scalar_lea.vmem [#allocation2], 177
      %v3077 = vld [vmem:[%s3076] ss:$2 sm:$0xff]
      %s3078 = scalar_lea.vmem [#allocation2], 193
      %v3079 = vld [vmem:[%s3078] ss:$2 sm:$0xff]
      %s3080 = scalar_lea.vmem [#allocation2], 209
      %v3081 = vld [vmem:[%s3080] ss:$2 sm:$0xff]
      %s3082 = scalar_lea.vmem [#allocation2], 225
      %v3083 = vld [vmem:[%s3082] ss:$2 sm:$0xff]
      %s3084 = scalar_lea.vmem [#allocation2], 241
      %v3085 = vld [vmem:[%s3084] ss:$2 sm:$0xff]
      %s3086 = scalar_lea.vmem [#allocation2], 257
      %v3087 = vld [vmem:[%s3086] ss:$2 sm:$0xff]
      %s3088 = scalar_lea.vmem [#allocation2], 273
      %v3089 = vld [vmem:[%s3088] ss:$2 sm:$0xff]
      %s3090 = scalar_lea.vmem [#allocation2], 289
      %v3091 = vld [vmem:[%s3090] ss:$2 sm:$0xff]
      %s3092 = scalar_lea.vmem [#allocation2], 305
      %v3093 = vld [vmem:[%s3092] ss:$2 sm:$0xff]
      %s3094 = scalar_lea.vmem [#allocation2], 321
      %v3095 = vld [vmem:[%s3094] ss:$2 sm:$0xff]
      %s3096 = scalar_lea.vmem [#allocation2], 337
      %v3097 = vld [vmem:[%s3096] ss:$2 sm:$0xff]
      %s3098 = scalar_lea.vmem [#allocation2], 353
      %v3099 = vld [vmem:[%s3098] ss:$2 sm:$0xff]
      %s3100 = scalar_lea.vmem [#allocation2], 369
      %v3101 = vld [vmem:[%s3100] ss:$2 sm:$0xff]
      %s3102 = scalar_lea.vmem [#allocation2], 385
      %v3103 = vld [vmem:[%s3102] ss:$2 sm:$0xff]
      %s3104 = scalar_lea.vmem [#allocation2], 401
      %v3105 = vld [vmem:[%s3104] ss:$2 sm:$0xff]
      %s3106 = scalar_lea.vmem [#allocation2], 417
      %v3107 = vld [vmem:[%s3106] ss:$2 sm:$0xff]
      %s3108 = scalar_lea.vmem [#allocation2], 433
      %v3109 = vld [vmem:[%s3108] ss:$2 sm:$0xff]
      %s3110 = scalar_lea.vmem [#allocation2], 449
      %v3111 = vld [vmem:[%s3110] ss:$2 sm:$0xff]
      %s3112 = scalar_lea.vmem [#allocation2], 465
      %v3113 = vld [vmem:[%s3112] ss:$2 sm:$0xff]
      %s3114 = scalar_lea.vmem [#allocation2], 481
      %v3115 = vld [vmem:[%s3114] ss:$2 sm:$0xff]
      %s3116 = scalar_lea.vmem [#allocation2], 497
      %v3117 = vld [vmem:[%s3116] ss:$2 sm:$0xff]
      %s3118 = scalar_lea.vmem [#allocation2], 513
      %v3119 = vld [vmem:[%s3118] ss:$2 sm:$0xff]
      %s3120 = scalar_lea.vmem [#allocation2], 529
      %v3121 = vld [vmem:[%s3120] ss:$2 sm:$0xff]
      %s3122 = scalar_lea.vmem [#allocation2], 545
      %v3123 = vld [vmem:[%s3122] ss:$2 sm:$0xff]
      %s3124 = scalar_lea.vmem [#allocation2], 561
      %v3125 = vld [vmem:[%s3124] ss:$2 sm:$0xff]
      %s3126 = scalar_lea.vmem [#allocation2], 577
      %v3127 = vld [vmem:[%s3126] ss:$2 sm:$0xff]
      %s3128 = scalar_lea.vmem [#allocation2], 593
      %v3129 = vld [vmem:[%s3128] ss:$2 sm:$0xff]
      %s3130 = scalar_lea.vmem [#allocation2], 609
      %v3131 = vld [vmem:[%s3130] ss:$2 sm:$0xff]
      %s3132 = scalar_lea.vmem [#allocation2], 625
      %v3133 = vld [vmem:[%s3132] ss:$2 sm:$0xff]
      %s3134 = scalar_lea.vmem [#allocation2], 641
      %v3135 = vld [vmem:[%s3134] ss:$2 sm:$0xff]
      %s3136 = scalar_lea.vmem [#allocation2], 657
      %v3137 = vld [vmem:[%s3136] ss:$2 sm:$0xff]
      %s3138 = scalar_lea.vmem [#allocation2], 673
      %v3139 = vld [vmem:[%s3138] ss:$2 sm:$0xff]
      %s3140 = scalar_lea.vmem [#allocation2], 689
      %v3141 = vld [vmem:[%s3140] ss:$2 sm:$0xff]
      %s3142 = scalar_lea.vmem [#allocation2], 705
      %v3143 = vld [vmem:[%s3142] ss:$2 sm:$0xff]
      %v3144 = vmax.f32 %v2965, %v3055
      %v3145 = vmax.f32 %v2967, %v3057
      %v3146 = vmax.f32 %v2969, %v3059
      %v3147 = vmax.f32 %v2971, %v3061
      %v3148 = vmax.f32 %v2973, %v3063
      %v3149 = vmax.f32 %v2975, %v3065
      %v3150 = vmax.f32 %v2977, %v3067
      %v3151 = vmax.f32 %v2979, %v3069
      %v3152 = vmax.f32 %v2981, %v3071
      %v3153 = vmax.f32 %v2983, %v3073
      %v3154 = vmax.f32 %v2985, %v3075
      %v3155 = vmax.f32 %v2987, %v3077
      %v3156 = vmax.f32 %v2989, %v3079
      %v3157 = vmax.f32 %v2991, %v3081
      %v3158 = vmax.f32 %v2993, %v3083
      %v3159 = vmax.f32 %v2995, %v3085
      %v3160 = vmax.f32 %v2997, %v3087
      %v3161 = vmax.f32 %v2999, %v3089
      %v3162 = vmax.f32 %v3001, %v3091
      %v3163 = vmax.f32 %v3003, %v3093
      %v3164 = vmax.f32 %v3005, %v3095
      %v3165 = vmax.f32 %v3007, %v3097
      %v3166 = vmax.f32 %v3009, %v3099
      %v3167 = vmax.f32 %v3011, %v3101
      %v3168 = vmax.f32 %v3013, %v3103
      %v3169 = vmax.f32 %v3015, %v3105
      %v3170 = vmax.f32 %v3017, %v3107
      %v3171 = vmax.f32 %v3019, %v3109
      %v3172 = vmax.f32 %v3021, %v3111
      %v3173 = vmax.f32 %v3023, %v3113
      %v3174 = vmax.f32 %v3025, %v3115
      %v3175 = vmax.f32 %v3027, %v3117
      %v3176 = vmax.f32 %v3029, %v3119
      %v3177 = vmax.f32 %v3031, %v3121
      %v3178 = vmax.f32 %v3033, %v3123
      %v3179 = vmax.f32 %v3035, %v3125
      %v3180 = vmax.f32 %v3037, %v3127
      %v3181 = vmax.f32 %v3039, %v3129
      %v3182 = vmax.f32 %v3041, %v3131
      %v3183 = vmax.f32 %v3043, %v3133
      %v3184 = vmax.f32 %v3045, %v3135
      %v3185 = vmax.f32 %v3047, %v3137
      %v3186 = vmax.f32 %v3049, %v3139
      %v3187 = vmax.f32 %v3051, %v3141
      %v3188 = vmax.f32 %v3053, %v3143
      %3189 = vst.msk [vmem:[%s273] sm:$0xff] %vm375, %v3144
      %3190 = vst.msk [vmem:[%s273 + $0x8] sm:$0xff] %vm375, %v3145
      %3191 = vst.msk [vmem:[%s273 + $0x10] sm:$0xff] %vm375, %v3146
      %3192 = vst.msk [vmem:[%s273 + $0x18] sm:$0xff] %vm375, %v3147
      %3193 = vst.msk [vmem:[%s273 + $0x20] sm:$0xff] %vm375, %v3148
      %3194 = vst.msk [vmem:[%s273 + $0x28] sm:$0xff] %vm375, %v3149
      %3195 = vst.msk [vmem:[%s273 + $0x30] sm:$0xff] %vm375, %v3150
      %3196 = vst.msk [vmem:[%s273 + $0x38] sm:$0xff] %vm375, %v3151
      %3197 = vst.msk [vmem:[%s273 + $0x40] sm:$0xff] %vm375, %v3152
      %3198 = vst.msk [vmem:[%s273 + $0x48] sm:$0xff] %vm375, %v3153
      %3199 = vst.msk [vmem:[%s273 + $0x50] sm:$0xff] %vm375, %v3154
      %3200 = vst.msk [vmem:[%s273 + $0x58] sm:$0xff] %vm375, %v3155
      %3201 = vst.msk [vmem:[%s273 + $0x60] sm:$0xff] %vm375, %v3156
      %3202 = vst.msk [vmem:[%s273 + $0x68] sm:$0xff] %vm375, %v3157
      %3203 = vst.msk [vmem:[%s273 + $0x70] sm:$0xff] %vm375, %v3158
      %3204 = vst.msk [vmem:[%s273 + $0x78] sm:$0xff] %vm375, %v3159
      %3205 = vst.msk [vmem:[%s273 + $0x80] sm:$0xff] %vm375, %v3160
      %3206 = vst.msk [vmem:[%s273 + $0x88] sm:$0xff] %vm375, %v3161
      %3207 = vst.msk [vmem:[%s273 + $0x90] sm:$0xff] %vm375, %v3162
      %3208 = vst.msk [vmem:[%s273 + $0x98] sm:$0xff] %vm375, %v3163
      %3209 = vst.msk [vmem:[%s273 + $0xa0] sm:$0xff] %vm375, %v3164
      %3210 = vst.msk [vmem:[%s273 + $0xa8] sm:$0xff] %vm375, %v3165
      %3211 = vst.msk [vmem:[%s273 + $0xb0] sm:$0xff] %vm375, %v3166
      %3212 = vst.msk [vmem:[%s273 + $0xb8] sm:$0xff] %vm375, %v3167
      %3213 = vst.msk [vmem:[%s273 + $0xc0] sm:$0xff] %vm375, %v3168
      %3214 = vst.msk [vmem:[%s273 + $0xc8] sm:$0xff] %vm375, %v3169
      %3215 = vst.msk [vmem:[%s273 + $0xd0] sm:$0xff] %vm375, %v3170
      %3216 = vst.msk [vmem:[%s273 + $0xd8] sm:$0xff] %vm375, %v3171
      %3217 = vst.msk [vmem:[%s273 + $0xe0] sm:$0xff] %vm375, %v3172
      %3218 = vst.msk [vmem:[%s273 + $0xe8] sm:$0xff] %vm375, %v3173
      %3219 = vst.msk [vmem:[%s273 + $0xf0] sm:$0xff] %vm375, %v3174
      %3220 = vst.msk [vmem:[%s273 + $0xf8] sm:$0xff] %vm375, %v3175
      %3221 = vst.msk [vmem:[%s273 + $0x100] sm:$0xff] %vm375, %v3176
      %3222 = vst.msk [vmem:[%s273 + $0x108] sm:$0xff] %vm375, %v3177
      %3223 = vst.msk [vmem:[%s273 + $0x110] sm:$0xff] %vm375, %v3178
      %3224 = vst.msk [vmem:[%s273 + $0x118] sm:$0xff] %vm375, %v3179
      %3225 = vst.msk [vmem:[%s273 + $0x120] sm:$0xff] %vm375, %v3180
      %3226 = vst.msk [vmem:[%s273 + $0x128] sm:$0xff] %vm375, %v3181
      %3227 = vst.msk [vmem:[%s273 + $0x130] sm:$0xff] %vm375, %v3182
      %3228 = vst.msk [vmem:[%s273 + $0x138] sm:$0xff] %vm375, %v3183
      %3229 = vst.msk [vmem:[%s273 + $0x140] sm:$0xff] %vm375, %v3184
      %3230 = vst.msk [vmem:[%s273 + $0x148] sm:$0xff] %vm375, %v3185
      %3231 = vst.msk [vmem:[%s273 + $0x150] sm:$0xff] %vm375, %v3186
      %3232 = vst.msk [vmem:[%s273 + $0x158] sm:$0xff] %vm375, %v3187
      %3233 = vst.msk [vmem:[%s273 + $0x160] sm:$0xff] %vm375, %v3188
      %s3234 = smul.u32 45, %s22
      %p3235 = scmp.lt.s32.totalorder %s21, 1
      %s3236 = scalar_select %p3235, %s21, 1
      %p3237 = scmp.lt.s32.totalorder %s3234, 224
      %s3238 = scalar_select %p3237, %s3234, 224
      %s3239 = smul.addr %s3236, 225
      %s3240 = sadd.s32 %s3238, %s3239
      %s3241 = smul.addr %s3240, 8
      %s3242 = scalar_lea.vmem %s6, %s3241
      // Predicated region
      $region45: #{tpu_custom_call.1} parent=43 // pred_check
        %p3243 = pneg %p180
      $region46: #{tpu_custom_call.1} parent=43 // pred_check_branch
        %3245 = sbr.rel (%p3243) target = $region48
      $region47: #{tpu_custom_call.1} parent=43 // pred_region
        %s3246 = smul.u32 45, %s22
      $region48: #{tpu_custom_call.1} parent=43 // pred_fallthru
        _
    $region44: #{tpu_custom_call.1} parent=5 // pred_fallthru
      _
    %p3247 = scmp.le.s32.totalorder 2, %s12
    // Predicated region
    $region49: #{tpu_custom_call.1} parent=5 // pred_check
      %p3248 = pneg %p3247
    $region50: #{tpu_custom_call.1} parent=5 // pred_check_branch
      %3250 = sbr.rel (%p3248) target = $region52
    $region51: #{tpu_custom_call.1} parent=5 // pred_region
      %s3251 = ssub.s32 %s12, 2
      // Predicated region
      $region53: #{tpu_custom_call.1} parent=51 // pred_check
        %p3252 = pneg %p186
      $region54: #{tpu_custom_call.1} parent=51 // pred_check_branch
        %3254 = sbr.rel (%p3252) target = $region56
      $region55: #{tpu_custom_call.1} parent=51 // pred_region
        %s3255 = smul.u32 45, %s24
        %p3256 = scmp.lt.s32.totalorder %s23, 1
        %s3257 = scalar_select %p3256, %s23, 1
        %p3258 = scmp.lt.s32.totalorder %s3255, 224
        %s3259 = scalar_select %p3258, %s3255, 224
        %s3260 = smul.addr %s3257, 225
        %s3261 = sadd.s32 %s3259, %s3260
        %s3262 = smul.addr %s3261, 8
        %s3263 = scalar_lea.vmem %s6, %s3262
      $region56: #{tpu_custom_call.1} parent=51 // pred_fallthru
        _
    $region52: #{tpu_custom_call.1} parent=5 // pred_fallthru
      _
  $region6: #{tpu_custom_call.1} parent=0 // loop_footer
    %s16 = sadd.s32 1, %s12
  $region7: #{tpu_custom_call.1} parent=0 // loop_footer_branch
    %11 = sbr.rel target = $region3
  $region8: #{tpu_custom_call.1} parent=0 // loop_exit
    _

</llo_original>
